<compile_context>
chip_gen: v7x
topology: tpu7x:2x2x1
jax: 0.10.0
libtpu: 0.0.40
codegen_flags: <defaults>
</compile_context>

<pallas_src>
import jax
import jax.numpy as jnp
from jax import lax
from jax.experimental import pallas as pl
from jax.experimental.pallas import tpu as pltpu

# ----------------------------- mini-ViT config ------------------------------
B, C, H, W = 2, 3, 16, 16          # image batch, channels, spatial
P_SIZE = 8                          # patch size
NP = (H // P_SIZE) * (W // P_SIZE)  # 4 patches
S = NP + 1                          # 5 tokens (CLS + patches)
D = 32                              # hidden size
NH = 2                              # attention heads
HD = D // NH                        # head dim = 16
MLP = 64                            # intermediate size
NLAYERS = 2                         # encoder layers
KPATCH = C * P_SIZE * P_SIZE        # flattened patch dim = 192
EPS = 1e-12                         # HF ViT LayerNorm eps
_SQRT1_2 = 0.7071067811865476


# ------------------------------ math helpers ---------------------------------
def _layernorm(t, g, b):
    mu = jnp.mean(t, axis=-1, keepdims=True)
    var = jnp.mean(jnp.square(t - mu), axis=-1, keepdims=True)
    return (t - mu) * lax.rsqrt(var + EPS) * g + b


def _erf_poly(z):
    # Abramowitz & Stegun 7.1.26 (|err| < 1.5e-7, i.e. f32-exact here).
    # Built only from abs/exp/div/where, all of which lower cleanly in Mosaic.
    a1, a2, a3, a4, a5 = 0.254829592, -0.284496736, 1.421413741, -1.453152027, 1.061405429
    pp = 0.3275911
    az = jnp.abs(z)
    t = 1.0 / (1.0 + pp * az)
    poly = ((((a5 * t + a4) * t + a3) * t + a2) * t + a1) * t
    y = 1.0 - poly * jnp.exp(-az * az)
    return jnp.where(z < 0.0, -y, y)


def _gelu_exact(x):
    # HF ViT default hidden_act='gelu' is the exact (erf) GELU, not tanh-approx.
    return 0.5 * x * (1.0 + _erf_poly(x * _SQRT1_2))


# --------------------------------- kernel ------------------------------------
def fused_vit_kernel(patches_ref, pw_ref, tokb_ref,
                     ln1g_ref, ln1b_ref, wqkv_ref, bqkv_ref, wo_ref, bo_ref,
                     ln2g_ref, ln2b_ref, w1_ref, b1_ref, w2_ref, b2_ref,
                     lnfg_ref, lnfb_ref, wp_ref, bp_ref, out_ref):
    # Entire ViT forward for one batch element; everything stays in VMEM/vregs.

    # ---- patch embedding + (pre-folded) CLS / conv-bias / positional table ----
    tok_patches = patches_ref[0]                          # (S, KPATCH); row 0 is zeros
    x = jnp.dot(tok_patches, pw_ref[...],
                preferred_element_type=jnp.float32) + tokb_ref[...]   # (S, D)

    for l in range(NLAYERS):                              # static unroll over layers
        # --- self-attention block (pre-LN) ---
        h = _layernorm(x, ln1g_ref[l], ln1b_ref[l])       # (S, D)
        hb = jnp.broadcast_to(h, (NH, S, D))
        # fused per-head QKV projection: one batched matmul (Q scale pre-folded)
        qkv = jnp.einsum("hsd,hde->hse", hb, wqkv_ref[l],
                         preferred_element_type=jnp.float32) + bqkv_ref[l]  # (NH,S,3HD)
        q = qkv[:, :, 0:HD]
        k = qkv[:, :, HD:2 * HD]
        v = qkv[:, :, 2 * HD:3 * HD]

        s = jnp.einsum("hqd,hkd->hqk", q, k,
                       preferred_element_type=jnp.float32)                  # (NH,S,S)
        s = s - jnp.max(s, axis=-1, keepdims=True)
        e = jnp.exp(s)
        p = e * pl.reciprocal(jnp.sum(e, axis=-1, keepdims=True), approx=True)
        ctx = jnp.einsum("hqk,hkd->hqd", p, v,
                         preferred_element_type=jnp.float32)                # (NH,S,HD)
        # output projection: sum_h ctx_h @ Wo[h*HD:(h+1)*HD, :] == concat @ Wo
        attn = jnp.sum(
            jnp.einsum("hsd,hde->hse", ctx, wo_ref[l],
                       preferred_element_type=jnp.float32), axis=0) + bo_ref[l]
        x = x + attn

        # --- MLP block (pre-LN) ---
        h2 = _layernorm(x, ln2g_ref[l], ln2b_ref[l])
        m = jnp.dot(h2, w1_ref[l], preferred_element_type=jnp.float32) + b1_ref[l]
        m = _gelu_exact(m)
        m = jnp.dot(m, w2_ref[l], preferred_element_type=jnp.float32) + b2_ref[l]
        x = x + m

    # ---- final LayerNorm (per-token, so CLS-only is equivalent) + pooler ----
    cls_tok = x[0:1, :]                                   # (1, D)
    hf = _layernorm(cls_tok, lnfg_ref[...], lnfb_ref[...])
    out_ref[0] = jnp.tanh(
        jnp.dot(hf, wp_ref[...], preferred_element_type=jnp.float32) + bp_ref[...])


# --------------------------- parameter construction --------------------------
def init_params(key):
    # TODO(synk): pretrained-weight loading (AutoModel.from_pretrained) has no
    # Pallas equivalent; parameters are deterministic synthetic initializations.
    def nrm(k, shape, scale=0.02):
        return scale * jax.random.normal(k, shape, dtype=jnp.float32)

    ks = iter(jax.random.split(key, 16))

    # HF-style unfused attention weights ((in, out), i.e. torch Linear weight.T).
    wq = nrm(next(ks), (NLAYERS, D, D))
    wk = nrm(next(ks), (NLAYERS, D, D))
    wv = nrm(next(ks), (NLAYERS, D, D))
    wo = nrm(next(ks), (NLAYERS, D, D))
    bq = jnp.zeros((NLAYERS, D), jnp.float32)
    bk = jnp.zeros((NLAYERS, D), jnp.float32)
    bv = jnp.zeros((NLAYERS, D), jnp.float32)

    # Pre-pack into the per-head fused layouts consumed by the kernel. The
    # 1/sqrt(HD) attention scale is folded into the Q columns here so the kernel
    # never multiplies by it.
    scale = 1.0 / float(HD) ** 0.5

    def cols_to_heads(w):  # (L, D, D) -> (L, NH, D, HD): split output cols by head
        return w.reshape(NLAYERS, D, NH, HD).transpose(0, 2, 1, 3)

    wqkv = jnp.concatenate(
        [cols_to_heads(wq) * scale, cols_to_heads(wk), cols_to_heads(wv)],
        axis=-1)                                                              # (L,NH,D,3HD)
    bqkv = jnp.concatenate(
        [bq.reshape(NLAYERS, NH, 1, HD) * scale,
         bk.reshape(NLAYERS, NH, 1, HD),
         bv.reshape(NLAYERS, NH, 1, HD)], axis=-1)                            # (L,NH,1,3HD)
    wo_heads = wo.reshape(NLAYERS, NH, HD, D)                                 # (L,NH,HD,D)

    # Conv2d(patch) weight flattened as weight.reshape(D, -1).T -> (KPATCH, D),
    # i.e. (c, ph, pw) order, matching the patch extraction in the wrapper.
    patch_w = nrm(next(ks), (KPATCH, D))
    patch_b = jnp.zeros((1, D), jnp.float32)
    cls = nrm(next(ks), (1, D))
    pos = nrm(next(ks), (S, D))
    # Fold CLS token (row 0) + conv bias (patch rows) + positional embedding
    # into a single additive (S, D) table consumed by the kernel.
    tok_bias = pos + jnp.concatenate(
        [cls, jnp.broadcast_to(patch_b, (NP, D))], axis=0)                    # (S, D)

    return {
        "patch_w": patch_w,
        "tok_bias": tok_bias,
        "ln1_g": jnp.ones((NLAYERS, 1, D), jnp.float32),
        "ln1_b": jnp.zeros((NLAYERS, 1, D), jnp.float32),
        "wqkv": wqkv,
        "bqkv": bqkv,
        "wo": wo_heads,
        "bo": jnp.zeros((NLAYERS, 1, D), jnp.float32),
        "ln2_g": jnp.ones((NLAYERS, 1, D), jnp.float32),
        "ln2_b": jnp.zeros((NLAYERS, 1, D), jnp.float32),
        "w1": nrm(next(ks), (NLAYERS, D, MLP)),
        "b1": jnp.zeros((NLAYERS, 1, MLP), jnp.float32),
        "w2": nrm(next(ks), (NLAYERS, MLP, D)),
        "b2": jnp.zeros((NLAYERS, 1, D), jnp.float32),
        "ln_f_g": jnp.ones((1, D), jnp.float32),
        "ln_f_b": jnp.zeros((1, D), jnp.float32),
        "pool_w": nrm(next(ks), (D, D)),
        "pool_b": jnp.zeros((1, D), jnp.float32),
    }


# --------------------------------- forward -----------------------------------
def image_encoder_forward(image, params):
    # image: (B, C, H, W) float32 (NCHW, matching PyTorch).
    # im2col patch extraction (XLA glue): non-overlapping P_SIZE x P_SIZE patches,
    # flattened in (c, ph, pw) order to match Conv2d weight.reshape(D, -1).T.
    patches = image.reshape(B, C, H // P_SIZE, P_SIZE, W // P_SIZE, P_SIZE)
    patches = patches.transpose(0, 2, 4, 1, 3, 5).reshape(B, NP, KPATCH)
    # Prepend a zero row per batch so the kernel builds the full (S, D) token
    # matrix with one matmul + one add (no in-kernel concatenate).
    patches = jnp.concatenate(
        [jnp.zeros((B, 1, KPATCH), jnp.float32), patches], axis=1)        # (B, S, KPATCH)

    weights = [
        params["patch_w"], params["tok_bias"],
        params["ln1_g"], params["ln1_b"], params["wqkv"], params["bqkv"],
        params["wo"], params["bo"], params["ln2_g"], params["ln2_b"],
        params["w1"], params["b1"], params["w2"], params["b2"],
        params["ln_f_g"], params["ln_f_b"], params["pool_w"], params["pool_b"],
    ]
    in_specs = [pl.BlockSpec((1, S, KPATCH), lambda b: (b, 0, 0))]
    for w in weights:  # full-array blocks, constant index -> VMEM-resident weights
        in_specs.append(pl.BlockSpec(w.shape, lambda b, _nd=w.ndim: (0,) * _nd))

    out = pl.pallas_call(
        fused_vit_kernel,
        out_shape=jax.ShapeDtypeStruct((B, 1, D), jnp.float32),
        grid=(B,),
        in_specs=in_specs,
        out_specs=pl.BlockSpec((1, 1, D), lambda b: (b, 0, 0)),
        compiler_params=pltpu.CompilerParams(
            dimension_semantics=("parallel",)),   # lets v7x split batch over 2 TCs
    )(patches, *weights)
    return out.reshape(B, D)


if __name__ == "__main__":
    key = jax.random.PRNGKey(0)
    k_img, k_par = jax.random.split(key)
    image = jax.random.normal(k_img, (B, C, H, W), dtype=jnp.float32)
    params = init_params(k_par)

    fwd = jax.jit(image_encoder_forward)
    out = jax.block_until_ready(fwd(image, params))
    assert out.shape == (B, D) and out.dtype == jnp.float32
    assert bool(jnp.all(jnp.isfinite(out)))
    print("KERNEL_OK")
</pallas_src>

<mosaic_0001>
module attributes {stable_mosaic.version = 11 : i64} {
  func.func @fused_vit_kernel(%arg0: i32, %arg1: memref<1x5x192xf32, #tpu.memory_space<vmem>>, %arg2: memref<192x32xf32, #tpu.memory_space<vmem>>, %arg3: memref<5x32xf32, #tpu.memory_space<vmem>>, %arg4: memref<2x1x32xf32, #tpu.memory_space<vmem>>, %arg5: memref<2x1x32xf32, #tpu.memory_space<vmem>>, %arg6: memref<2x2x32x48xf32, #tpu.memory_space<vmem>>, %arg7: memref<2x2x1x48xf32, #tpu.memory_space<vmem>>, %arg8: memref<2x2x16x32xf32, #tpu.memory_space<vmem>>, %arg9: memref<2x1x32xf32, #tpu.memory_space<vmem>>, %arg10: memref<2x1x32xf32, #tpu.memory_space<vmem>>, %arg11: memref<2x1x32xf32, #tpu.memory_space<vmem>>, %arg12: memref<2x32x64xf32, #tpu.memory_space<vmem>>, %arg13: memref<2x1x64xf32, #tpu.memory_space<vmem>>, %arg14: memref<2x64x32xf32, #tpu.memory_space<vmem>>, %arg15: memref<2x1x32xf32, #tpu.memory_space<vmem>>, %arg16: memref<1x32xf32, #tpu.memory_space<vmem>>, %arg17: memref<1x32xf32, #tpu.memory_space<vmem>>, %arg18: memref<32x32xf32, #tpu.memory_space<vmem>>, %arg19: memref<1x32xf32, #tpu.memory_space<vmem>>, %arg20: memref<1x1x32xf32, #tpu.memory_space<vmem>>) attributes {dimension_semantics = [#tpu.dimension_semantics<parallel>], iteration_bounds = array<i64: 2>, scalar_prefetch = 0 : i64, scratch_operands = 0 : i64, tpu.core_type = #tpu.core_type<tc>, window_params = [{transform_indices = @transform_0, window_bounds = array<i64: 1, 5, 192>}, {pipeline_mode = #tpu.pipeline_mode<synchronous>, transform_indices = @transform_1, window_bounds = array<i64: 192, 32>}, {pipeline_mode = #tpu.pipeline_mode<synchronous>, transform_indices = @transform_2, window_bounds = array<i64: 5, 32>}, {pipeline_mode = #tpu.pipeline_mode<synchronous>, transform_indices = @transform_3, window_bounds = array<i64: 2, 1, 32>}, {pipeline_mode = #tpu.pipeline_mode<synchronous>, transform_indices = @transform_4, window_bounds = array<i64: 2, 1, 32>}, {pipeline_mode = #tpu.pipeline_mode<synchronous>, transform_indices = @transform_5, window_bounds = array<i64: 2, 2, 32, 48>}, {pipeline_mode = #tpu.pipeline_mode<synchronous>, transform_indices = @transform_6, window_bounds = array<i64: 2, 2, 1, 48>}, {pipeline_mode = #tpu.pipeline_mode<synchronous>, transform_indices = @transform_7, window_bounds = array<i64: 2, 2, 16, 32>}, {pipeline_mode = #tpu.pipeline_mode<synchronous>, transform_indices = @transform_8, window_bounds = array<i64: 2, 1, 32>}, {pipeline_mode = #tpu.pipeline_mode<synchronous>, transform_indices = @transform_9, window_bounds = array<i64: 2, 1, 32>}, {pipeline_mode = #tpu.pipeline_mode<synchronous>, transform_indices = @transform_10, window_bounds = array<i64: 2, 1, 32>}, {pipeline_mode = #tpu.pipeline_mode<synchronous>, transform_indices = @transform_11, window_bounds = array<i64: 2, 32, 64>}, {pipeline_mode = #tpu.pipeline_mode<synchronous>, transform_indices = @transform_12, window_bounds = array<i64: 2, 1, 64>}, {pipeline_mode = #tpu.pipeline_mode<synchronous>, transform_indices = @transform_13, window_bounds = array<i64: 2, 64, 32>}, {pipeline_mode = #tpu.pipeline_mode<synchronous>, transform_indices = @transform_14, window_bounds = array<i64: 2, 1, 32>}, {pipeline_mode = #tpu.pipeline_mode<synchronous>, transform_indices = @transform_15, window_bounds = array<i64: 1, 32>}, {pipeline_mode = #tpu.pipeline_mode<synchronous>, transform_indices = @transform_16, window_bounds = array<i64: 1, 32>}, {pipeline_mode = #tpu.pipeline_mode<synchronous>, transform_indices = @transform_17, window_bounds = array<i64: 32, 32>}, {pipeline_mode = #tpu.pipeline_mode<synchronous>, transform_indices = @transform_18, window_bounds = array<i64: 1, 32>}, {transform_indices = @transform_19, window_bounds = array<i64: 1, 1, 32>}]} {
    %c0 = arith.constant 0 : index
    %c0_0 = arith.constant 0 : index
    %c0_1 = arith.constant 0 : index
    %0 = vector.load %arg1[%c0, %c0_0, %c0_1] : memref<1x5x192xf32, #tpu.memory_space<vmem>>, vector<1x5x192xf32>
    %1 = vector.shape_cast %0 : vector<1x5x192xf32> to vector<5x192xf32>
    %c0_2 = arith.constant 0 : index
    %c0_3 = arith.constant 0 : index
    %2 = vector.load %arg2[%c0_2, %c0_3] : memref<192x32xf32, #tpu.memory_space<vmem>>, vector<192x32xf32>
    %cst = arith.constant dense<0.000000e+00> : vector<5x32xf32>
    %3 = tpu.matmul %1, %2, %cst {dimension_numbers = #tpu.dot_dimension_numbers<[1], [0], [0], [1], [0, 0, 1, 1], [], []>} : vector<5x192xf32>, vector<192x32xf32>, vector<5x32xf32> -> vector<5x32xf32>
    %c0_4 = arith.constant 0 : index
    %c0_5 = arith.constant 0 : index
    %4 = vector.load %arg3[%c0_4, %c0_5] : memref<5x32xf32, #tpu.memory_space<vmem>>, vector<5x32xf32>
    %5 = arith.addf %3, %4 : vector<5x32xf32>
    %c0_6 = arith.constant 0 : index
    %c0_7 = arith.constant 0 : index
    %c0_8 = arith.constant 0 : index
    %6 = vector.load %arg4[%c0_6, %c0_7, %c0_8] : memref<2x1x32xf32, #tpu.memory_space<vmem>>, vector<1x1x32xf32>
    %7 = vector.shape_cast %6 : vector<1x1x32xf32> to vector<1x32xf32>
    %c0_9 = arith.constant 0 : index
    %c0_10 = arith.constant 0 : index
    %c0_11 = arith.constant 0 : index
    %8 = vector.load %arg5[%c0_9, %c0_10, %c0_11] : memref<2x1x32xf32, #tpu.memory_space<vmem>>, vector<1x1x32xf32>
    %9 = vector.shape_cast %8 : vector<1x1x32xf32> to vector<1x32xf32>
    %cst_12 = arith.constant dense<0.000000e+00> : vector<5xf32>
    %10 = vector.multi_reduction <add>, %5, %cst_12 [1] : vector<5x32xf32> to vector<5xf32>
    %11 = vector.shape_cast %10 : vector<5xf32> to vector<5x1xf32>
    %cst_13 = arith.constant 3.200000e+01 : f32
    %12 = vector.broadcast %cst_13 : f32 to vector<5x1xf32>
    %13 = arith.divf %11, %12 : vector<5x1xf32>
    %14 = vector.broadcast %13 : vector<5x1xf32> to vector<5x32xf32>
    %15 = arith.subf %5, %14 : vector<5x32xf32>
    %16 = arith.mulf %15, %15 : vector<5x32xf32>
    %cst_14 = arith.constant dense<0.000000e+00> : vector<5xf32>
    %17 = vector.multi_reduction <add>, %16, %cst_14 [1] : vector<5x32xf32> to vector<5xf32>
    %18 = vector.shape_cast %17 : vector<5xf32> to vector<5x1xf32>
    %cst_15 = arith.constant 3.200000e+01 : f32
    %19 = vector.broadcast %cst_15 : f32 to vector<5x1xf32>
    %20 = arith.divf %18, %19 : vector<5x1xf32>
    %21 = vector.broadcast %13 : vector<5x1xf32> to vector<5x32xf32>
    %22 = arith.subf %5, %21 : vector<5x32xf32>
    %cst_16 = arith.constant 9.99999996E-13 : f32
    %23 = vector.broadcast %cst_16 : f32 to vector<5x1xf32>
    %24 = arith.addf %20, %23 : vector<5x1xf32>
    %25 = math.rsqrt %24 : vector<5x1xf32>
    %26 = vector.broadcast %25 : vector<5x1xf32> to vector<5x32xf32>
    %27 = arith.mulf %22, %26 : vector<5x32xf32>
    %28 = vector.broadcast %7 : vector<1x32xf32> to vector<5x32xf32>
    %29 = arith.mulf %27, %28 : vector<5x32xf32>
    %30 = vector.broadcast %9 : vector<1x32xf32> to vector<5x32xf32>
    %31 = arith.addf %29, %30 : vector<5x32xf32>
    %32 = vector.shape_cast %31 : vector<5x32xf32> to vector<1x5x32xf32>
    %33 = vector.broadcast %32 : vector<1x5x32xf32> to vector<2x5x32xf32>
    %c0_17 = arith.constant 0 : index
    %c0_18 = arith.constant 0 : index
    %c0_19 = arith.constant 0 : index
    %c0_20 = arith.constant 0 : index
    %34 = vector.load %arg6[%c0_17, %c0_18, %c0_19, %c0_20] : memref<2x2x32x48xf32, #tpu.memory_space<vmem>>, vector<1x2x32x48xf32>
    %35 = vector.shape_cast %34 : vector<1x2x32x48xf32> to vector<2x32x48xf32>
    "tpu.trace_start"() <{level = 10 : i32, message = "hsd,hde->hse"}> : () -> ()
    %cst_21 = arith.constant dense<0.000000e+00> : vector<2x5x48xf32>
    %36 = tpu.matmul %33, %35, %cst_21 {dimension_numbers = #tpu.dot_dimension_numbers<[2], [1], [1], [2], [0, 0, 0, 1, 1, 2], [0], [0]>} : vector<2x5x32xf32>, vector<2x32x48xf32>, vector<2x5x48xf32> -> vector<2x5x48xf32>
    "tpu.trace_stop"() : () -> ()
    %c0_22 = arith.constant 0 : index
    %c0_23 = arith.constant 0 : index
    %c0_24 = arith.constant 0 : index
    %c0_25 = arith.constant 0 : index
    %37 = vector.load %arg7[%c0_22, %c0_23, %c0_24, %c0_25] : memref<2x2x1x48xf32, #tpu.memory_space<vmem>>, vector<1x2x1x48xf32>
    %38 = vector.shape_cast %37 : vector<1x2x1x48xf32> to vector<2x1x48xf32>
    %39 = vector.broadcast %38 : vector<2x1x48xf32> to vector<2x5x48xf32>
    %40 = arith.addf %36, %39 : vector<2x5x48xf32>
    %41 = vector.extract_strided_slice %40 {offsets = [0, 0, 0], sizes = [2, 5, 16], strides = [1, 1, 1]} : vector<2x5x48xf32> to vector<2x5x16xf32>
    %42 = vector.extract_strided_slice %40 {offsets = [0, 0, 16], sizes = [2, 5, 16], strides = [1, 1, 1]} : vector<2x5x48xf32> to vector<2x5x16xf32>
    %43 = vector.extract_strided_slice %40 {offsets = [0, 0, 32], sizes = [2, 5, 16], strides = [1, 1, 1]} : vector<2x5x48xf32> to vector<2x5x16xf32>
    "tpu.trace_start"() <{level = 10 : i32, message = "hqd,hkd->hqk"}> : () -> ()
    %cst_26 = arith.constant dense<0.000000e+00> : vector<2x5x5xf32>
    %44 = tpu.matmul %41, %42, %cst_26 {dimension_numbers = #tpu.dot_dimension_numbers<[2], [2], [1], [1], [0, 0, 0, 1, 1, 1], [0], [0]>} : vector<2x5x16xf32>, vector<2x5x16xf32>, vector<2x5x5xf32> -> vector<2x5x5xf32>
    "tpu.trace_stop"() : () -> ()
    %cst_27 = arith.constant dense<0xFF800000> : vector<2x5xf32>
    %45 = vector.multi_reduction <maximumf>, %44, %cst_27 [2] : vector<2x5x5xf32> to vector<2x5xf32>
    %46 = vector.shape_cast %45 : vector<2x5xf32> to vector<2x5x1xf32>
    %47 = vector.broadcast %46 : vector<2x5x1xf32> to vector<2x5x5xf32>
    %48 = arith.subf %44, %47 : vector<2x5x5xf32>
    %49 = math.exp %48 : vector<2x5x5xf32>
    %cst_28 = arith.constant dense<0.000000e+00> : vector<2x5xf32>
    %50 = vector.multi_reduction <add>, %49, %cst_28 [2] : vector<2x5x5xf32> to vector<2x5xf32>
    %51 = vector.shape_cast %50 : vector<2x5xf32> to vector<2x5x1xf32>
    %52 = tpu.reciprocal %51 {approx = true} : vector<2x5x1xf32> -> vector<2x5x1xf32>
    %53 = vector.broadcast %52 : vector<2x5x1xf32> to vector<2x5x5xf32>
    %54 = arith.mulf %49, %53 : vector<2x5x5xf32>
    "tpu.trace_start"() <{level = 10 : i32, message = "hqk,hkd->hqd"}> : () -> ()
    %cst_29 = arith.constant dense<0.000000e+00> : vector<2x5x16xf32>
    %55 = tpu.matmul %54, %43, %cst_29 {dimension_numbers = #tpu.dot_dimension_numbers<[2], [1], [1], [2], [0, 0, 0, 1, 1, 2], [0], [0]>} : vector<2x5x5xf32>, vector<2x5x16xf32>, vector<2x5x16xf32> -> vector<2x5x16xf32>
    "tpu.trace_stop"() : () -> ()
    %c0_30 = arith.constant 0 : index
    %c0_31 = arith.constant 0 : index
    %c0_32 = arith.constant 0 : index
    %c0_33 = arith.constant 0 : index
    %56 = vector.load %arg8[%c0_30, %c0_31, %c0_32, %c0_33] : memref<2x2x16x32xf32, #tpu.memory_space<vmem>>, vector<1x2x16x32xf32>
    %57 = vector.shape_cast %56 : vector<1x2x16x32xf32> to vector<2x16x32xf32>
    "tpu.trace_start"() <{level = 10 : i32, message = "hsd,hde->hse"}> : () -> ()
    %cst_34 = arith.constant dense<0.000000e+00> : vector<2x5x32xf32>
    %58 = tpu.matmul %55, %57, %cst_34 {dimension_numbers = #tpu.dot_dimension_numbers<[2], [1], [1], [2], [0, 0, 0, 1, 1, 2], [0], [0]>} : vector<2x5x16xf32>, vector<2x16x32xf32>, vector<2x5x32xf32> -> vector<2x5x32xf32>
    "tpu.trace_stop"() : () -> ()
    %cst_35 = arith.constant dense<0.000000e+00> : vector<5x32xf32>
    %59 = vector.multi_reduction <add>, %58, %cst_35 [0] : vector<2x5x32xf32> to vector<5x32xf32>
    %c0_36 = arith.constant 0 : index
    %c0_37 = arith.constant 0 : index
    %c0_38 = arith.constant 0 : index
    %60 = vector.load %arg9[%c0_36, %c0_37, %c0_38] : memref<2x1x32xf32, #tpu.memory_space<vmem>>, vector<1x1x32xf32>
    %61 = vector.shape_cast %60 : vector<1x1x32xf32> to vector<1x32xf32>
    %62 = vector.broadcast %61 : vector<1x32xf32> to vector<5x32xf32>
    %63 = arith.addf %59, %62 : vector<5x32xf32>
    %64 = arith.addf %5, %63 : vector<5x32xf32>
    %c0_39 = arith.constant 0 : index
    %c0_40 = arith.constant 0 : index
    %c0_41 = arith.constant 0 : index
    %65 = vector.load %arg10[%c0_39, %c0_40, %c0_41] : memref<2x1x32xf32, #tpu.memory_space<vmem>>, vector<1x1x32xf32>
    %66 = vector.shape_cast %65 : vector<1x1x32xf32> to vector<1x32xf32>
    %c0_42 = arith.constant 0 : index
    %c0_43 = arith.constant 0 : index
    %c0_44 = arith.constant 0 : index
    %67 = vector.load %arg11[%c0_42, %c0_43, %c0_44] : memref<2x1x32xf32, #tpu.memory_space<vmem>>, vector<1x1x32xf32>
    %68 = vector.shape_cast %67 : vector<1x1x32xf32> to vector<1x32xf32>
    %cst_45 = arith.constant dense<0.000000e+00> : vector<5xf32>
    %69 = vector.multi_reduction <add>, %64, %cst_45 [1] : vector<5x32xf32> to vector<5xf32>
    %70 = vector.shape_cast %69 : vector<5xf32> to vector<5x1xf32>
    %cst_46 = arith.constant 3.200000e+01 : f32
    %71 = vector.broadcast %cst_46 : f32 to vector<5x1xf32>
    %72 = arith.divf %70, %71 : vector<5x1xf32>
    %73 = vector.broadcast %72 : vector<5x1xf32> to vector<5x32xf32>
    %74 = arith.subf %64, %73 : vector<5x32xf32>
    %75 = arith.mulf %74, %74 : vector<5x32xf32>
    %cst_47 = arith.constant dense<0.000000e+00> : vector<5xf32>
    %76 = vector.multi_reduction <add>, %75, %cst_47 [1] : vector<5x32xf32> to vector<5xf32>
    %77 = vector.shape_cast %76 : vector<5xf32> to vector<5x1xf32>
    %cst_48 = arith.constant 3.200000e+01 : f32
    %78 = vector.broadcast %cst_48 : f32 to vector<5x1xf32>
    %79 = arith.divf %77, %78 : vector<5x1xf32>
    %80 = vector.broadcast %72 : vector<5x1xf32> to vector<5x32xf32>
    %81 = arith.subf %64, %80 : vector<5x32xf32>
    %cst_49 = arith.constant 9.99999996E-13 : f32
    %82 = vector.broadcast %cst_49 : f32 to vector<5x1xf32>
    %83 = arith.addf %79, %82 : vector<5x1xf32>
    %84 = math.rsqrt %83 : vector<5x1xf32>
    %85 = vector.broadcast %84 : vector<5x1xf32> to vector<5x32xf32>
    %86 = arith.mulf %81, %85 : vector<5x32xf32>
    %87 = vector.broadcast %66 : vector<1x32xf32> to vector<5x32xf32>
    %88 = arith.mulf %86, %87 : vector<5x32xf32>
    %89 = vector.broadcast %68 : vector<1x32xf32> to vector<5x32xf32>
    %90 = arith.addf %88, %89 : vector<5x32xf32>
    %c0_50 = arith.constant 0 : index
    %c0_51 = arith.constant 0 : index
    %c0_52 = arith.constant 0 : index
    %91 = vector.load %arg12[%c0_50, %c0_51, %c0_52] : memref<2x32x64xf32, #tpu.memory_space<vmem>>, vector<1x32x64xf32>
    %92 = vector.shape_cast %91 : vector<1x32x64xf32> to vector<32x64xf32>
    %cst_53 = arith.constant dense<0.000000e+00> : vector<5x64xf32>
    %93 = tpu.matmul %90, %92, %cst_53 {dimension_numbers = #tpu.dot_dimension_numbers<[1], [0], [0], [1], [0, 0, 1, 1], [], []>} : vector<5x32xf32>, vector<32x64xf32>, vector<5x64xf32> -> vector<5x64xf32>
    %c0_54 = arith.constant 0 : index
    %c0_55 = arith.constant 0 : index
    %c0_56 = arith.constant 0 : index
    %94 = vector.load %arg13[%c0_54, %c0_55, %c0_56] : memref<2x1x64xf32, #tpu.memory_space<vmem>>, vector<1x1x64xf32>
    %95 = vector.shape_cast %94 : vector<1x1x64xf32> to vector<1x64xf32>
    %96 = vector.broadcast %95 : vector<1x64xf32> to vector<5x64xf32>
    %97 = arith.addf %93, %96 : vector<5x64xf32>
    %cst_57 = arith.constant 5.000000e-01 : f32
    %98 = vector.broadcast %cst_57 : f32 to vector<5x64xf32>
    %99 = arith.mulf %98, %97 : vector<5x64xf32>
    %cst_58 = arith.constant 0.707106769 : f32
    %100 = vector.broadcast %cst_58 : f32 to vector<5x64xf32>
    %101 = arith.mulf %97, %100 : vector<5x64xf32>
    %102 = math.absf %101 : vector<5x64xf32>
    %cst_59 = arith.constant 0.327591091 : f32
    %103 = vector.broadcast %cst_59 : f32 to vector<5x64xf32>
    %104 = arith.mulf %103, %102 : vector<5x64xf32>
    %cst_60 = arith.constant 1.000000e+00 : f32
    %105 = vector.broadcast %cst_60 : f32 to vector<5x64xf32>
    %106 = arith.addf %105, %104 : vector<5x64xf32>
    %cst_61 = arith.constant 1.000000e+00 : f32
    %107 = vector.broadcast %cst_61 : f32 to vector<5x64xf32>
    %108 = arith.divf %107, %106 : vector<5x64xf32>
    %cst_62 = arith.constant 1.06140542 : f32
    %109 = vector.broadcast %cst_62 : f32 to vector<5x64xf32>
    %110 = arith.mulf %109, %108 : vector<5x64xf32>
    %cst_63 = arith.constant -1.45315206 : f32
    %111 = vector.broadcast %cst_63 : f32 to vector<5x64xf32>
    %112 = arith.addf %110, %111 : vector<5x64xf32>
    %113 = arith.mulf %112, %108 : vector<5x64xf32>
    %cst_64 = arith.constant 1.42141378 : f32
    %114 = vector.broadcast %cst_64 : f32 to vector<5x64xf32>
    %115 = arith.addf %113, %114 : vector<5x64xf32>
    %116 = arith.mulf %115, %108 : vector<5x64xf32>
    %cst_65 = arith.constant -0.284496725 : f32
    %117 = vector.broadcast %cst_65 : f32 to vector<5x64xf32>
    %118 = arith.addf %116, %117 : vector<5x64xf32>
    %119 = arith.mulf %118, %108 : vector<5x64xf32>
    %cst_66 = arith.constant 0.254829586 : f32
    %120 = vector.broadcast %cst_66 : f32 to vector<5x64xf32>
    %121 = arith.addf %119, %120 : vector<5x64xf32>
    %122 = arith.mulf %121, %108 : vector<5x64xf32>
    %cst_67 = arith.constant 0.000000e+00 : f32
    %123 = vector.broadcast %cst_67 : f32 to vector<5x64xf32>
    %124 = arith.subf %123, %102 : vector<5x64xf32>
    %125 = arith.mulf %124, %102 : vector<5x64xf32>
    %126 = math.exp %125 : vector<5x64xf32>
    %127 = arith.mulf %122, %126 : vector<5x64xf32>
    %cst_68 = arith.constant 1.000000e+00 : f32
    %128 = vector.broadcast %cst_68 : f32 to vector<5x64xf32>
    %129 = arith.subf %128, %127 : vector<5x64xf32>
    %cst_69 = arith.constant 0.000000e+00 : f32
    %130 = vector.broadcast %cst_69 : f32 to vector<5x64xf32>
    %131 = arith.cmpf olt, %101, %130 : vector<5x64xf32>
    %cst_70 = arith.constant 0.000000e+00 : f32
    %132 = vector.broadcast %cst_70 : f32 to vector<5x64xf32>
    %133 = arith.subf %132, %129 : vector<5x64xf32>
    %134 = arith.select %131, %133, %129 : vector<5x64xi1>, vector<5x64xf32>
    %cst_71 = arith.constant 1.000000e+00 : f32
    %135 = vector.broadcast %cst_71 : f32 to vector<5x64xf32>
    %136 = arith.addf %135, %134 : vector<5x64xf32>
    %137 = arith.mulf %99, %136 : vector<5x64xf32>
    %c0_72 = arith.constant 0 : index
    %c0_73 = arith.constant 0 : index
    %c0_74 = arith.constant 0 : index
    %138 = vector.load %arg14[%c0_72, %c0_73, %c0_74] : memref<2x64x32xf32, #tpu.memory_space<vmem>>, vector<1x64x32xf32>
    %139 = vector.shape_cast %138 : vector<1x64x32xf32> to vector<64x32xf32>
    %cst_75 = arith.constant dense<0.000000e+00> : vector<5x32xf32>
    %140 = tpu.matmul %137, %139, %cst_75 {dimension_numbers = #tpu.dot_dimension_numbers<[1], [0], [0], [1], [0, 0, 1, 1], [], []>} : vector<5x64xf32>, vector<64x32xf32>, vector<5x32xf32> -> vector<5x32xf32>
    %c0_76 = arith.constant 0 : index
    %c0_77 = arith.constant 0 : index
    %c0_78 = arith.constant 0 : index
    %141 = vector.load %arg15[%c0_76, %c0_77, %c0_78] : memref<2x1x32xf32, #tpu.memory_space<vmem>>, vector<1x1x32xf32>
    %142 = vector.shape_cast %141 : vector<1x1x32xf32> to vector<1x32xf32>
    %143 = vector.broadcast %142 : vector<1x32xf32> to vector<5x32xf32>
    %144 = arith.addf %140, %143 : vector<5x32xf32>
    %145 = arith.addf %64, %144 : vector<5x32xf32>
    %c1 = arith.constant 1 : index
    %c0_79 = arith.constant 0 : index
    %c0_80 = arith.constant 0 : index
    %146 = vector.load %arg4[%c1, %c0_79, %c0_80] : memref<2x1x32xf32, #tpu.memory_space<vmem>>, vector<1x1x32xf32>
    %147 = vector.shape_cast %146 : vector<1x1x32xf32> to vector<1x32xf32>
    %c1_81 = arith.constant 1 : index
    %c0_82 = arith.constant 0 : index
    %c0_83 = arith.constant 0 : index
    %148 = vector.load %arg5[%c1_81, %c0_82, %c0_83] : memref<2x1x32xf32, #tpu.memory_space<vmem>>, vector<1x1x32xf32>
    %149 = vector.shape_cast %148 : vector<1x1x32xf32> to vector<1x32xf32>
    %cst_84 = arith.constant dense<0.000000e+00> : vector<5xf32>
    %150 = vector.multi_reduction <add>, %145, %cst_84 [1] : vector<5x32xf32> to vector<5xf32>
    %151 = vector.shape_cast %150 : vector<5xf32> to vector<5x1xf32>
    %cst_85 = arith.constant 3.200000e+01 : f32
    %152 = vector.broadcast %cst_85 : f32 to vector<5x1xf32>
    %153 = arith.divf %151, %152 : vector<5x1xf32>
    %154 = vector.broadcast %153 : vector<5x1xf32> to vector<5x32xf32>
    %155 = arith.subf %145, %154 : vector<5x32xf32>
    %156 = arith.mulf %155, %155 : vector<5x32xf32>
    %cst_86 = arith.constant dense<0.000000e+00> : vector<5xf32>
    %157 = vector.multi_reduction <add>, %156, %cst_86 [1] : vector<5x32xf32> to vector<5xf32>
    %158 = vector.shape_cast %157 : vector<5xf32> to vector<5x1xf32>
    %cst_87 = arith.constant 3.200000e+01 : f32
    %159 = vector.broadcast %cst_87 : f32 to vector<5x1xf32>
    %160 = arith.divf %158, %159 : vector<5x1xf32>
    %161 = vector.broadcast %153 : vector<5x1xf32> to vector<5x32xf32>
    %162 = arith.subf %145, %161 : vector<5x32xf32>
    %cst_88 = arith.constant 9.99999996E-13 : f32
    %163 = vector.broadcast %cst_88 : f32 to vector<5x1xf32>
    %164 = arith.addf %160, %163 : vector<5x1xf32>
    %165 = math.rsqrt %164 : vector<5x1xf32>
    %166 = vector.broadcast %165 : vector<5x1xf32> to vector<5x32xf32>
    %167 = arith.mulf %162, %166 : vector<5x32xf32>
    %168 = vector.broadcast %147 : vector<1x32xf32> to vector<5x32xf32>
    %169 = arith.mulf %167, %168 : vector<5x32xf32>
    %170 = vector.broadcast %149 : vector<1x32xf32> to vector<5x32xf32>
    %171 = arith.addf %169, %170 : vector<5x32xf32>
    %172 = vector.shape_cast %171 : vector<5x32xf32> to vector<1x5x32xf32>
    %173 = vector.broadcast %172 : vector<1x5x32xf32> to vector<2x5x32xf32>
    %c1_89 = arith.constant 1 : index
    %c0_90 = arith.constant 0 : index
    %c0_91 = arith.constant 0 : index
    %c0_92 = arith.constant 0 : index
    %174 = vector.load %arg6[%c1_89, %c0_90, %c0_91, %c0_92] : memref<2x2x32x48xf32, #tpu.memory_space<vmem>>, vector<1x2x32x48xf32>
    %175 = vector.shape_cast %174 : vector<1x2x32x48xf32> to vector<2x32x48xf32>
    "tpu.trace_start"() <{level = 10 : i32, message = "hsd,hde->hse"}> : () -> ()
    %cst_93 = arith.constant dense<0.000000e+00> : vector<2x5x48xf32>
    %176 = tpu.matmul %173, %175, %cst_93 {dimension_numbers = #tpu.dot_dimension_numbers<[2], [1], [1], [2], [0, 0, 0, 1, 1, 2], [0], [0]>} : vector<2x5x32xf32>, vector<2x32x48xf32>, vector<2x5x48xf32> -> vector<2x5x48xf32>
    "tpu.trace_stop"() : () -> ()
    %c1_94 = arith.constant 1 : index
    %c0_95 = arith.constant 0 : index
    %c0_96 = arith.constant 0 : index
    %c0_97 = arith.constant 0 : index
    %177 = vector.load %arg7[%c1_94, %c0_95, %c0_96, %c0_97] : memref<2x2x1x48xf32, #tpu.memory_space<vmem>>, vector<1x2x1x48xf32>
    %178 = vector.shape_cast %177 : vector<1x2x1x48xf32> to vector<2x1x48xf32>
    %179 = vector.broadcast %178 : vector<2x1x48xf32> to vector<2x5x48xf32>
    %180 = arith.addf %176, %179 : vector<2x5x48xf32>
    %181 = vector.extract_strided_slice %180 {offsets = [0, 0, 0], sizes = [2, 5, 16], strides = [1, 1, 1]} : vector<2x5x48xf32> to vector<2x5x16xf32>
    %182 = vector.extract_strided_slice %180 {offsets = [0, 0, 16], sizes = [2, 5, 16], strides = [1, 1, 1]} : vector<2x5x48xf32> to vector<2x5x16xf32>
    %183 = vector.extract_strided_slice %180 {offsets = [0, 0, 32], sizes = [2, 5, 16], strides = [1, 1, 1]} : vector<2x5x48xf32> to vector<2x5x16xf32>
    "tpu.trace_start"() <{level = 10 : i32, message = "hqd,hkd->hqk"}> : () -> ()
    %cst_98 = arith.constant dense<0.000000e+00> : vector<2x5x5xf32>
    %184 = tpu.matmul %181, %182, %cst_98 {dimension_numbers = #tpu.dot_dimension_numbers<[2], [2], [1], [1], [0, 0, 0, 1, 1, 1], [0], [0]>} : vector<2x5x16xf32>, vector<2x5x16xf32>, vector<2x5x5xf32> -> vector<2x5x5xf32>
    "tpu.trace_stop"() : () -> ()
    %cst_99 = arith.constant dense<0xFF800000> : vector<2x5xf32>
    %185 = vector.multi_reduction <maximumf>, %184, %cst_99 [2] : vector<2x5x5xf32> to vector<2x5xf32>
    %186 = vector.shape_cast %185 : vector<2x5xf32> to vector<2x5x1xf32>
    %187 = vector.broadcast %186 : vector<2x5x1xf32> to vector<2x5x5xf32>
    %188 = arith.subf %184, %187 : vector<2x5x5xf32>
    %189 = math.exp %188 : vector<2x5x5xf32>
    %cst_100 = arith.constant dense<0.000000e+00> : vector<2x5xf32>
    %190 = vector.multi_reduction <add>, %189, %cst_100 [2] : vector<2x5x5xf32> to vector<2x5xf32>
    %191 = vector.shape_cast %190 : vector<2x5xf32> to vector<2x5x1xf32>
    %192 = tpu.reciprocal %191 {approx = true} : vector<2x5x1xf32> -> vector<2x5x1xf32>
    %193 = vector.broadcast %192 : vector<2x5x1xf32> to vector<2x5x5xf32>
    %194 = arith.mulf %189, %193 : vector<2x5x5xf32>
    "tpu.trace_start"() <{level = 10 : i32, message = "hqk,hkd->hqd"}> : () -> ()
    %cst_101 = arith.constant dense<0.000000e+00> : vector<2x5x16xf32>
    %195 = tpu.matmul %194, %183, %cst_101 {dimension_numbers = #tpu.dot_dimension_numbers<[2], [1], [1], [2], [0, 0, 0, 1, 1, 2], [0], [0]>} : vector<2x5x5xf32>, vector<2x5x16xf32>, vector<2x5x16xf32> -> vector<2x5x16xf32>
    "tpu.trace_stop"() : () -> ()
    %c1_102 = arith.constant 1 : index
    %c0_103 = arith.constant 0 : index
    %c0_104 = arith.constant 0 : index
    %c0_105 = arith.constant 0 : index
    %196 = vector.load %arg8[%c1_102, %c0_103, %c0_104, %c0_105] : memref<2x2x16x32xf32, #tpu.memory_space<vmem>>, vector<1x2x16x32xf32>
    %197 = vector.shape_cast %196 : vector<1x2x16x32xf32> to vector<2x16x32xf32>
    "tpu.trace_start"() <{level = 10 : i32, message = "hsd,hde->hse"}> : () -> ()
    %cst_106 = arith.constant dense<0.000000e+00> : vector<2x5x32xf32>
    %198 = tpu.matmul %195, %197, %cst_106 {dimension_numbers = #tpu.dot_dimension_numbers<[2], [1], [1], [2], [0, 0, 0, 1, 1, 2], [0], [0]>} : vector<2x5x16xf32>, vector<2x16x32xf32>, vector<2x5x32xf32> -> vector<2x5x32xf32>
    "tpu.trace_stop"() : () -> ()
    %cst_107 = arith.constant dense<0.000000e+00> : vector<5x32xf32>
    %199 = vector.multi_reduction <add>, %198, %cst_107 [0] : vector<2x5x32xf32> to vector<5x32xf32>
    %c1_108 = arith.constant 1 : index
    %c0_109 = arith.constant 0 : index
    %c0_110 = arith.constant 0 : index
    %200 = vector.load %arg9[%c1_108, %c0_109, %c0_110] : memref<2x1x32xf32, #tpu.memory_space<vmem>>, vector<1x1x32xf32>
    %201 = vector.shape_cast %200 : vector<1x1x32xf32> to vector<1x32xf32>
    %202 = vector.broadcast %201 : vector<1x32xf32> to vector<5x32xf32>
    %203 = arith.addf %199, %202 : vector<5x32xf32>
    %204 = arith.addf %145, %203 : vector<5x32xf32>
    %c1_111 = arith.constant 1 : index
    %c0_112 = arith.constant 0 : index
    %c0_113 = arith.constant 0 : index
    %205 = vector.load %arg10[%c1_111, %c0_112, %c0_113] : memref<2x1x32xf32, #tpu.memory_space<vmem>>, vector<1x1x32xf32>
    %206 = vector.shape_cast %205 : vector<1x1x32xf32> to vector<1x32xf32>
    %c1_114 = arith.constant 1 : index
    %c0_115 = arith.constant 0 : index
    %c0_116 = arith.constant 0 : index
    %207 = vector.load %arg11[%c1_114, %c0_115, %c0_116] : memref<2x1x32xf32, #tpu.memory_space<vmem>>, vector<1x1x32xf32>
    %208 = vector.shape_cast %207 : vector<1x1x32xf32> to vector<1x32xf32>
    %cst_117 = arith.constant dense<0.000000e+00> : vector<5xf32>
    %209 = vector.multi_reduction <add>, %204, %cst_117 [1] : vector<5x32xf32> to vector<5xf32>
    %210 = vector.shape_cast %209 : vector<5xf32> to vector<5x1xf32>
    %cst_118 = arith.constant 3.200000e+01 : f32
    %211 = vector.broadcast %cst_118 : f32 to vector<5x1xf32>
    %212 = arith.divf %210, %211 : vector<5x1xf32>
    %213 = vector.broadcast %212 : vector<5x1xf32> to vector<5x32xf32>
    %214 = arith.subf %204, %213 : vector<5x32xf32>
    %215 = arith.mulf %214, %214 : vector<5x32xf32>
    %cst_119 = arith.constant dense<0.000000e+00> : vector<5xf32>
    %216 = vector.multi_reduction <add>, %215, %cst_119 [1] : vector<5x32xf32> to vector<5xf32>
    %217 = vector.shape_cast %216 : vector<5xf32> to vector<5x1xf32>
    %cst_120 = arith.constant 3.200000e+01 : f32
    %218 = vector.broadcast %cst_120 : f32 to vector<5x1xf32>
    %219 = arith.divf %217, %218 : vector<5x1xf32>
    %220 = vector.broadcast %212 : vector<5x1xf32> to vector<5x32xf32>
    %221 = arith.subf %204, %220 : vector<5x32xf32>
    %cst_121 = arith.constant 9.99999996E-13 : f32
    %222 = vector.broadcast %cst_121 : f32 to vector<5x1xf32>
    %223 = arith.addf %219, %222 : vector<5x1xf32>
    %224 = math.rsqrt %223 : vector<5x1xf32>
    %225 = vector.broadcast %224 : vector<5x1xf32> to vector<5x32xf32>
    %226 = arith.mulf %221, %225 : vector<5x32xf32>
    %227 = vector.broadcast %206 : vector<1x32xf32> to vector<5x32xf32>
    %228 = arith.mulf %226, %227 : vector<5x32xf32>
    %229 = vector.broadcast %208 : vector<1x32xf32> to vector<5x32xf32>
    %230 = arith.addf %228, %229 : vector<5x32xf32>
    %c1_122 = arith.constant 1 : index
    %c0_123 = arith.constant 0 : index
    %c0_124 = arith.constant 0 : index
    %231 = vector.load %arg12[%c1_122, %c0_123, %c0_124] : memref<2x32x64xf32, #tpu.memory_space<vmem>>, vector<1x32x64xf32>
    %232 = vector.shape_cast %231 : vector<1x32x64xf32> to vector<32x64xf32>
    %cst_125 = arith.constant dense<0.000000e+00> : vector<5x64xf32>
    %233 = tpu.matmul %230, %232, %cst_125 {dimension_numbers = #tpu.dot_dimension_numbers<[1], [0], [0], [1], [0, 0, 1, 1], [], []>} : vector<5x32xf32>, vector<32x64xf32>, vector<5x64xf32> -> vector<5x64xf32>
    %c1_126 = arith.constant 1 : index
    %c0_127 = arith.constant 0 : index
    %c0_128 = arith.constant 0 : index
    %234 = vector.load %arg13[%c1_126, %c0_127, %c0_128] : memref<2x1x64xf32, #tpu.memory_space<vmem>>, vector<1x1x64xf32>
    %235 = vector.shape_cast %234 : vector<1x1x64xf32> to vector<1x64xf32>
    %236 = vector.broadcast %235 : vector<1x64xf32> to vector<5x64xf32>
    %237 = arith.addf %233, %236 : vector<5x64xf32>
    %cst_129 = arith.constant 5.000000e-01 : f32
    %238 = vector.broadcast %cst_129 : f32 to vector<5x64xf32>
    %239 = arith.mulf %238, %237 : vector<5x64xf32>
    %cst_130 = arith.constant 0.707106769 : f32
    %240 = vector.broadcast %cst_130 : f32 to vector<5x64xf32>
    %241 = arith.mulf %237, %240 : vector<5x64xf32>
    %242 = math.absf %241 : vector<5x64xf32>
    %cst_131 = arith.constant 0.327591091 : f32
    %243 = vector.broadcast %cst_131 : f32 to vector<5x64xf32>
    %244 = arith.mulf %243, %242 : vector<5x64xf32>
    %cst_132 = arith.constant 1.000000e+00 : f32
    %245 = vector.broadcast %cst_132 : f32 to vector<5x64xf32>
    %246 = arith.addf %245, %244 : vector<5x64xf32>
    %cst_133 = arith.constant 1.000000e+00 : f32
    %247 = vector.broadcast %cst_133 : f32 to vector<5x64xf32>
    %248 = arith.divf %247, %246 : vector<5x64xf32>
    %cst_134 = arith.constant 1.06140542 : f32
    %249 = vector.broadcast %cst_134 : f32 to vector<5x64xf32>
    %250 = arith.mulf %249, %248 : vector<5x64xf32>
    %cst_135 = arith.constant -1.45315206 : f32
    %251 = vector.broadcast %cst_135 : f32 to vector<5x64xf32>
    %252 = arith.addf %250, %251 : vector<5x64xf32>
    %253 = arith.mulf %252, %248 : vector<5x64xf32>
    %cst_136 = arith.constant 1.42141378 : f32
    %254 = vector.broadcast %cst_136 : f32 to vector<5x64xf32>
    %255 = arith.addf %253, %254 : vector<5x64xf32>
    %256 = arith.mulf %255, %248 : vector<5x64xf32>
    %cst_137 = arith.constant -0.284496725 : f32
    %257 = vector.broadcast %cst_137 : f32 to vector<5x64xf32>
    %258 = arith.addf %256, %257 : vector<5x64xf32>
    %259 = arith.mulf %258, %248 : vector<5x64xf32>
    %cst_138 = arith.constant 0.254829586 : f32
    %260 = vector.broadcast %cst_138 : f32 to vector<5x64xf32>
    %261 = arith.addf %259, %260 : vector<5x64xf32>
    %262 = arith.mulf %261, %248 : vector<5x64xf32>
    %cst_139 = arith.constant 0.000000e+00 : f32
    %263 = vector.broadcast %cst_139 : f32 to vector<5x64xf32>
    %264 = arith.subf %263, %242 : vector<5x64xf32>
    %265 = arith.mulf %264, %242 : vector<5x64xf32>
    %266 = math.exp %265 : vector<5x64xf32>
    %267 = arith.mulf %262, %266 : vector<5x64xf32>
    %cst_140 = arith.constant 1.000000e+00 : f32
    %268 = vector.broadcast %cst_140 : f32 to vector<5x64xf32>
    %269 = arith.subf %268, %267 : vector<5x64xf32>
    %cst_141 = arith.constant 0.000000e+00 : f32
    %270 = vector.broadcast %cst_141 : f32 to vector<5x64xf32>
    %271 = arith.cmpf olt, %241, %270 : vector<5x64xf32>
    %cst_142 = arith.constant 0.000000e+00 : f32
    %272 = vector.broadcast %cst_142 : f32 to vector<5x64xf32>
    %273 = arith.subf %272, %269 : vector<5x64xf32>
    %274 = arith.select %271, %273, %269 : vector<5x64xi1>, vector<5x64xf32>
    %cst_143 = arith.constant 1.000000e+00 : f32
    %275 = vector.broadcast %cst_143 : f32 to vector<5x64xf32>
    %276 = arith.addf %275, %274 : vector<5x64xf32>
    %277 = arith.mulf %239, %276 : vector<5x64xf32>
    %c1_144 = arith.constant 1 : index
    %c0_145 = arith.constant 0 : index
    %c0_146 = arith.constant 0 : index
    %278 = vector.load %arg14[%c1_144, %c0_145, %c0_146] : memref<2x64x32xf32, #tpu.memory_space<vmem>>, vector<1x64x32xf32>
    %279 = vector.shape_cast %278 : vector<1x64x32xf32> to vector<64x32xf32>
    %cst_147 = arith.constant dense<0.000000e+00> : vector<5x32xf32>
    %280 = tpu.matmul %277, %279, %cst_147 {dimension_numbers = #tpu.dot_dimension_numbers<[1], [0], [0], [1], [0, 0, 1, 1], [], []>} : vector<5x64xf32>, vector<64x32xf32>, vector<5x32xf32> -> vector<5x32xf32>
    %c1_148 = arith.constant 1 : index
    %c0_149 = arith.constant 0 : index
    %c0_150 = arith.constant 0 : index
    %281 = vector.load %arg15[%c1_148, %c0_149, %c0_150] : memref<2x1x32xf32, #tpu.memory_space<vmem>>, vector<1x1x32xf32>
    %282 = vector.shape_cast %281 : vector<1x1x32xf32> to vector<1x32xf32>
    %283 = vector.broadcast %282 : vector<1x32xf32> to vector<5x32xf32>
    %284 = arith.addf %280, %283 : vector<5x32xf32>
    %285 = arith.addf %204, %284 : vector<5x32xf32>
    %286 = vector.extract_strided_slice %285 {offsets = [0, 0], sizes = [1, 32], strides = [1, 1]} : vector<5x32xf32> to vector<1x32xf32>
    %c0_151 = arith.constant 0 : index
    %c0_152 = arith.constant 0 : index
    %287 = vector.load %arg16[%c0_151, %c0_152] : memref<1x32xf32, #tpu.memory_space<vmem>>, vector<1x32xf32>
    %c0_153 = arith.constant 0 : index
    %c0_154 = arith.constant 0 : index
    %288 = vector.load %arg17[%c0_153, %c0_154] : memref<1x32xf32, #tpu.memory_space<vmem>>, vector<1x32xf32>
    %cst_155 = arith.constant dense<0.000000e+00> : vector<1xf32>
    %289 = vector.multi_reduction <add>, %286, %cst_155 [1] : vector<1x32xf32> to vector<1xf32>
    %290 = vector.shape_cast %289 : vector<1xf32> to vector<1x1xf32>
    %cst_156 = arith.constant 3.200000e+01 : f32
    %291 = vector.broadcast %cst_156 : f32 to vector<1x1xf32>
    %292 = arith.divf %290, %291 : vector<1x1xf32>
    %293 = vector.broadcast %292 : vector<1x1xf32> to vector<1x32xf32>
    %294 = arith.subf %286, %293 : vector<1x32xf32>
    %295 = arith.mulf %294, %294 : vector<1x32xf32>
    %cst_157 = arith.constant dense<0.000000e+00> : vector<1xf32>
    %296 = vector.multi_reduction <add>, %295, %cst_157 [1] : vector<1x32xf32> to vector<1xf32>
    %297 = vector.shape_cast %296 : vector<1xf32> to vector<1x1xf32>
    %cst_158 = arith.constant 3.200000e+01 : f32
    %298 = vector.broadcast %cst_158 : f32 to vector<1x1xf32>
    %299 = arith.divf %297, %298 : vector<1x1xf32>
    %300 = vector.broadcast %292 : vector<1x1xf32> to vector<1x32xf32>
    %301 = arith.subf %286, %300 : vector<1x32xf32>
    %cst_159 = arith.constant 9.99999996E-13 : f32
    %302 = vector.broadcast %cst_159 : f32 to vector<1x1xf32>
    %303 = arith.addf %299, %302 : vector<1x1xf32>
    %304 = math.rsqrt %303 : vector<1x1xf32>
    %305 = vector.broadcast %304 : vector<1x1xf32> to vector<1x32xf32>
    %306 = arith.mulf %301, %305 : vector<1x32xf32>
    %307 = arith.mulf %306, %287 : vector<1x32xf32>
    %308 = arith.addf %307, %288 : vector<1x32xf32>
    %c0_160 = arith.constant 0 : index
    %c0_161 = arith.constant 0 : index
    %309 = vector.load %arg18[%c0_160, %c0_161] : memref<32x32xf32, #tpu.memory_space<vmem>>, vector<32x32xf32>
    %cst_162 = arith.constant dense<0.000000e+00> : vector<1x32xf32>
    %310 = tpu.matmul %308, %309, %cst_162 {dimension_numbers = #tpu.dot_dimension_numbers<[1], [0], [0], [1], [0, 0, 1, 1], [], []>} : vector<1x32xf32>, vector<32x32xf32>, vector<1x32xf32> -> vector<1x32xf32>
    %c0_163 = arith.constant 0 : index
    %c0_164 = arith.constant 0 : index
    %311 = vector.load %arg19[%c0_163, %c0_164] : memref<1x32xf32, #tpu.memory_space<vmem>>, vector<1x32xf32>
    %312 = arith.addf %310, %311 : vector<1x32xf32>
    %313 = math.tanh %312 : vector<1x32xf32>
    %c0_165 = arith.constant 0 : index
    %c0_166 = arith.constant 0 : index
    %c0_167 = arith.constant 0 : index
    %314 = vector.load %arg20[%c0_165, %c0_166, %c0_167] : memref<1x1x32xf32, #tpu.memory_space<vmem>>, vector<1x1x32xf32>
    %315 = vector.shape_cast %314 : vector<1x1x32xf32> to vector<1x32xf32>
    %316 = vector.shape_cast %313 : vector<1x32xf32> to vector<1x1x32xf32>
    tpu.vector_store %arg20[%c0_165, %c0_166, %c0_167], %316 {strides = array<i32>} : memref<1x1x32xf32, #tpu.memory_space<vmem>>, vector<1x1x32xf32>,
    return
  }
  func.func @transform_0(%arg0: i32) -> (i32, i32, i32) {
    %c0_i32 = arith.constant 0 : i32
    %c0_i32_0 = arith.constant 0 : i32
    %c0_i32_1 = arith.constant 0 : i32
    return %arg0, %c0_i32, %c0_i32_0 : i32, i32, i32
  }
  func.func @transform_1(%arg0: i32) -> (i32, i32) {
    %c0_i32 = arith.constant 0 : i32
    %c0_i32_0 = arith.constant 0 : i32
    %c0_i32_1 = arith.constant 0 : i32
    return %c0_i32, %c0_i32_0 : i32, i32
  }
  func.func @transform_2(%arg0: i32) -> (i32, i32) {
    %c0_i32 = arith.constant 0 : i32
    %c0_i32_0 = arith.constant 0 : i32
    %c0_i32_1 = arith.constant 0 : i32
    return %c0_i32, %c0_i32_0 : i32, i32
  }
  func.func @transform_3(%arg0: i32) -> (i32, i32, i32) {
    %c0_i32 = arith.constant 0 : i32
    %c0_i32_0 = arith.constant 0 : i32
    %c0_i32_1 = arith.constant 0 : i32
    %c0_i32_2 = arith.constant 0 : i32
    return %c0_i32, %c0_i32_0, %c0_i32_1 : i32, i32, i32
  }
  func.func @transform_4(%arg0: i32) -> (i32, i32, i32) {
    %c0_i32 = arith.constant 0 : i32
    %c0_i32_0 = arith.constant 0 : i32
    %c0_i32_1 = arith.constant 0 : i32
    %c0_i32_2 = arith.constant 0 : i32
    return %c0_i32, %c0_i32_0, %c0_i32_1 : i32, i32, i32
  }
  func.func @transform_5(%arg0: i32) -> (i32, i32, i32, i32) {
    %c0_i32 = arith.constant 0 : i32
    %c0_i32_0 = arith.constant 0 : i32
    %c0_i32_1 = arith.constant 0 : i32
    %c0_i32_2 = arith.constant 0 : i32
    %c0_i32_3 = arith.constant 0 : i32
    return %c0_i32, %c0_i32_0, %c0_i32_1, %c0_i32_2 : i32, i32, i32, i32
  }
  func.func @transform_6(%arg0: i32) -> (i32, i32, i32, i32) {
    %c0_i32 = arith.constant 0 : i32
    %c0_i32_0 = arith.constant 0 : i32
    %c0_i32_1 = arith.constant 0 : i32
    %c0_i32_2 = arith.constant 0 : i32
    %c0_i32_3 = arith.constant 0 : i32
    return %c0_i32, %c0_i32_0, %c0_i32_1, %c0_i32_2 : i32, i32, i32, i32
  }
  func.func @transform_7(%arg0: i32) -> (i32, i32, i32, i32) {
    %c0_i32 = arith.constant 0 : i32
    %c0_i32_0 = arith.constant 0 : i32
    %c0_i32_1 = arith.constant 0 : i32
    %c0_i32_2 = arith.constant 0 : i32
    %c0_i32_3 = arith.constant 0 : i32
    return %c0_i32, %c0_i32_0, %c0_i32_1, %c0_i32_2 : i32, i32, i32, i32
  }
  func.func @transform_8(%arg0: i32) -> (i32, i32, i32) {
    %c0_i32 = arith.constant 0 : i32
    %c0_i32_0 = arith.constant 0 : i32
    %c0_i32_1 = arith.constant 0 : i32
    %c0_i32_2 = arith.constant 0 : i32
    return %c0_i32, %c0_i32_0, %c0_i32_1 : i32, i32, i32
  }
  func.func @transform_9(%arg0: i32) -> (i32, i32, i32) {
    %c0_i32 = arith.constant 0 : i32
    %c0_i32_0 = arith.constant 0 : i32
    %c0_i32_1 = arith.constant 0 : i32
    %c0_i32_2 = arith.constant 0 : i32
    return %c0_i32, %c0_i32_0, %c0_i32_1 : i32, i32, i32
  }
  func.func @transform_10(%arg0: i32) -> (i32, i32, i32) {
    %c0_i32 = arith.constant 0 : i32
    %c0_i32_0 = arith.constant 0 : i32
    %c0_i32_1 = arith.constant 0 : i32
    %c0_i32_2 = arith.constant 0 : i32
    return %c0_i32, %c0_i32_0, %c0_i32_1 : i32, i32, i32
  }
  func.func @transform_11(%arg0: i32) -> (i32, i32, i32) {
    %c0_i32 = arith.constant 0 : i32
    %c0_i32_0 = arith.constant 0 : i32
    %c0_i32_1 = arith.constant 0 : i32
    %c0_i32_2 = arith.constant 0 : i32
    return %c0_i32, %c0_i32_0, %c0_i32_1 : i32, i32, i32
  }
  func.func @transform_12(%arg0: i32) -> (i32, i32, i32) {
    %c0_i32 = arith.constant 0 : i32
    %c0_i32_0 = arith.constant 0 : i32
    %c0_i32_1 = arith.constant 0 : i32
    %c0_i32_2 = arith.constant 0 : i32
    return %c0_i32, %c0_i32_0, %c0_i32_1 : i32, i32, i32
  }
  func.func @transform_13(%arg0: i32) -> (i32, i32, i32) {
    %c0_i32 = arith.constant 0 : i32
    %c0_i32_0 = arith.constant 0 : i32
    %c0_i32_1 = arith.constant 0 : i32
    %c0_i32_2 = arith.constant 0 : i32
    return %c0_i32, %c0_i32_0, %c0_i32_1 : i32, i32, i32
  }
  func.func @transform_14(%arg0: i32) -> (i32, i32, i32) {
    %c0_i32 = arith.constant 0 : i32
    %c0_i32_0 = arith.constant 0 : i32
    %c0_i32_1 = arith.constant 0 : i32
    %c0_i32_2 = arith.constant 0 : i32
    return %c0_i32, %c0_i32_0, %c0_i32_1 : i32, i32, i32
  }
  func.func @transform_15(%arg0: i32) -> (i32, i32) {
    %c0_i32 = arith.constant 0 : i32
    %c0_i32_0 = arith.constant 0 : i32
    %c0_i32_1 = arith.constant 0 : i32
    return %c0_i32, %c0_i32_0 : i32, i32
  }
  func.func @transform_16(%arg0: i32) -> (i32, i32) {
    %c0_i32 = arith.constant 0 : i32
    %c0_i32_0 = arith.constant 0 : i32
    %c0_i32_1 = arith.constant 0 : i32
    return %c0_i32, %c0_i32_0 : i32, i32
  }
  func.func @transform_17(%arg0: i32) -> (i32, i32) {
    %c0_i32 = arith.constant 0 : i32
    %c0_i32_0 = arith.constant 0 : i32
    %c0_i32_1 = arith.constant 0 : i32
    return %c0_i32, %c0_i32_0 : i32, i32
  }
  func.func @transform_18(%arg0: i32) -> (i32, i32) {
    %c0_i32 = arith.constant 0 : i32
    %c0_i32_0 = arith.constant 0 : i32
    %c0_i32_1 = arith.constant 0 : i32
    return %c0_i32, %c0_i32_0 : i32, i32
  }
  func.func @transform_19(%arg0: i32) -> (i32, i32, i32) {
    %c0_i32 = arith.constant 0 : i32
    %c0_i32_0 = arith.constant 0 : i32
    %c0_i32_1 = arith.constant 0 : i32
    return %arg0, %c0_i32, %c0_i32_0 : i32, i32, i32
  }
}

</mosaic_0001>

<llo_original>
// kernel: image_encoder_forward.1
$region0: #{image_encoder_forward.1}
  #allocation0 [shape = 'u32[]', space=smem, size = 0x4, offset = 0x4, fixed_abs, tag = 'smem constant byte address 0x4 - core index']
  #allocation1 [shape = 'u32[144,128]{1,0:T(1,128)}', space=vmem, size = 0x12000, scoped, tag = 'internal scratch']
  %s0 = inlined_call_operand.vmem [shape: f32[2,5,192], index: 0, kind: input, shape index: {}]
  %s1 = inlined_call_operand.vmem [shape: f32[192,32], index: 1, kind: input, shape index: {}]
  %s2 = inlined_call_operand.vmem [shape: f32[5,32], index: 2, kind: input, shape index: {}]
  %s3 = inlined_call_operand.vmem [shape: f32[2,1,32], index: 3, kind: input, shape index: {}]
  %s4 = inlined_call_operand.vmem [shape: f32[2,1,32], index: 4, kind: input, shape index: {}]
  %s5 = inlined_call_operand.vmem [shape: f32[2,2,32,48], index: 5, kind: input, shape index: {}]
  %s6 = inlined_call_operand.vmem [shape: f32[2,2,1,48], index: 6, kind: input, shape index: {}]
  %s7 = inlined_call_operand.vmem [shape: f32[2,2,16,32], index: 7, kind: input, shape index: {}]
  %s8 = inlined_call_operand.vmem [shape: f32[2,1,32], index: 8, kind: input, shape index: {}]
  %s9 = inlined_call_operand.vmem [shape: f32[2,1,32], index: 9, kind: input, shape index: {}]
  %s10 = inlined_call_operand.vmem [shape: f32[2,1,32], index: 10, kind: input, shape index: {}]
  %s11 = inlined_call_operand.vmem [shape: f32[2,32,64], index: 11, kind: input, shape index: {}]
  %s12 = inlined_call_operand.vmem [shape: f32[2,1,64], index: 12, kind: input, shape index: {}]
  %s13 = inlined_call_operand.vmem [shape: f32[2,64,32], index: 13, kind: input, shape index: {}]
  %s14 = inlined_call_operand.vmem [shape: f32[2,1,32], index: 14, kind: input, shape index: {}]
  %s15 = inlined_call_operand.vmem [shape: f32[1,32], index: 15, kind: input, shape index: {}]
  %s16 = inlined_call_operand.vmem [shape: f32[1,32], index: 16, kind: input, shape index: {}]
  %s17 = inlined_call_operand.vmem [shape: f32[32,32], index: 17, kind: input, shape index: {}]
  %s18 = inlined_call_operand.vmem [shape: f32[1,32], index: 18, kind: input, shape index: {}]
  %s19 = inlined_call_operand.hbm [shape: f32[2,1,32], index: 19, kind: output, shape index: {}]
  %s20 = sld [smem:[#allocation0]]
  $region109: #{image_encoder_forward.1} parent=0
    _
  %s22 = ssub.s32 1, %s20
  %s23 = scalar_select 0, %s22, %s20
  $region1: #{image_encoder_forward.1} parent=0
    #allocation2 [shape = 'u8[1024]{0}', space=vmem, size = 0x400, scoped, tag = 'output window, operand 0']
    #allocation3 [shape = 's32[2]{0}', space=sflag, size = 0x8, scoped, tag = 'scoped memory for image_encoder_forward.1']
    %24 = vsyncpa [#allocation3], 0
    %s25 = scalar_lea.sflag [#allocation3], 1
    %26 = vsyncpa %s25, 0
    loop: start=0, step=1, limit=4
    $region2: #{image_encoder_forward.1} parent=1 // loop_pre_header
      _
    $region3: #{image_encoder_forward.1} parent=1 // loop_header
      %s28 = sphi 0, %s32
      %p29 = scmp.ge.s32.totalorder %s28, 4
      %s38 = sphi 0, %s40
      %s41 = sphi 0, %s38
      %s42 = sphi 0, %s41
      %s58 = sphi 0, %s42
      %s62 = sphi 0, %s62
      %s64 = sphi 0, %s62
      %s65 = sphi 0, %s64
      %s79 = sphi 0, %s65
      %s83 = sphi 0, %s83
      %s85 = sphi 0, %s83
      %s86 = sphi 0, %s85
      %s100 = sphi 0, %s86
      %s104 = sphi 0, %s104
      %s106 = sphi 0, %s104
      %s107 = sphi 0, %s106
      %s121 = sphi 0, %s107
      %s125 = sphi 0, %s125
      %s127 = sphi 0, %s125
      %s128 = sphi 0, %s127
      %s142 = sphi 0, %s128
      %s146 = sphi 0, %s146
      %s148 = sphi 0, %s146
      %s149 = sphi 0, %s148
      %s163 = sphi 0, %s149
      %s167 = sphi 0, %s167
      %s169 = sphi 0, %s167
      %s170 = sphi 0, %s169
      %s184 = sphi 0, %s170
      %s188 = sphi 0, %s188
      %s190 = sphi 0, %s188
      %s191 = sphi 0, %s190
      %s205 = sphi 0, %s191
      %s209 = sphi 0, %s209
      %s211 = sphi 0, %s209
      %s212 = sphi 0, %s211
      %s226 = sphi 0, %s212
      %s230 = sphi 0, %s230
      %s232 = sphi 0, %s230
      %s233 = sphi 0, %s232
      %s247 = sphi 0, %s233
      %s251 = sphi 0, %s251
      %s253 = sphi 0, %s251
      %s254 = sphi 0, %s253
      %s268 = sphi 0, %s254
      %s272 = sphi 0, %s272
      %s274 = sphi 0, %s272
      %s275 = sphi 0, %s274
      %s289 = sphi 0, %s275
      %s293 = sphi 0, %s293
      %s295 = sphi 0, %s293
      %s296 = sphi 0, %s295
      %s310 = sphi 0, %s296
      %s314 = sphi 0, %s314
      %s316 = sphi 0, %s314
      %s317 = sphi 0, %s316
      %s331 = sphi 0, %s317
      %s335 = sphi 0, %s335
      %s337 = sphi 0, %s335
      %s338 = sphi 0, %s337
      %s352 = sphi 0, %s338
      %s356 = sphi 0, %s356
      %s358 = sphi 0, %s356
      %s359 = sphi 0, %s358
      %s373 = sphi 0, %s359
      %s377 = sphi 0, %s377
      %s379 = sphi 0, %s377
      %s380 = sphi 0, %s379
      %s394 = sphi 0, %s380
      %s398 = sphi 0, %s398
      %s400 = sphi 0, %s398
      %s401 = sphi 0, %s400
      %s415 = sphi 0, %s401
      %s419 = sphi 0, %s419
      %s421 = sphi 0, %s419
      %s422 = sphi 0, %s421
      %s436 = sphi 0, %s422
      %s442 = sphi 0, %s444
      %s445 = sphi 0, %s442
      %s446 = sphi 0, %s445
      %s462 = sphi 0, %s446
    $region4: #{image_encoder_forward.1} parent=1 // loop_header_branch
      %31 = sbr.rel (%p29) target = $region8
    $region5: #{image_encoder_forward.1} parent=1 // loop_body
      %s33 = ssub.s32 %s28, 1
      %s34 = ssub.s32 %s28, 2
      %s35 = sadd.s32 %s28, 1
      %s36 = ssub.s32 %s28, %s35
      %p37 = scmp.eq.s32.totalorder %s36, 0
      %s39 = sadd.s32 %s38, 1
      %s40 = scalar_select %p37, %s38, %s39
      %p43 = pneg %p37
      %p44 = scmp.eq.s32.totalorder %s28, 1
      %p45 = por %p43, %p44
      %p46 = scmp.ne.s32.totalorder %s38, %s41
      %p47 = scmp.eq.s32.totalorder %s28, 0
      %p48 = por %p46, %p47
      %p49 = scmp.ne.s32.totalorder %s38, %s41
      %p50 = scmp.eq.s32.totalorder %s33, 1
      %p51 = por %p49, %p50
      %p52 = scmp.ne.s32.totalorder %s41, %s42
      %p53 = scmp.eq.s32.totalorder %s33, 0
      %p54 = por %p52, %p53
      %p55 = scmp.ne.s32.totalorder %s41, %s42
      %p56 = scmp.eq.s32.totalorder %s34, 1
      %p57 = por %p55, %p56
      %p59 = scmp.ne.s32.totalorder %s42, %s58
      %p60 = scmp.eq.s32.totalorder %s34, 0
      %p61 = por %p59, %p60
      %s63 = sadd.s32 %s62, 1
      %p66 = scmp.eq.s32.totalorder %s28, 1
      %p67 = scmp.ne.s32.totalorder %s62, %s64
      %p68 = scmp.eq.s32.totalorder %s28, 0
      %p69 = por %p67, %p68
      %p70 = scmp.ne.s32.totalorder %s62, %s64
      %p71 = scmp.eq.s32.totalorder %s33, 1
      %p72 = por %p70, %p71
      %p73 = scmp.ne.s32.totalorder %s64, %s65
      %p74 = scmp.eq.s32.totalorder %s33, 0
      %p75 = por %p73, %p74
      %p76 = scmp.ne.s32.totalorder %s64, %s65
      %p77 = scmp.eq.s32.totalorder %s34, 1
      %p78 = por %p76, %p77
      %p80 = scmp.ne.s32.totalorder %s65, %s79
      %p81 = scmp.eq.s32.totalorder %s34, 0
      %p82 = por %p80, %p81
      %s84 = sadd.s32 %s83, 1
      %p87 = scmp.eq.s32.totalorder %s28, 1
      %p88 = scmp.ne.s32.totalorder %s83, %s85
      %p89 = scmp.eq.s32.totalorder %s28, 0
      %p90 = por %p88, %p89
      %p91 = scmp.ne.s32.totalorder %s83, %s85
      %p92 = scmp.eq.s32.totalorder %s33, 1
      %p93 = por %p91, %p92
      %p94 = scmp.ne.s32.totalorder %s85, %s86
      %p95 = scmp.eq.s32.totalorder %s33, 0
      %p96 = por %p94, %p95
      %p97 = scmp.ne.s32.totalorder %s85, %s86
      %p98 = scmp.eq.s32.totalorder %s34, 1
      %p99 = por %p97, %p98
      %p101 = scmp.ne.s32.totalorder %s86, %s100
      %p102 = scmp.eq.s32.totalorder %s34, 0
      %p103 = por %p101, %p102
      %s105 = sadd.s32 %s104, 1
      %p108 = scmp.eq.s32.totalorder %s28, 1
      %p109 = scmp.ne.s32.totalorder %s104, %s106
      %p110 = scmp.eq.s32.totalorder %s28, 0
      %p111 = por %p109, %p110
      %p112 = scmp.ne.s32.totalorder %s104, %s106
      %p113 = scmp.eq.s32.totalorder %s33, 1
      %p114 = por %p112, %p113
      %p115 = scmp.ne.s32.totalorder %s106, %s107
      %p116 = scmp.eq.s32.totalorder %s33, 0
      %p117 = por %p115, %p116
      %p118 = scmp.ne.s32.totalorder %s106, %s107
      %p119 = scmp.eq.s32.totalorder %s34, 1
      %p120 = por %p118, %p119
      %p122 = scmp.ne.s32.totalorder %s107, %s121
      %p123 = scmp.eq.s32.totalorder %s34, 0
      %p124 = por %p122, %p123
      %s126 = sadd.s32 %s125, 1
      %p129 = scmp.eq.s32.totalorder %s28, 1
      %p130 = scmp.ne.s32.totalorder %s125, %s127
      %p131 = scmp.eq.s32.totalorder %s28, 0
      %p132 = por %p130, %p131
      %p133 = scmp.ne.s32.totalorder %s125, %s127
      %p134 = scmp.eq.s32.totalorder %s33, 1
      %p135 = por %p133, %p134
      %p136 = scmp.ne.s32.totalorder %s127, %s128
      %p137 = scmp.eq.s32.totalorder %s33, 0
      %p138 = por %p136, %p137
      %p139 = scmp.ne.s32.totalorder %s127, %s128
      %p140 = scmp.eq.s32.totalorder %s34, 1
      %p141 = por %p139, %p140
      %p143 = scmp.ne.s32.totalorder %s128, %s142
      %p144 = scmp.eq.s32.totalorder %s34, 0
      %p145 = por %p143, %p144
      %s147 = sadd.s32 %s146, 1
      %p150 = scmp.eq.s32.totalorder %s28, 1
      %p151 = scmp.ne.s32.totalorder %s146, %s148
      %p152 = scmp.eq.s32.totalorder %s28, 0
      %p153 = por %p151, %p152
      %p154 = scmp.ne.s32.totalorder %s146, %s148
      %p155 = scmp.eq.s32.totalorder %s33, 1
      %p156 = por %p154, %p155
      %p157 = scmp.ne.s32.totalorder %s148, %s149
      %p158 = scmp.eq.s32.totalorder %s33, 0
      %p159 = por %p157, %p158
      %p160 = scmp.ne.s32.totalorder %s148, %s149
      %p161 = scmp.eq.s32.totalorder %s34, 1
      %p162 = por %p160, %p161
      %p164 = scmp.ne.s32.totalorder %s149, %s163
      %p165 = scmp.eq.s32.totalorder %s34, 0
      %p166 = por %p164, %p165
      %s168 = sadd.s32 %s167, 1
      %p171 = scmp.eq.s32.totalorder %s28, 1
      %p172 = scmp.ne.s32.totalorder %s167, %s169
      %p173 = scmp.eq.s32.totalorder %s28, 0
      %p174 = por %p172, %p173
      %p175 = scmp.ne.s32.totalorder %s167, %s169
      %p176 = scmp.eq.s32.totalorder %s33, 1
      %p177 = por %p175, %p176
      %p178 = scmp.ne.s32.totalorder %s169, %s170
      %p179 = scmp.eq.s32.totalorder %s33, 0
      %p180 = por %p178, %p179
      %p181 = scmp.ne.s32.totalorder %s169, %s170
      %p182 = scmp.eq.s32.totalorder %s34, 1
      %p183 = por %p181, %p182
      %p185 = scmp.ne.s32.totalorder %s170, %s184
      %p186 = scmp.eq.s32.totalorder %s34, 0
      %p187 = por %p185, %p186
      %s189 = sadd.s32 %s188, 1
      %p192 = scmp.eq.s32.totalorder %s28, 1
      %p193 = scmp.ne.s32.totalorder %s188, %s190
      %p194 = scmp.eq.s32.totalorder %s28, 0
      %p195 = por %p193, %p194
      %p196 = scmp.ne.s32.totalorder %s188, %s190
      %p197 = scmp.eq.s32.totalorder %s33, 1
      %p198 = por %p196, %p197
      %p199 = scmp.ne.s32.totalorder %s190, %s191
      %p200 = scmp.eq.s32.totalorder %s33, 0
      %p201 = por %p199, %p200
      %p202 = scmp.ne.s32.totalorder %s190, %s191
      %p203 = scmp.eq.s32.totalorder %s34, 1
      %p204 = por %p202, %p203
      %p206 = scmp.ne.s32.totalorder %s191, %s205
      %p207 = scmp.eq.s32.totalorder %s34, 0
      %p208 = por %p206, %p207
      %s210 = sadd.s32 %s209, 1
      %p213 = scmp.eq.s32.totalorder %s28, 1
      %p214 = scmp.ne.s32.totalorder %s209, %s211
      %p215 = scmp.eq.s32.totalorder %s28, 0
      %p216 = por %p214, %p215
      %p217 = scmp.ne.s32.totalorder %s209, %s211
      %p218 = scmp.eq.s32.totalorder %s33, 1
      %p219 = por %p217, %p218
      %p220 = scmp.ne.s32.totalorder %s211, %s212
      %p221 = scmp.eq.s32.totalorder %s33, 0
      %p222 = por %p220, %p221
      %p223 = scmp.ne.s32.totalorder %s211, %s212
      %p224 = scmp.eq.s32.totalorder %s34, 1
      %p225 = por %p223, %p224
      %p227 = scmp.ne.s32.totalorder %s212, %s226
      %p228 = scmp.eq.s32.totalorder %s34, 0
      %p229 = por %p227, %p228
      %s231 = sadd.s32 %s230, 1
      %p234 = scmp.eq.s32.totalorder %s28, 1
      %p235 = scmp.ne.s32.totalorder %s230, %s232
      %p236 = scmp.eq.s32.totalorder %s28, 0
      %p237 = por %p235, %p236
      %p238 = scmp.ne.s32.totalorder %s230, %s232
      %p239 = scmp.eq.s32.totalorder %s33, 1
      %p240 = por %p238, %p239
      %p241 = scmp.ne.s32.totalorder %s232, %s233
      %p242 = scmp.eq.s32.totalorder %s33, 0
      %p243 = por %p241, %p242
      %p244 = scmp.ne.s32.totalorder %s232, %s233
      %p245 = scmp.eq.s32.totalorder %s34, 1
      %p246 = por %p244, %p245
      %p248 = scmp.ne.s32.totalorder %s233, %s247
      %p249 = scmp.eq.s32.totalorder %s34, 0
      %p250 = por %p248, %p249
      %s252 = sadd.s32 %s251, 1
      %p255 = scmp.eq.s32.totalorder %s28, 1
      %p256 = scmp.ne.s32.totalorder %s251, %s253
      %p257 = scmp.eq.s32.totalorder %s28, 0
      %p258 = por %p256, %p257
      %p259 = scmp.ne.s32.totalorder %s251, %s253
      %p260 = scmp.eq.s32.totalorder %s33, 1
      %p261 = por %p259, %p260
      %p262 = scmp.ne.s32.totalorder %s253, %s254
      %p263 = scmp.eq.s32.totalorder %s33, 0
      %p264 = por %p262, %p263
      %p265 = scmp.ne.s32.totalorder %s253, %s254
      %p266 = scmp.eq.s32.totalorder %s34, 1
      %p267 = por %p265, %p266
      %p269 = scmp.ne.s32.totalorder %s254, %s268
      %p270 = scmp.eq.s32.totalorder %s34, 0
      %p271 = por %p269, %p270
      %s273 = sadd.s32 %s272, 1
      %p276 = scmp.eq.s32.totalorder %s28, 1
      %p277 = scmp.ne.s32.totalorder %s272, %s274
      %p278 = scmp.eq.s32.totalorder %s28, 0
      %p279 = por %p277, %p278
      %p280 = scmp.ne.s32.totalorder %s272, %s274
      %p281 = scmp.eq.s32.totalorder %s33, 1
      %p282 = por %p280, %p281
      %p283 = scmp.ne.s32.totalorder %s274, %s275
      %p284 = scmp.eq.s32.totalorder %s33, 0
      %p285 = por %p283, %p284
      %p286 = scmp.ne.s32.totalorder %s274, %s275
      %p287 = scmp.eq.s32.totalorder %s34, 1
      %p288 = por %p286, %p287
      %p290 = scmp.ne.s32.totalorder %s275, %s289
      %p291 = scmp.eq.s32.totalorder %s34, 0
      %p292 = por %p290, %p291
      %s294 = sadd.s32 %s293, 1
      %p297 = scmp.eq.s32.totalorder %s28, 1
      %p298 = scmp.ne.s32.totalorder %s293, %s295
      %p299 = scmp.eq.s32.totalorder %s28, 0
      %p300 = por %p298, %p299
      %p301 = scmp.ne.s32.totalorder %s293, %s295
      %p302 = scmp.eq.s32.totalorder %s33, 1
      %p303 = por %p301, %p302
      %p304 = scmp.ne.s32.totalorder %s295, %s296
      %p305 = scmp.eq.s32.totalorder %s33, 0
      %p306 = por %p304, %p305
      %p307 = scmp.ne.s32.totalorder %s295, %s296
      %p308 = scmp.eq.s32.totalorder %s34, 1
      %p309 = por %p307, %p308
      %p311 = scmp.ne.s32.totalorder %s296, %s310
      %p312 = scmp.eq.s32.totalorder %s34, 0
      %p313 = por %p311, %p312
      %s315 = sadd.s32 %s314, 1
      %p318 = scmp.eq.s32.totalorder %s28, 1
      %p319 = scmp.ne.s32.totalorder %s314, %s316
      %p320 = scmp.eq.s32.totalorder %s28, 0
      %p321 = por %p319, %p320
      %p322 = scmp.ne.s32.totalorder %s314, %s316
      %p323 = scmp.eq.s32.totalorder %s33, 1
      %p324 = por %p322, %p323
      %p325 = scmp.ne.s32.totalorder %s316, %s317
      %p326 = scmp.eq.s32.totalorder %s33, 0
      %p327 = por %p325, %p326
      %p328 = scmp.ne.s32.totalorder %s316, %s317
      %p329 = scmp.eq.s32.totalorder %s34, 1
      %p330 = por %p328, %p329
      %p332 = scmp.ne.s32.totalorder %s317, %s331
      %p333 = scmp.eq.s32.totalorder %s34, 0
      %p334 = por %p332, %p333
      %s336 = sadd.s32 %s335, 1
      %p339 = scmp.eq.s32.totalorder %s28, 1
      %p340 = scmp.ne.s32.totalorder %s335, %s337
      %p341 = scmp.eq.s32.totalorder %s28, 0
      %p342 = por %p340, %p341
      %p343 = scmp.ne.s32.totalorder %s335, %s337
      %p344 = scmp.eq.s32.totalorder %s33, 1
      %p345 = por %p343, %p344
      %p346 = scmp.ne.s32.totalorder %s337, %s338
      %p347 = scmp.eq.s32.totalorder %s33, 0
      %p348 = por %p346, %p347
      %p349 = scmp.ne.s32.totalorder %s337, %s338
      %p350 = scmp.eq.s32.totalorder %s34, 1
      %p351 = por %p349, %p350
      %p353 = scmp.ne.s32.totalorder %s338, %s352
      %p354 = scmp.eq.s32.totalorder %s34, 0
      %p355 = por %p353, %p354
      %s357 = sadd.s32 %s356, 1
      %p360 = scmp.eq.s32.totalorder %s28, 1
      %p361 = scmp.ne.s32.totalorder %s356, %s358
      %p362 = scmp.eq.s32.totalorder %s28, 0
      %p363 = por %p361, %p362
      %p364 = scmp.ne.s32.totalorder %s356, %s358
      %p365 = scmp.eq.s32.totalorder %s33, 1
      %p366 = por %p364, %p365
      %p367 = scmp.ne.s32.totalorder %s358, %s359
      %p368 = scmp.eq.s32.totalorder %s33, 0
      %p369 = por %p367, %p368
      %p370 = scmp.ne.s32.totalorder %s358, %s359
      %p371 = scmp.eq.s32.totalorder %s34, 1
      %p372 = por %p370, %p371
      %p374 = scmp.ne.s32.totalorder %s359, %s373
      %p375 = scmp.eq.s32.totalorder %s34, 0
      %p376 = por %p374, %p375
      %s378 = sadd.s32 %s377, 1
      %p381 = scmp.eq.s32.totalorder %s28, 1
      %p382 = scmp.ne.s32.totalorder %s377, %s379
      %p383 = scmp.eq.s32.totalorder %s28, 0
      %p384 = por %p382, %p383
      %p385 = scmp.ne.s32.totalorder %s377, %s379
      %p386 = scmp.eq.s32.totalorder %s33, 1
      %p387 = por %p385, %p386
      %p388 = scmp.ne.s32.totalorder %s379, %s380
      %p389 = scmp.eq.s32.totalorder %s33, 0
      %p390 = por %p388, %p389
      %p391 = scmp.ne.s32.totalorder %s379, %s380
      %p392 = scmp.eq.s32.totalorder %s34, 1
      %p393 = por %p391, %p392
      %p395 = scmp.ne.s32.totalorder %s380, %s394
      %p396 = scmp.eq.s32.totalorder %s34, 0
      %p397 = por %p395, %p396
      %s399 = sadd.s32 %s398, 1
      %p402 = scmp.eq.s32.totalorder %s28, 1
      %p403 = scmp.ne.s32.totalorder %s398, %s400
      %p404 = scmp.eq.s32.totalorder %s28, 0
      %p405 = por %p403, %p404
      %p406 = scmp.ne.s32.totalorder %s398, %s400
      %p407 = scmp.eq.s32.totalorder %s33, 1
      %p408 = por %p406, %p407
      %p409 = scmp.ne.s32.totalorder %s400, %s401
      %p410 = scmp.eq.s32.totalorder %s33, 0
      %p411 = por %p409, %p410
      %p412 = scmp.ne.s32.totalorder %s400, %s401
      %p413 = scmp.eq.s32.totalorder %s34, 1
      %p414 = por %p412, %p413
      %p416 = scmp.ne.s32.totalorder %s401, %s415
      %p417 = scmp.eq.s32.totalorder %s34, 0
      %p418 = por %p416, %p417
      %s420 = sadd.s32 %s419, 1
      %p423 = scmp.eq.s32.totalorder %s28, 1
      %p424 = scmp.ne.s32.totalorder %s419, %s421
      %p425 = scmp.eq.s32.totalorder %s28, 0
      %p426 = por %p424, %p425
      %p427 = scmp.ne.s32.totalorder %s419, %s421
      %p428 = scmp.eq.s32.totalorder %s33, 1
      %p429 = por %p427, %p428
      %p430 = scmp.ne.s32.totalorder %s421, %s422
      %p431 = scmp.eq.s32.totalorder %s33, 0
      %p432 = por %p430, %p431
      %p433 = scmp.ne.s32.totalorder %s421, %s422
      %p434 = scmp.eq.s32.totalorder %s34, 1
      %p435 = por %p433, %p434
      %p437 = scmp.ne.s32.totalorder %s422, %s436
      %p438 = scmp.eq.s32.totalorder %s34, 0
      %p439 = por %p437, %p438
      %s440 = ssub.s32 %s28, %s35
      %p441 = scmp.eq.s32.totalorder %s440, 0
      %s443 = sadd.s32 %s442, 1
      %s444 = scalar_select %p441, %s442, %s443
      %p447 = pneg %p441
      %p448 = scmp.eq.s32.totalorder %s28, 1
      %p449 = por %p447, %p448
      %p450 = scmp.ne.s32.totalorder %s442, %s445
      %p451 = scmp.eq.s32.totalorder %s28, 0
      %p452 = por %p450, %p451
      %p453 = scmp.ne.s32.totalorder %s442, %s445
      %p454 = scmp.eq.s32.totalorder %s33, 1
      %p455 = por %p453, %p454
      %p456 = scmp.ne.s32.totalorder %s445, %s446
      %p457 = scmp.eq.s32.totalorder %s33, 0
      %p458 = por %p456, %p457
      %p459 = scmp.ne.s32.totalorder %s445, %s446
      %p460 = scmp.eq.s32.totalorder %s34, 1
      %p461 = por %p459, %p460
      %p463 = scmp.ne.s32.totalorder %s446, %s462
      %p464 = scmp.eq.s32.totalorder %s34, 0
      %p465 = por %p463, %p464
      %p466 = scmp.le.s32.totalorder 1, %s28
      %p467 = scmp.lt.s32.totalorder %s28, 3
      %p468 = pnand %p466, %p467
      %p469 = pneg %p468
      // Predicated region
      $region9: #{image_encoder_forward.1} parent=5 // pred_check
        _
      $region10: #{image_encoder_forward.1} parent=5 // pred_check_branch
        %471 = sbr.rel (%p468) target = $region12
      $region11: #{image_encoder_forward.1} parent=5 // pred_region
        %s472 = ssub.s32 %s28, 1
        // Predicated region
        $region13: #{image_encoder_forward.1} parent=11 // pred_check
          %p473 = pneg %p75
        $region14: #{image_encoder_forward.1} parent=11 // pred_check_branch
          %475 = sbr.rel (%p473) target = $region16
        $region15: #{image_encoder_forward.1} parent=11 // pred_region
          _
        $region16: #{image_encoder_forward.1} parent=11 // pred_fallthru
          _
        // Predicated region
        $region17: #{image_encoder_forward.1} parent=11 // pred_check
          %p476 = pneg %p96
        $region18: #{image_encoder_forward.1} parent=11 // pred_check_branch
          %478 = sbr.rel (%p476) target = $region20
        $region19: #{image_encoder_forward.1} parent=11 // pred_region
          _
        $region20: #{image_encoder_forward.1} parent=11 // pred_fallthru
          _
        // Predicated region
        $region21: #{image_encoder_forward.1} parent=11 // pred_check
          %p479 = pneg %p117
        $region22: #{image_encoder_forward.1} parent=11 // pred_check_branch
          %481 = sbr.rel (%p479) target = $region24
        $region23: #{image_encoder_forward.1} parent=11 // pred_region
          _
        $region24: #{image_encoder_forward.1} parent=11 // pred_fallthru
          _
        // Predicated region
        $region25: #{image_encoder_forward.1} parent=11 // pred_check
          %p482 = pneg %p138
        $region26: #{image_encoder_forward.1} parent=11 // pred_check_branch
          %484 = sbr.rel (%p482) target = $region28
        $region27: #{image_encoder_forward.1} parent=11 // pred_region
          _
        $region28: #{image_encoder_forward.1} parent=11 // pred_fallthru
          _
        // Predicated region
        $region29: #{image_encoder_forward.1} parent=11 // pred_check
          %p485 = pneg %p159
        $region30: #{image_encoder_forward.1} parent=11 // pred_check_branch
          %487 = sbr.rel (%p485) target = $region32
        $region31: #{image_encoder_forward.1} parent=11 // pred_region
          _
        $region32: #{image_encoder_forward.1} parent=11 // pred_fallthru
          _
        // Predicated region
        $region33: #{image_encoder_forward.1} parent=11 // pred_check
          %p488 = pneg %p180
        $region34: #{image_encoder_forward.1} parent=11 // pred_check_branch
          %490 = sbr.rel (%p488) target = $region36
        $region35: #{image_encoder_forward.1} parent=11 // pred_region
          _
        $region36: #{image_encoder_forward.1} parent=11 // pred_fallthru
          _
        // Predicated region
        $region37: #{image_encoder_forward.1} parent=11 // pred_check
          %p491 = pneg %p201
        $region38: #{image_encoder_forward.1} parent=11 // pred_check_branch
          %493 = sbr.rel (%p491) target = $region40
        $region39: #{image_encoder_forward.1} parent=11 // pred_region
          _
        $region40: #{image_encoder_forward.1} parent=11 // pred_fallthru
          _
        // Predicated region
        $region41: #{image_encoder_forward.1} parent=11 // pred_check
          %p494 = pneg %p222
        $region42: #{image_encoder_forward.1} parent=11 // pred_check_branch
          %496 = sbr.rel (%p494) target = $region44
        $region43: #{image_encoder_forward.1} parent=11 // pred_region
          _
        $region44: #{image_encoder_forward.1} parent=11 // pred_fallthru
          _
        // Predicated region
        $region45: #{image_encoder_forward.1} parent=11 // pred_check
          %p497 = pneg %p243
        $region46: #{image_encoder_forward.1} parent=11 // pred_check_branch
          %499 = sbr.rel (%p497) target = $region48
        $region47: #{image_encoder_forward.1} parent=11 // pred_region
          _
        $region48: #{image_encoder_forward.1} parent=11 // pred_fallthru
          _
        // Predicated region
        $region49: #{image_encoder_forward.1} parent=11 // pred_check
          %p500 = pneg %p264
        $region50: #{image_encoder_forward.1} parent=11 // pred_check_branch
          %502 = sbr.rel (%p500) target = $region52
        $region51: #{image_encoder_forward.1} parent=11 // pred_region
          _
        $region52: #{image_encoder_forward.1} parent=11 // pred_fallthru
          _
        // Predicated region
        $region53: #{image_encoder_forward.1} parent=11 // pred_check
          %p503 = pneg %p285
        $region54: #{image_encoder_forward.1} parent=11 // pred_check_branch
          %505 = sbr.rel (%p503) target = $region56
        $region55: #{image_encoder_forward.1} parent=11 // pred_region
          _
        $region56: #{image_encoder_forward.1} parent=11 // pred_fallthru
          _
        // Predicated region
        $region57: #{image_encoder_forward.1} parent=11 // pred_check
          %p506 = pneg %p306
        $region58: #{image_encoder_forward.1} parent=11 // pred_check_branch
          %508 = sbr.rel (%p506) target = $region60
        $region59: #{image_encoder_forward.1} parent=11 // pred_region
          _
        $region60: #{image_encoder_forward.1} parent=11 // pred_fallthru
          _
        // Predicated region
        $region61: #{image_encoder_forward.1} parent=11 // pred_check
          %p509 = pneg %p327
        $region62: #{image_encoder_forward.1} parent=11 // pred_check_branch
          %511 = sbr.rel (%p509) target = $region64
        $region63: #{image_encoder_forward.1} parent=11 // pred_region
          _
        $region64: #{image_encoder_forward.1} parent=11 // pred_fallthru
          _
        // Predicated region
        $region65: #{image_encoder_forward.1} parent=11 // pred_check
          %p512 = pneg %p348
        $region66: #{image_encoder_forward.1} parent=11 // pred_check_branch
          %514 = sbr.rel (%p512) target = $region68
        $region67: #{image_encoder_forward.1} parent=11 // pred_region
          _
        $region68: #{image_encoder_forward.1} parent=11 // pred_fallthru
          _
        // Predicated region
        $region69: #{image_encoder_forward.1} parent=11 // pred_check
          %p515 = pneg %p369
        $region70: #{image_encoder_forward.1} parent=11 // pred_check_branch
          %517 = sbr.rel (%p515) target = $region72
        $region71: #{image_encoder_forward.1} parent=11 // pred_region
          _
        $region72: #{image_encoder_forward.1} parent=11 // pred_fallthru
          _
        // Predicated region
        $region73: #{image_encoder_forward.1} parent=11 // pred_check
          %p518 = pneg %p390
        $region74: #{image_encoder_forward.1} parent=11 // pred_check_branch
          %520 = sbr.rel (%p518) target = $region76
        $region75: #{image_encoder_forward.1} parent=11 // pred_region
          _
        $region76: #{image_encoder_forward.1} parent=11 // pred_fallthru
          _
        // Predicated region
        $region77: #{image_encoder_forward.1} parent=11 // pred_check
          %p521 = pneg %p411
        $region78: #{image_encoder_forward.1} parent=11 // pred_check_branch
          %523 = sbr.rel (%p521) target = $region80
        $region79: #{image_encoder_forward.1} parent=11 // pred_region
          _
        $region80: #{image_encoder_forward.1} parent=11 // pred_fallthru
          _
        // Predicated region
        $region81: #{image_encoder_forward.1} parent=11 // pred_check
          %p524 = pneg %p432
        $region82: #{image_encoder_forward.1} parent=11 // pred_check_branch
          %526 = sbr.rel (%p524) target = $region84
        $region83: #{image_encoder_forward.1} parent=11 // pred_region
          _
        $region84: #{image_encoder_forward.1} parent=11 // pred_fallthru
          _
      $region12: #{image_encoder_forward.1} parent=5 // pred_fallthru
        _
      %p527 = scmp.lt.s32.totalorder %s28, 2
      // Predicated region
      $region85: #{image_encoder_forward.1} parent=5 // pred_check
        %p528 = pneg %p527
      $region86: #{image_encoder_forward.1} parent=5 // pred_check_branch
        %530 = sbr.rel (%p528) target = $region88
      $region87: #{image_encoder_forward.1} parent=5 // pred_region
        // Predicated region
        $region89: #{image_encoder_forward.1} parent=87 // pred_check
          %p531 = pneg %p48
        $region90: #{image_encoder_forward.1} parent=87 // pred_check_branch
          %533 = sbr.rel (%p531) target = $region92
        $region91: #{image_encoder_forward.1} parent=87 // pred_region
          %p534 = scmp.lt.s32.totalorder %s28, 1
          %s535 = scalar_select %p534, %s28, 1
          %s536 = smul.addr %s535, 2
          %s537 = smul.addr %s536, 8
          %s538 = scalar_lea.vmem %s0, %s537
        $region92: #{image_encoder_forward.1} parent=87 // pred_fallthru
          _
      $region88: #{image_encoder_forward.1} parent=5 // pred_fallthru
        _
      %p539 = scmp.le.s32.totalorder 1, %s28
      %p540 = scmp.lt.s32.totalorder %s28, 3
      %p541 = pnand %p539, %p540
      %p542 = pneg %p541
      // Predicated region
      $region93: #{image_encoder_forward.1} parent=5 // pred_check
        _
      $region94: #{image_encoder_forward.1} parent=5 // pred_check_branch
        %544 = sbr.rel (%p541) target = $region96
      $region95: #{image_encoder_forward.1} parent=5 // pred_region
        %s545 = ssub.s32 %s28, 1
        %p546 = scmp.lt.s32.totalorder %s33, 1
        %s547 = scalar_select %p546, %s33, 1
        %s548 = smul.addr %s547, 2
        %s549 = smul.addr %s548, 8
        %s550 = scalar_lea.vmem %s0, %s549
        %p551 = pneg %p54
        %p552 = pneg %p51
        %p553 = pneg %p75
        %p554 = pneg %p72
        %p555 = pneg %p96
        %p556 = pneg %p93
        %p557 = pneg %p117
        %p558 = pneg %p114
        %p559 = pneg %p138
        %p560 = pneg %p135
        %p561 = pneg %p159
        %p562 = pneg %p156
        %p563 = pneg %p180
        %p564 = pneg %p177
        %p565 = pneg %p201
        %p566 = pneg %p198
        %p567 = pneg %p222
        %p568 = pneg %p219
        %p569 = pneg %p243
        %p570 = pneg %p240
        %p571 = pneg %p264
        %p572 = pneg %p261
        %p573 = pneg %p285
        %p574 = pneg %p282
        %p575 = pneg %p306
        %p576 = pneg %p303
        %p577 = pneg %p327
        %p578 = pneg %p324
        %p579 = pneg %p348
        %p580 = pneg %p345
        %p581 = pneg %p369
        %p582 = pneg %p366
        %p583 = pneg %p390
        %p584 = pneg %p387
        %p585 = pneg %p411
        %p586 = pneg %p408
        %p587 = pneg %p432
        %p588 = pneg %p429
        %p589 = pneg %p458
        %p590 = pneg %p455
        %s591 = sand.u32 %s445, 1
        %s592 = scalar_lea.sflag [#allocation3], %s591
        %s593 = sand.u32 %s445, 1
        %s594 = scalar_lea.vmem [#allocation2], %s593
        %p595 = scmp.lt.s32.totalorder %s33, 1
        %s596 = scalar_select %p595, %s33, 1
        %s597 = smul.addr %s596, 2
        %s598 = smul.addr %s597, 8
        %s599 = scalar_lea.vmem %s0, %s598
        %v600 = vld [vmem:[%s599] sm:$0x1f]
        %v601 = vld [vmem:[%s599 + $0x8] sm:$0x1f]
        %v602 = vld [vmem:[%s1] sm:$0xff]
        %v603 = vld [vmem:[%s1 + $0x8] sm:$0xff]
        %v604 = vld [vmem:[%s1 + $0x10] sm:$0xff]
        %v605 = vld [vmem:[%s1 + $0x18] sm:$0xff]
        %v606 = vld [vmem:[%s1 + $0x20] sm:$0xff]
        %v607 = vld [vmem:[%s1 + $0x28] sm:$0xff]
        %v608 = vld [vmem:[%s1 + $0x30] sm:$0xff]
        %v609 = vld [vmem:[%s1 + $0x38] sm:$0xff]
        %v610 = vld [vmem:[%s1 + $0x40] sm:$0xff]
        %v611 = vld [vmem:[%s1 + $0x48] sm:$0xff]
        %v612 = vld [vmem:[%s1 + $0x50] sm:$0xff]
        %v613 = vld [vmem:[%s1 + $0x58] sm:$0xff]
        %v614 = vld [vmem:[%s1 + $0x60] sm:$0xff]
        %v615 = vld [vmem:[%s1 + $0x68] sm:$0xff]
        %v616 = vld [vmem:[%s1 + $0x70] sm:$0xff]
        %v617 = vld [vmem:[%s1 + $0x78] sm:$0xff]
        %v618 = vld [vmem:[%s1 + $0x80] sm:$0xff]
        %v619 = vld [vmem:[%s1 + $0x88] sm:$0xff]
        %v620 = vld [vmem:[%s1 + $0x90] sm:$0xff]
        %v621 = vld [vmem:[%s1 + $0x98] sm:$0xff]
        %v622 = vld [vmem:[%s1 + $0xa0] sm:$0xff]
        %v623 = vld [vmem:[%s1 + $0xa8] sm:$0xff]
        %v624 = vld [vmem:[%s1 + $0xb0] sm:$0xff]
        %v625 = vld [vmem:[%s1 + $0xb8] sm:$0xff]
        %v626 = vld [vmem:[%s2] sm:$0x1f]
        %vm627 = vcmask 523264
        %v629 = vsel %vm627, %v601, 0
        %631 = vmatprep.subr.mxu0 0.0
        %632 = vmatpush1.msra.mxu0 %v602
        %633 = vmatprep.subr.mxu0 0.0
        %634 = vmatpush1.msra.mxu0 %v603
        %635 = vmatprep.subr.mxu0 0.0
        %636 = vmatpush1.msra.mxu0 %v604
        %637 = vmatprep.subr.mxu0 0.0
        %638 = vmatpush1.msra.mxu0 %v605
        %639 = vmatprep.subr.mxu0 0.0
        %640 = vmatpush1.msra.mxu0 %v606
        %641 = vmatprep.subr.mxu0 0.0
        %642 = vmatpush1.msra.mxu0 %v607
        %643 = vmatprep.subr.mxu0 0.0
        %644 = vmatpush1.msra.mxu0 %v608
        %645 = vmatprep.subr.mxu0 0.0
        %646 = vmatpush1.msra.mxu0 %v609
        %647 = vmatprep.subr.mxu0 0.0
        %648 = vmatpush1.msra.mxu0 %v610
        %649 = vmatprep.subr.mxu0 0.0
        %650 = vmatpush1.msra.mxu0 %v611
        %651 = vmatprep.subr.mxu0 0.0
        %652 = vmatpush1.msra.mxu0 %v612
        %653 = vmatprep.subr.mxu0 0.0
        %654 = vmatpush1.msra.mxu0 %v613
        %655 = vmatprep.subr.mxu0 0.0
        %656 = vmatpush1.msra.mxu0 %v614
        %657 = vmatprep.subr.mxu0 0.0
        %658 = vmatpush1.msra.mxu0 %v615
        %659 = vmatprep.subr.mxu0 0.0
        %660 = vmatpush1.msra.mxu0 %v616
        %661 = vmatprep.subr.mxu0 0.0
        %662 = vmatpush1.msra.mxu0 %v617
        %663 = vmatprep.subr.mxu0 0.0
        %664 = vmatpush1.msra.mxu0 %v618
        %665 = vmatprep.subr.mxu0 0.0
        %666 = vmatpush1.msra.mxu0 %v619
        %667 = vmatprep.subr.mxu0 0.0
        %668 = vmatpush1.msra.mxu0 %v620
        %669 = vmatprep.subr.mxu0 0.0
        %670 = vmatpush1.msra.mxu0 %v621
        %671 = vmatprep.subr.mxu0 0.0
        %672 = vmatpush1.msra.mxu0 %v622
        %673 = vmatprep.subr.mxu0 0.0
        %674 = vmatpush1.msra.mxu0 %v623
        %675 = vmatprep.subr.mxu0 0.0
        %676 = vmatpush1.msra.mxu0 %v624
        %677 = vmatprep.subr.mxu0 0.0
        %678 = vmatpush1.msra.mxu0 %v625
        %679 = vmatprep.subr.mxu0 0.0
        %680 = vmatpush1.msra.mxu0 0.0
        %681 = vmatprep.subr.mxu0 0.0
        %682 = vmatpush1.msra.mxu0 0.0
        %683 = vmatprep.subr.mxu0 0.0
        %684 = vmatpush1.msra.mxu0 0.0
        %685 = vmatprep.subr.mxu0 0.0
        %686 = vmatpush1.msra.mxu0 0.0
        %687 = vmatprep.subr.mxu0 0.0
        %688 = vmatpush1.msra.mxu0 0.0
        %689 = vmatprep.subr.mxu0 0.0
        %690 = vmatpush1.msra.mxu0 0.0
        %691 = vmatprep.subr.mxu0 0.0
        %692 = vmatpush1.msra.mxu0 0.0
        %693 = vmatprep.subr.mxu0 0.0
        %694 = vmatpush1.msra.mxu0 0.0
        %695 = vmatprep.mubr.f32.mxu0 %v629
        %696 = vmatmul.mubr.f32.gmra.mrb[0].mxu0 %v600
        %v697 = vpop.f32.mrb[0].mxu0
        %v698 = vadd.f32 %v626, %v697
        %v699 = vpop.f32.mrb[0].mxu0
        %700 = vdwg.mxu0
        %v701 = vld [vmem:[%s3] sm:$0x1]
        %v702 = vld [vmem:[%s4] sm:$0x1]
        %vm703 = vcmask 258048
        %v704 = vsel %vm703, %v698, 0.0
        %705 = vadd.xlane.f32.xlu0 %v704
        %v706 = vpop.xlane.xlu0 %705
        %v707 = vrcp.pop 32.0
        %v708 = vmul.f32 %v706, %v707
        %v709 = vsub.f32 %v698, %v708
        %v710 = vmul.f32 %v709, %v709
        %v711 = vsel %vm703, %v710, 0.0
        %712 = vadd.xlane.f32.xlu0 %v711
        %v713 = vpop.xlane.xlu0 %712
        %v714 = vmul.f32 %v713, %v707
        %v715 = vadd.f32 %v714, 1e-12
        %v716 = vrsqrt.pop %v715
        %v717 = vmul.f32 %v709, %v716
        %v719 = vlaneseq
        %v720 = vshrl.u32 %v719, 7
        %v721 = vsub.s32 0, %v720
        %v722 = vrot.slane %v701, %v721
        %v724 = vmul.f32 %v717, %v722
        %v726 = vlaneseq
        %v727 = vshrl.u32 %v726, 7
        %v728 = vsub.s32 0, %v727
        %v729 = vrot.slane %v702, %v728
        %v731 = vadd.f32 %v724, %v729
        %v732 = vld [vmem:[%s5] sm:$0xff]
        %v733 = vld [vmem:[%s5 + $0x8] sm:$0xff]
        %v734 = vld [vmem:[%s5 + $0x10] sm:$0xff]
        %v735 = vld [vmem:[%s5 + $0x18] sm:$0xff]
        %v736 = vld [vmem:[%s5 + $0x20] sm:$0xff]
        %v737 = vld [vmem:[%s5 + $0x28] sm:$0xff]
        %v738 = vld [vmem:[%s5 + $0x30] sm:$0xff]
        %v739 = vld [vmem:[%s5 + $0x38] sm:$0xff]
        %v740 = vld [vmem:[%s6] sm:$0x1]
        %v741 = vld [vmem:[%s6 + $0x1] sm:$0x1]
        %v744 = vlaneseq
        %v745 = vshrl.u32 %v744, 7
        %v746 = vsub.s32 0, %v745
        %v747 = vrot.slane %v740, %v746
        %v748 = vlaneseq
        %v749 = vshrl.u32 %v748, 7
        %v750 = vsub.s32 0, %v749
        %v751 = vrot.slane %v741, %v750
        %vm754 = vcmask 261120
        %v756 = vsel %vm754, %v731, 0
        %758 = vmatprep.subr.mxu0 0.0
        %759 = vmatpush1.msra.mxu0 %v732
        %760 = vmatprep.subr.mxu0 0.0
        %761 = vmatpush1.msra.mxu0 %v733
        %762 = vmatprep.subr.mxu0 0.0
        %763 = vmatpush1.msra.mxu0 %v734
        %764 = vmatprep.subr.mxu0 0.0
        %765 = vmatpush1.msra.mxu0 %v735
        %766 = vmatprep.subr.mxu0 0.0
        %767 = vmatpush1.msra.mxu0 0.0
        %768 = vmatprep.subr.mxu0 0.0
        %769 = vmatpush1.msra.mxu0 0.0
        %770 = vmatprep.subr.mxu0 0.0
        %771 = vmatpush1.msra.mxu0 0.0
        %772 = vmatprep.subr.mxu0 0.0
        %773 = vmatpush1.msra.mxu0 0.0
        %774 = vmatprep.subr.mxu0 0.0
        %775 = vmatpush1.msra.mxu0 0.0
        %776 = vmatprep.subr.mxu0 0.0
        %777 = vmatpush1.msra.mxu0 0.0
        %778 = vmatprep.subr.mxu0 0.0
        %779 = vmatpush1.msra.mxu0 0.0
        %780 = vmatprep.subr.mxu0 0.0
        %781 = vmatpush1.msra.mxu0 0.0
        %782 = vmatprep.subr.mxu0 0.0
        %783 = vmatpush1.msra.mxu0 0.0
        %784 = vmatprep.subr.mxu0 0.0
        %785 = vmatpush1.msra.mxu0 0.0
        %786 = vmatprep.subr.mxu0 0.0
        %787 = vmatpush1.msra.mxu0 0.0
        %788 = vmatprep.subr.mxu0 0.0
        %789 = vmatpush1.msra.mxu0 0.0
        %790 = vmatprep.subr.mxu0 0.0
        %791 = vmatpush1.msra.mxu0 0.0
        %792 = vmatprep.subr.mxu0 0.0
        %793 = vmatpush1.msra.mxu0 0.0
        %794 = vmatprep.subr.mxu0 0.0
        %795 = vmatpush1.msra.mxu0 0.0
        %796 = vmatprep.subr.mxu0 0.0
        %797 = vmatpush1.msra.mxu0 0.0
        %798 = vmatprep.subr.mxu0 0.0
        %799 = vmatpush1.msra.mxu0 0.0
        %800 = vmatprep.subr.mxu0 0.0
        %801 = vmatpush1.msra.mxu0 0.0
        %802 = vmatprep.subr.mxu0 0.0
        %803 = vmatpush1.msra.mxu0 0.0
        %804 = vmatprep.subr.mxu0 0.0
        %805 = vmatpush1.msra.mxu0 0.0
        %806 = vmatprep.subr.mxu0 0.0
        %807 = vmatpush1.msra.mxu0 0.0
        %808 = vmatprep.subr.mxu0 0.0
        %809 = vmatpush1.msra.mxu0 0.0
        %810 = vmatprep.subr.mxu0 0.0
        %811 = vmatpush1.msra.mxu0 0.0
        %812 = vmatprep.subr.mxu0 0.0
        %813 = vmatpush1.msra.mxu0 0.0
        %814 = vmatprep.subr.mxu0 0.0
        %815 = vmatpush1.msra.mxu0 0.0
        %816 = vmatprep.subr.mxu0 0.0
        %817 = vmatpush1.msra.mxu0 0.0
        %818 = vmatprep.subr.mxu0 0.0
        %819 = vmatpush1.msra.mxu0 0.0
        %820 = vmatprep.subr.mxu0 0.0
        %821 = vmatpush1.msra.mxu0 0.0
        %822 = vmatprep.mubr.f32.mxu0 0.0
        %823 = vmatmul.mubr.f32.gmra.mrb[0].mxu0 %v756
        %v824 = vpop.f32.mrb[0].mxu0
        %v825 = vadd.f32 %v747, %v824
        %v826 = vpop.f32.mrb[0].mxu0
        %827 = vdwg.mxu0
        %828 = vmatprep.subr.mxu0 0.0
        %829 = vmatpush1.msra.mxu0 %v736
        %830 = vmatprep.subr.mxu0 0.0
        %831 = vmatpush1.msra.mxu0 %v737
        %832 = vmatprep.subr.mxu0 0.0
        %833 = vmatpush1.msra.mxu0 %v738
        %834 = vmatprep.subr.mxu0 0.0
        %835 = vmatpush1.msra.mxu0 %v739
        %836 = vmatprep.subr.mxu0 0.0
        %837 = vmatpush1.msra.mxu0 0.0
        %838 = vmatprep.subr.mxu0 0.0
        %839 = vmatpush1.msra.mxu0 0.0
        %840 = vmatprep.subr.mxu0 0.0
        %841 = vmatpush1.msra.mxu0 0.0
        %842 = vmatprep.subr.mxu0 0.0
        %843 = vmatpush1.msra.mxu0 0.0
        %844 = vmatprep.subr.mxu0 0.0
        %845 = vmatpush1.msra.mxu0 0.0
        %846 = vmatprep.subr.mxu0 0.0
        %847 = vmatpush1.msra.mxu0 0.0
        %848 = vmatprep.subr.mxu0 0.0
        %849 = vmatpush1.msra.mxu0 0.0
        %850 = vmatprep.subr.mxu0 0.0
        %851 = vmatpush1.msra.mxu0 0.0
        %852 = vmatprep.subr.mxu0 0.0
        %853 = vmatpush1.msra.mxu0 0.0
        %854 = vmatprep.subr.mxu0 0.0
        %855 = vmatpush1.msra.mxu0 0.0
        %856 = vmatprep.subr.mxu0 0.0
        %857 = vmatpush1.msra.mxu0 0.0
        %858 = vmatprep.subr.mxu0 0.0
        %859 = vmatpush1.msra.mxu0 0.0
        %860 = vmatprep.subr.mxu0 0.0
        %861 = vmatpush1.msra.mxu0 0.0
        %862 = vmatprep.subr.mxu0 0.0
        %863 = vmatpush1.msra.mxu0 0.0
        %864 = vmatprep.subr.mxu0 0.0
        %865 = vmatpush1.msra.mxu0 0.0
        %866 = vmatprep.subr.mxu0 0.0
        %867 = vmatpush1.msra.mxu0 0.0
        %868 = vmatprep.subr.mxu0 0.0
        %869 = vmatpush1.msra.mxu0 0.0
        %870 = vmatprep.subr.mxu0 0.0
        %871 = vmatpush1.msra.mxu0 0.0
        %872 = vmatprep.subr.mxu0 0.0
        %873 = vmatpush1.msra.mxu0 0.0
        %874 = vmatprep.subr.mxu0 0.0
        %875 = vmatpush1.msra.mxu0 0.0
        %876 = vmatprep.subr.mxu0 0.0
        %877 = vmatpush1.msra.mxu0 0.0
        %878 = vmatprep.subr.mxu0 0.0
        %879 = vmatpush1.msra.mxu0 0.0
        %880 = vmatprep.subr.mxu0 0.0
        %881 = vmatpush1.msra.mxu0 0.0
        %882 = vmatprep.subr.mxu0 0.0
        %883 = vmatpush1.msra.mxu0 0.0
        %884 = vmatprep.subr.mxu0 0.0
        %885 = vmatpush1.msra.mxu0 0.0
        %886 = vmatprep.subr.mxu0 0.0
        %887 = vmatpush1.msra.mxu0 0.0
        %888 = vmatprep.subr.mxu0 0.0
        %889 = vmatpush1.msra.mxu0 0.0
        %890 = vmatprep.subr.mxu0 0.0
        %891 = vmatpush1.msra.mxu0 0.0
        %892 = vmatprep.mubr.f32.mxu0 0.0
        %893 = vmatmul.mubr.f32.gmra.mrb[0].mxu0 %v756
        %v894 = vpop.f32.mrb[0].mxu0
        %v895 = vadd.f32 %v751, %v894
        %v896 = vpop.f32.mrb[0].mxu0
        %897 = vdwg.mxu0
        %899 = vrot.lane.b32.xlu0 %v825, 112
        %v900 = vpop.permute.xlu0 %899
        %vm901 = vcmask 130048
        %v902 = vsel %vm901, %v825, 0
        %v904 = vsel %vm901, %v900, 0
        %906 = vmatprep.subr.mxu0 0.0
        %907 = vmatpush1.xpose.msra.mxu0 %v904
        %908 = vmatprep.subr.mxu0 0.0
        %909 = vmatpush1.xpose.msra.mxu0 0.0
        %910 = vmatprep.subr.mxu0 0.0
        %911 = vmatpush1.xpose.msra.mxu0 0.0
        %912 = vmatprep.subr.mxu0 0.0
        %913 = vmatpush1.xpose.msra.mxu0 0.0
        %914 = vmatprep.subr.mxu0 0.0
        %915 = vmatpush1.xpose.msra.mxu0 0.0
        %916 = vmatprep.subr.mxu0 0.0
        %917 = vmatpush1.xpose.msra.mxu0 0.0
        %918 = vmatprep.subr.mxu0 0.0
        %919 = vmatpush1.xpose.msra.mxu0 0.0
        %920 = vmatprep.subr.mxu0 0.0
        %921 = vmatpush1.xpose.msra.mxu0 0.0
        %922 = vmatprep.subr.mxu0 0.0
        %923 = vmatpush1.xpose.msra.mxu0 0.0
        %924 = vmatprep.subr.mxu0 0.0
        %925 = vmatpush1.xpose.msra.mxu0 0.0
        %926 = vmatprep.subr.mxu0 0.0
        %927 = vmatpush1.xpose.msra.mxu0 0.0
        %928 = vmatprep.subr.mxu0 0.0
        %929 = vmatpush1.xpose.msra.mxu0 0.0
        %930 = vmatprep.subr.mxu0 0.0
        %931 = vmatpush1.xpose.msra.mxu0 0.0
        %932 = vmatprep.subr.mxu0 0.0
        %933 = vmatpush1.xpose.msra.mxu0 0.0
        %934 = vmatprep.subr.mxu0 0.0
        %935 = vmatpush1.xpose.msra.mxu0 0.0
        %936 = vmatprep.subr.mxu0 0.0
        %937 = vmatpush1.xpose.msra.mxu0 0.0
        %938 = vmatprep.subr.mxu0 0.0
        %939 = vmatpush1.xpose.msra.mxu0 0.0
        %940 = vmatprep.subr.mxu0 0.0
        %941 = vmatpush1.xpose.msra.mxu0 0.0
        %942 = vmatprep.subr.mxu0 0.0
        %943 = vmatpush1.xpose.msra.mxu0 0.0
        %944 = vmatprep.subr.mxu0 0.0
        %945 = vmatpush1.xpose.msra.mxu0 0.0
        %946 = vmatprep.subr.mxu0 0.0
        %947 = vmatpush1.xpose.msra.mxu0 0.0
        %948 = vmatprep.subr.mxu0 0.0
        %949 = vmatpush1.xpose.msra.mxu0 0.0
        %950 = vmatprep.subr.mxu0 0.0
        %951 = vmatpush1.xpose.msra.mxu0 0.0
        %952 = vmatprep.subr.mxu0 0.0
        %953 = vmatpush1.xpose.msra.mxu0 0.0
        %954 = vmatprep.subr.mxu0 0.0
        %955 = vmatpush1.xpose.msra.mxu0 0.0
        %956 = vmatprep.subr.mxu0 0.0
        %957 = vmatpush1.xpose.msra.mxu0 0.0
        %958 = vmatprep.subr.mxu0 0.0
        %959 = vmatpush1.xpose.msra.mxu0 0.0
        %960 = vmatprep.subr.mxu0 0.0
        %961 = vmatpush1.xpose.msra.mxu0 0.0
        %962 = vmatprep.subr.mxu0 0.0
        %963 = vmatpush1.xpose.msra.mxu0 0.0
        %964 = vmatprep.subr.mxu0 0.0
        %965 = vmatpush1.xpose.msra.mxu0 0.0
        %966 = vmatprep.subr.mxu0 0.0
        %967 = vmatpush1.xpose.msra.mxu0 0.0
        %968 = vmatprep.subr.mxu0 0.0
        %969 = vmatpush1.xpose.msra.mxu0 0.0
        %970 = vmatprep.mubr.f32.mxu0 0.0
        %971 = vmatmul.mubr.f32.gmra.mrb[0].mxu0 %v902
        %v972 = vpop.f32.mrb[0].mxu0
        %v973 = vadd.f32 0.0, %v972
        %v974 = vpop.f32.mrb[0].mxu0
        %975 = vdwg.mxu0
        %977 = vrot.lane.b32.xlu0 %v895, 112
        %v978 = vpop.permute.xlu0 %977
        %v979 = vsel %vm901, %v895, 0
        %v981 = vsel %vm901, %v978, 0
        %983 = vmatprep.subr.mxu0 0.0
        %984 = vmatpush1.xpose.msra.mxu0 %v981
        %985 = vmatprep.subr.mxu0 0.0
        %986 = vmatpush1.xpose.msra.mxu0 0.0
        %987 = vmatprep.subr.mxu0 0.0
        %988 = vmatpush1.xpose.msra.mxu0 0.0
        %989 = vmatprep.subr.mxu0 0.0
        %990 = vmatpush1.xpose.msra.mxu0 0.0
        %991 = vmatprep.subr.mxu0 0.0
        %992 = vmatpush1.xpose.msra.mxu0 0.0
        %993 = vmatprep.subr.mxu0 0.0
        %994 = vmatpush1.xpose.msra.mxu0 0.0
        %995 = vmatprep.subr.mxu0 0.0
        %996 = vmatpush1.xpose.msra.mxu0 0.0
        %997 = vmatprep.subr.mxu0 0.0
        %998 = vmatpush1.xpose.msra.mxu0 0.0
        %999 = vmatprep.subr.mxu0 0.0
        %1000 = vmatpush1.xpose.msra.mxu0 0.0
        %1001 = vmatprep.subr.mxu0 0.0
        %1002 = vmatpush1.xpose.msra.mxu0 0.0
        %1003 = vmatprep.subr.mxu0 0.0
        %1004 = vmatpush1.xpose.msra.mxu0 0.0
        %1005 = vmatprep.subr.mxu0 0.0
        %1006 = vmatpush1.xpose.msra.mxu0 0.0
        %1007 = vmatprep.subr.mxu0 0.0
        %1008 = vmatpush1.xpose.msra.mxu0 0.0
        %1009 = vmatprep.subr.mxu0 0.0
        %1010 = vmatpush1.xpose.msra.mxu0 0.0
        %1011 = vmatprep.subr.mxu0 0.0
        %1012 = vmatpush1.xpose.msra.mxu0 0.0
        %1013 = vmatprep.subr.mxu0 0.0
        %1014 = vmatpush1.xpose.msra.mxu0 0.0
        %1015 = vmatprep.subr.mxu0 0.0
        %1016 = vmatpush1.xpose.msra.mxu0 0.0
        %1017 = vmatprep.subr.mxu0 0.0
        %1018 = vmatpush1.xpose.msra.mxu0 0.0
        %1019 = vmatprep.subr.mxu0 0.0
        %1020 = vmatpush1.xpose.msra.mxu0 0.0
        %1021 = vmatprep.subr.mxu0 0.0
        %1022 = vmatpush1.xpose.msra.mxu0 0.0
        %1023 = vmatprep.subr.mxu0 0.0
        %1024 = vmatpush1.xpose.msra.mxu0 0.0
        %1025 = vmatprep.subr.mxu0 0.0
        %1026 = vmatpush1.xpose.msra.mxu0 0.0
        %1027 = vmatprep.subr.mxu0 0.0
        %1028 = vmatpush1.xpose.msra.mxu0 0.0
        %1029 = vmatprep.subr.mxu0 0.0
        %1030 = vmatpush1.xpose.msra.mxu0 0.0
        %1031 = vmatprep.subr.mxu0 0.0
        %1032 = vmatpush1.xpose.msra.mxu0 0.0
        %1033 = vmatprep.subr.mxu0 0.0
        %1034 = vmatpush1.xpose.msra.mxu0 0.0
        %1035 = vmatprep.subr.mxu0 0.0
        %1036 = vmatpush1.xpose.msra.mxu0 0.0
        %1037 = vmatprep.subr.mxu0 0.0
        %1038 = vmatpush1.xpose.msra.mxu0 0.0
        %1039 = vmatprep.subr.mxu0 0.0
        %1040 = vmatpush1.xpose.msra.mxu0 0.0
        %1041 = vmatprep.subr.mxu0 0.0
        %1042 = vmatpush1.xpose.msra.mxu0 0.0
        %1043 = vmatprep.subr.mxu0 0.0
        %1044 = vmatpush1.xpose.msra.mxu0 0.0
        %1045 = vmatprep.subr.mxu0 0.0
        %1046 = vmatpush1.xpose.msra.mxu0 0.0
        %1047 = vmatprep.mubr.f32.mxu0 0.0
        %1048 = vmatmul.mubr.f32.gmra.mrb[0].mxu0 %v979
        %v1049 = vpop.f32.mrb[0].mxu0
        %v1050 = vadd.f32 0.0, %v1049
        %v1051 = vpop.f32.mrb[0].mxu0
        %1052 = vdwg.mxu0
        %vm1053 = vcmask 36864
        %v1054 = vsel %vm1053, %v973, -inf
        %1055 = vmax.xlane.f32.xlu0 %v1054
        %v1056 = vpop.xlane.xlu0 %1055
        %v1057 = vsel %vm1053, %v1050, -inf
        %1058 = vmax.xlane.f32.xlu0 %v1057
        %v1059 = vpop.xlane.xlu0 %1058
        %v1060 = vsub.f32 %v973, %v1056
        %v1061 = vsub.f32 %v1050, %v1059
        %v1062 = vmul.f32 %v1060, 1.442695
        %v1063 = vpow.pop %v1062
        %v1064 = vmul.f32 %v1061, 1.442695
        %v1065 = vpow.pop %v1064
        %v1066 = vsel %vm1053, %v1063, 0.0
        %1067 = vadd.xlane.f32.xlu0 %v1066
        %v1068 = vpop.xlane.xlu0 %1067
        %v1069 = vsel %vm1053, %v1065, 0.0
        %1070 = vadd.xlane.f32.xlu0 %v1069
        %v1071 = vpop.xlane.xlu0 %1070
        %v1072 = vrcp.pop %v1068
        %v1073 = vrcp.pop %v1071
        %v1074 = vmul.f32 %v1063, %v1072
        %v1075 = vmul.f32 %v1065, %v1073
        %1076 = vrot.lane.b32.xlu0 %v825, 96
        %v1077 = vpop.permute.xlu0 %1076
        %vm1078 = vcmask 39936
        %v1080 = vsel %vm1078, %v1074, 0
        %vm1082 = vcmask 1044480
        %v1083 = vsel %vm1082, %v1077, 0
        %1085 = vmatprep.subr.mxu0 0.0
        %1086 = vmatpush1.msra.mxu0 %v1083
        %1087 = vmatprep.subr.mxu0 0.0
        %1088 = vmatpush1.msra.mxu0 0.0
        %1089 = vmatprep.subr.mxu0 0.0
        %1090 = vmatpush1.msra.mxu0 0.0
        %1091 = vmatprep.subr.mxu0 0.0
        %1092 = vmatpush1.msra.mxu0 0.0
        %1093 = vmatprep.subr.mxu0 0.0
        %1094 = vmatpush1.msra.mxu0 0.0
        %1095 = vmatprep.subr.mxu0 0.0
        %1096 = vmatpush1.msra.mxu0 0.0
        %1097 = vmatprep.subr.mxu0 0.0
        %1098 = vmatpush1.msra.mxu0 0.0
        %1099 = vmatprep.subr.mxu0 0.0
        %1100 = vmatpush1.msra.mxu0 0.0
        %1101 = vmatprep.subr.mxu0 0.0
        %1102 = vmatpush1.msra.mxu0 0.0
        %1103 = vmatprep.subr.mxu0 0.0
        %1104 = vmatpush1.msra.mxu0 0.0
        %1105 = vmatprep.subr.mxu0 0.0
        %1106 = vmatpush1.msra.mxu0 0.0
        %1107 = vmatprep.subr.mxu0 0.0
        %1108 = vmatpush1.msra.mxu0 0.0
        %1109 = vmatprep.subr.mxu0 0.0
        %1110 = vmatpush1.msra.mxu0 0.0
        %1111 = vmatprep.subr.mxu0 0.0
        %1112 = vmatpush1.msra.mxu0 0.0
        %1113 = vmatprep.subr.mxu0 0.0
        %1114 = vmatpush1.msra.mxu0 0.0
        %1115 = vmatprep.subr.mxu0 0.0
        %1116 = vmatpush1.msra.mxu0 0.0
        %1117 = vmatprep.subr.mxu0 0.0
        %1118 = vmatpush1.msra.mxu0 0.0
        %1119 = vmatprep.subr.mxu0 0.0
        %1120 = vmatpush1.msra.mxu0 0.0
        %1121 = vmatprep.subr.mxu0 0.0
        %1122 = vmatpush1.msra.mxu0 0.0
        %1123 = vmatprep.subr.mxu0 0.0
        %1124 = vmatpush1.msra.mxu0 0.0
        %1125 = vmatprep.subr.mxu0 0.0
        %1126 = vmatpush1.msra.mxu0 0.0
        %1127 = vmatprep.subr.mxu0 0.0
        %1128 = vmatpush1.msra.mxu0 0.0
        %1129 = vmatprep.subr.mxu0 0.0
        %1130 = vmatpush1.msra.mxu0 0.0
        %1131 = vmatprep.subr.mxu0 0.0
        %1132 = vmatpush1.msra.mxu0 0.0
        %1133 = vmatprep.subr.mxu0 0.0
        %1134 = vmatpush1.msra.mxu0 0.0
        %1135 = vmatprep.subr.mxu0 0.0
        %1136 = vmatpush1.msra.mxu0 0.0
        %1137 = vmatprep.subr.mxu0 0.0
        %1138 = vmatpush1.msra.mxu0 0.0
        %1139 = vmatprep.subr.mxu0 0.0
        %1140 = vmatpush1.msra.mxu0 0.0
        %1141 = vmatprep.subr.mxu0 0.0
        %1142 = vmatpush1.msra.mxu0 0.0
        %1143 = vmatprep.subr.mxu0 0.0
        %1144 = vmatpush1.msra.mxu0 0.0
        %1145 = vmatprep.subr.mxu0 0.0
        %1146 = vmatpush1.msra.mxu0 0.0
        %1147 = vmatprep.subr.mxu0 0.0
        %1148 = vmatpush1.msra.mxu0 0.0
        %1149 = vmatprep.mubr.f32.mxu0 0.0
        %1150 = vmatmul.mubr.f32.gmra.mrb[0].mxu0 %v1080
        %v1151 = vpop.f32.mrb[0].mxu0
        %v1152 = vadd.f32 0.0, %v1151
        %v1153 = vpop.f32.mrb[0].mxu0
        %1154 = vdwg.mxu0
        %1155 = vrot.lane.b32.xlu0 %v895, 96
        %v1156 = vpop.permute.xlu0 %1155
        %v1158 = vsel %vm1078, %v1075, 0
        %v1160 = vsel %vm1082, %v1156, 0
        %1162 = vmatprep.subr.mxu0 0.0
        %1163 = vmatpush1.msra.mxu0 %v1160
        %1164 = vmatprep.subr.mxu0 0.0
        %1165 = vmatpush1.msra.mxu0 0.0
        %1166 = vmatprep.subr.mxu0 0.0
        %1167 = vmatpush1.msra.mxu0 0.0
        %1168 = vmatprep.subr.mxu0 0.0
        %1169 = vmatpush1.msra.mxu0 0.0
        %1170 = vmatprep.subr.mxu0 0.0
        %1171 = vmatpush1.msra.mxu0 0.0
        %1172 = vmatprep.subr.mxu0 0.0
        %1173 = vmatpush1.msra.mxu0 0.0
        %1174 = vmatprep.subr.mxu0 0.0
        %1175 = vmatpush1.msra.mxu0 0.0
        %1176 = vmatprep.subr.mxu0 0.0
        %1177 = vmatpush1.msra.mxu0 0.0
        %1178 = vmatprep.subr.mxu0 0.0
        %1179 = vmatpush1.msra.mxu0 0.0
        %1180 = vmatprep.subr.mxu0 0.0
        %1181 = vmatpush1.msra.mxu0 0.0
        %1182 = vmatprep.subr.mxu0 0.0
        %1183 = vmatpush1.msra.mxu0 0.0
        %1184 = vmatprep.subr.mxu0 0.0
        %1185 = vmatpush1.msra.mxu0 0.0
        %1186 = vmatprep.subr.mxu0 0.0
        %1187 = vmatpush1.msra.mxu0 0.0
        %1188 = vmatprep.subr.mxu0 0.0
        %1189 = vmatpush1.msra.mxu0 0.0
        %1190 = vmatprep.subr.mxu0 0.0
        %1191 = vmatpush1.msra.mxu0 0.0
        %1192 = vmatprep.subr.mxu0 0.0
        %1193 = vmatpush1.msra.mxu0 0.0
        %1194 = vmatprep.subr.mxu0 0.0
        %1195 = vmatpush1.msra.mxu0 0.0
        %1196 = vmatprep.subr.mxu0 0.0
        %1197 = vmatpush1.msra.mxu0 0.0
        %1198 = vmatprep.subr.mxu0 0.0
        %1199 = vmatpush1.msra.mxu0 0.0
        %1200 = vmatprep.subr.mxu0 0.0
        %1201 = vmatpush1.msra.mxu0 0.0
        %1202 = vmatprep.subr.mxu0 0.0
        %1203 = vmatpush1.msra.mxu0 0.0
        %1204 = vmatprep.subr.mxu0 0.0
        %1205 = vmatpush1.msra.mxu0 0.0
        %1206 = vmatprep.subr.mxu0 0.0
        %1207 = vmatpush1.msra.mxu0 0.0
        %1208 = vmatprep.subr.mxu0 0.0
        %1209 = vmatpush1.msra.mxu0 0.0
        %1210 = vmatprep.subr.mxu0 0.0
        %1211 = vmatpush1.msra.mxu0 0.0
        %1212 = vmatprep.subr.mxu0 0.0
        %1213 = vmatpush1.msra.mxu0 0.0
        %1214 = vmatprep.subr.mxu0 0.0
        %1215 = vmatpush1.msra.mxu0 0.0
        %1216 = vmatprep.subr.mxu0 0.0
        %1217 = vmatpush1.msra.mxu0 0.0
        %1218 = vmatprep.subr.mxu0 0.0
        %1219 = vmatpush1.msra.mxu0 0.0
        %1220 = vmatprep.subr.mxu0 0.0
        %1221 = vmatpush1.msra.mxu0 0.0
        %1222 = vmatprep.subr.mxu0 0.0
        %1223 = vmatpush1.msra.mxu0 0.0
        %1224 = vmatprep.subr.mxu0 0.0
        %1225 = vmatpush1.msra.mxu0 0.0
        %1226 = vmatprep.mubr.f32.mxu0 0.0
        %1227 = vmatmul.mubr.f32.gmra.mrb[0].mxu0 %v1158
        %v1228 = vpop.f32.mrb[0].mxu0
        %v1229 = vadd.f32 0.0, %v1228
        %v1230 = vpop.f32.mrb[0].mxu0
        %1231 = vdwg.mxu0
        %v1232 = vld [vmem:[%s7] sm:$0xff]
        %v1233 = vld [vmem:[%s7 + $0x8] sm:$0xff]
        %v1234 = vld [vmem:[%s7 + $0x10] sm:$0xff]
        %v1235 = vld [vmem:[%s7 + $0x18] sm:$0xff]
        %v1237 = vsel %vm901, %v1152, 0
        %1239 = vmatprep.subr.mxu0 0.0
        %1240 = vmatpush1.msra.mxu0 %v1232
        %1241 = vmatprep.subr.mxu0 0.0
        %1242 = vmatpush1.msra.mxu0 %v1233
        %1243 = vmatprep.subr.mxu0 0.0
        %1244 = vmatpush1.msra.mxu0 0.0
        %1245 = vmatprep.subr.mxu0 0.0
        %1246 = vmatpush1.msra.mxu0 0.0
        %1247 = vmatprep.subr.mxu0 0.0
        %1248 = vmatpush1.msra.mxu0 0.0
        %1249 = vmatprep.subr.mxu0 0.0
        %1250 = vmatpush1.msra.mxu0 0.0
        %1251 = vmatprep.subr.mxu0 0.0
        %1252 = vmatpush1.msra.mxu0 0.0
        %1253 = vmatprep.subr.mxu0 0.0
        %1254 = vmatpush1.msra.mxu0 0.0
        %1255 = vmatprep.subr.mxu0 0.0
        %1256 = vmatpush1.msra.mxu0 0.0
        %1257 = vmatprep.subr.mxu0 0.0
        %1258 = vmatpush1.msra.mxu0 0.0
        %1259 = vmatprep.subr.mxu0 0.0
        %1260 = vmatpush1.msra.mxu0 0.0
        %1261 = vmatprep.subr.mxu0 0.0
        %1262 = vmatpush1.msra.mxu0 0.0
        %1263 = vmatprep.subr.mxu0 0.0
        %1264 = vmatpush1.msra.mxu0 0.0
        %1265 = vmatprep.subr.mxu0 0.0
        %1266 = vmatpush1.msra.mxu0 0.0
        %1267 = vmatprep.subr.mxu0 0.0
        %1268 = vmatpush1.msra.mxu0 0.0
        %1269 = vmatprep.subr.mxu0 0.0
        %1270 = vmatpush1.msra.mxu0 0.0
        %1271 = vmatprep.subr.mxu0 0.0
        %1272 = vmatpush1.msra.mxu0 0.0
        %1273 = vmatprep.subr.mxu0 0.0
        %1274 = vmatpush1.msra.mxu0 0.0
        %1275 = vmatprep.subr.mxu0 0.0
        %1276 = vmatpush1.msra.mxu0 0.0
        %1277 = vmatprep.subr.mxu0 0.0
        %1278 = vmatpush1.msra.mxu0 0.0
        %1279 = vmatprep.subr.mxu0 0.0
        %1280 = vmatpush1.msra.mxu0 0.0
        %1281 = vmatprep.subr.mxu0 0.0
        %1282 = vmatpush1.msra.mxu0 0.0
        %1283 = vmatprep.subr.mxu0 0.0
        %1284 = vmatpush1.msra.mxu0 0.0
        %1285 = vmatprep.subr.mxu0 0.0
        %1286 = vmatpush1.msra.mxu0 0.0
        %1287 = vmatprep.subr.mxu0 0.0
        %1288 = vmatpush1.msra.mxu0 0.0
        %1289 = vmatprep.subr.mxu0 0.0
        %1290 = vmatpush1.msra.mxu0 0.0
        %1291 = vmatprep.subr.mxu0 0.0
        %1292 = vmatpush1.msra.mxu0 0.0
        %1293 = vmatprep.subr.mxu0 0.0
        %1294 = vmatpush1.msra.mxu0 0.0
        %1295 = vmatprep.subr.mxu0 0.0
        %1296 = vmatpush1.msra.mxu0 0.0
        %1297 = vmatprep.subr.mxu0 0.0
        %1298 = vmatpush1.msra.mxu0 0.0
        %1299 = vmatprep.subr.mxu0 0.0
        %1300 = vmatpush1.msra.mxu0 0.0
        %1301 = vmatprep.subr.mxu0 0.0
        %1302 = vmatpush1.msra.mxu0 0.0
        %1303 = vmatprep.mubr.f32.mxu0 0.0
        %1304 = vmatmul.mubr.f32.gmra.mrb[0].mxu0 %v1237
        %v1305 = vpop.f32.mrb[0].mxu0
        %v1306 = vadd.f32 0.0, %v1305
        %v1307 = vpop.f32.mrb[0].mxu0
        %1308 = vdwg.mxu0
        %v1310 = vsel %vm901, %v1229, 0
        %1312 = vmatprep.subr.mxu0 0.0
        %1313 = vmatpush1.msra.mxu0 %v1234
        %1314 = vmatprep.subr.mxu0 0.0
        %1315 = vmatpush1.msra.mxu0 %v1235
        %1316 = vmatprep.subr.mxu0 0.0
        %1317 = vmatpush1.msra.mxu0 0.0
        %1318 = vmatprep.subr.mxu0 0.0
        %1319 = vmatpush1.msra.mxu0 0.0
        %1320 = vmatprep.subr.mxu0 0.0
        %1321 = vmatpush1.msra.mxu0 0.0
        %1322 = vmatprep.subr.mxu0 0.0
        %1323 = vmatpush1.msra.mxu0 0.0
        %1324 = vmatprep.subr.mxu0 0.0
        %1325 = vmatpush1.msra.mxu0 0.0
        %1326 = vmatprep.subr.mxu0 0.0
        %1327 = vmatpush1.msra.mxu0 0.0
        %1328 = vmatprep.subr.mxu0 0.0
        %1329 = vmatpush1.msra.mxu0 0.0
        %1330 = vmatprep.subr.mxu0 0.0
        %1331 = vmatpush1.msra.mxu0 0.0
        %1332 = vmatprep.subr.mxu0 0.0
        %1333 = vmatpush1.msra.mxu0 0.0
        %1334 = vmatprep.subr.mxu0 0.0
        %1335 = vmatpush1.msra.mxu0 0.0
        %1336 = vmatprep.subr.mxu0 0.0
        %1337 = vmatpush1.msra.mxu0 0.0
        %1338 = vmatprep.subr.mxu0 0.0
        %1339 = vmatpush1.msra.mxu0 0.0
        %1340 = vmatprep.subr.mxu0 0.0
        %1341 = vmatpush1.msra.mxu0 0.0
        %1342 = vmatprep.subr.mxu0 0.0
        %1343 = vmatpush1.msra.mxu0 0.0
        %1344 = vmatprep.subr.mxu0 0.0
        %1345 = vmatpush1.msra.mxu0 0.0
        %1346 = vmatprep.subr.mxu0 0.0
        %1347 = vmatpush1.msra.mxu0 0.0
        %1348 = vmatprep.subr.mxu0 0.0
        %1349 = vmatpush1.msra.mxu0 0.0
        %1350 = vmatprep.subr.mxu0 0.0
        %1351 = vmatpush1.msra.mxu0 0.0
        %1352 = vmatprep.subr.mxu0 0.0
        %1353 = vmatpush1.msra.mxu0 0.0
        %1354 = vmatprep.subr.mxu0 0.0
        %1355 = vmatpush1.msra.mxu0 0.0
        %1356 = vmatprep.subr.mxu0 0.0
        %1357 = vmatpush1.msra.mxu0 0.0
        %1358 = vmatprep.subr.mxu0 0.0
        %1359 = vmatpush1.msra.mxu0 0.0
        %1360 = vmatprep.subr.mxu0 0.0
        %1361 = vmatpush1.msra.mxu0 0.0
        %1362 = vmatprep.subr.mxu0 0.0
        %1363 = vmatpush1.msra.mxu0 0.0
        %1364 = vmatprep.subr.mxu0 0.0
        %1365 = vmatpush1.msra.mxu0 0.0
        %1366 = vmatprep.subr.mxu0 0.0
        %1367 = vmatpush1.msra.mxu0 0.0
        %1368 = vmatprep.subr.mxu0 0.0
        %1369 = vmatpush1.msra.mxu0 0.0
        %1370 = vmatprep.subr.mxu0 0.0
        %1371 = vmatpush1.msra.mxu0 0.0
        %1372 = vmatprep.subr.mxu0 0.0
        %1373 = vmatpush1.msra.mxu0 0.0
        %1374 = vmatprep.subr.mxu0 0.0
        %1375 = vmatpush1.msra.mxu0 0.0
        %1376 = vmatprep.mubr.f32.mxu0 0.0
        %1377 = vmatmul.mubr.f32.gmra.mrb[0].mxu0 %v1310
        %v1378 = vpop.f32.mrb[0].mxu0
        %v1379 = vadd.f32 0.0, %v1378
        %v1380 = vpop.f32.mrb[0].mxu0
        %1381 = vdwg.mxu0
        %v1382 = vsel %vm703, %v1306, 0.0
        %v1383 = vsel %vm703, %v1379, 0.0
        %v1384 = vadd.f32 %v1382, %v1383
        %v1385 = vld [vmem:[%s8] sm:$0x1]
        %v1387 = vlaneseq
        %v1388 = vshrl.u32 %v1387, 7
        %v1389 = vsub.s32 0, %v1388
        %v1390 = vrot.slane %v1385, %v1389
        %v1392 = vadd.f32 %v1384, %v1390
        %v1393 = vadd.f32 %v698, %v1392
        %v1394 = vld [vmem:[%s9] sm:$0x1]
        %v1395 = vld [vmem:[%s10] sm:$0x1]
        %v1396 = vsel %vm703, %v1393, 0.0
        %1397 = vadd.xlane.f32.xlu0 %v1396
        %v1398 = vpop.xlane.xlu0 %1397
        %v1399 = vmul.f32 %v1398, %v707
        %v1400 = vsub.f32 %v1393, %v1399
        %v1401 = vmul.f32 %v1400, %v1400
        %v1402 = vsel %vm703, %v1401, 0.0
        %1403 = vadd.xlane.f32.xlu0 %v1402
        %v1404 = vpop.xlane.xlu0 %1403
        %v1405 = vmul.f32 %v1404, %v707
        %v1406 = vadd.f32 %v1405, 1e-12
        %v1407 = vrsqrt.pop %v1406
        %v1408 = vmul.f32 %v1400, %v1407
        %v1410 = vlaneseq
        %v1411 = vshrl.u32 %v1410, 7
        %v1412 = vsub.s32 0, %v1411
        %v1413 = vrot.slane %v1394, %v1412
        %v1415 = vmul.f32 %v1408, %v1413
        %v1417 = vlaneseq
        %v1418 = vshrl.u32 %v1417, 7
        %v1419 = vsub.s32 0, %v1418
        %v1420 = vrot.slane %v1395, %v1419
        %v1422 = vadd.f32 %v1415, %v1420
        %v1423 = vld [vmem:[%s11] sm:$0xff]
        %v1424 = vld [vmem:[%s11 + $0x8] sm:$0xff]
        %v1425 = vld [vmem:[%s11 + $0x10] sm:$0xff]
        %v1426 = vld [vmem:[%s11 + $0x18] sm:$0xff]
        %v1427 = vld [vmem:[%s12] sm:$0x1]
        %v1429 = vlaneseq
        %v1430 = vshrl.u32 %v1429, 7
        %v1431 = vsub.s32 0, %v1430
        %v1432 = vrot.slane %v1427, %v1431
        %v1435 = vsel %vm754, %v1422, 0
        %1437 = vmatprep.subr.mxu0 0.0
        %1438 = vmatpush1.msra.mxu0 %v1423
        %1439 = vmatprep.subr.mxu0 0.0
        %1440 = vmatpush1.msra.mxu0 %v1424
        %1441 = vmatprep.subr.mxu0 0.0
        %1442 = vmatpush1.msra.mxu0 %v1425
        %1443 = vmatprep.subr.mxu0 0.0
        %1444 = vmatpush1.msra.mxu0 %v1426
        %1445 = vmatprep.subr.mxu0 0.0
        %1446 = vmatpush1.msra.mxu0 0.0
        %1447 = vmatprep.subr.mxu0 0.0
        %1448 = vmatpush1.msra.mxu0 0.0
        %1449 = vmatprep.subr.mxu0 0.0
        %1450 = vmatpush1.msra.mxu0 0.0
        %1451 = vmatprep.subr.mxu0 0.0
        %1452 = vmatpush1.msra.mxu0 0.0
        %1453 = vmatprep.subr.mxu0 0.0
        %1454 = vmatpush1.msra.mxu0 0.0
        %1455 = vmatprep.subr.mxu0 0.0
        %1456 = vmatpush1.msra.mxu0 0.0
        %1457 = vmatprep.subr.mxu0 0.0
        %1458 = vmatpush1.msra.mxu0 0.0
        %1459 = vmatprep.subr.mxu0 0.0
        %1460 = vmatpush1.msra.mxu0 0.0
        %1461 = vmatprep.subr.mxu0 0.0
        %1462 = vmatpush1.msra.mxu0 0.0
        %1463 = vmatprep.subr.mxu0 0.0
        %1464 = vmatpush1.msra.mxu0 0.0
        %1465 = vmatprep.subr.mxu0 0.0
        %1466 = vmatpush1.msra.mxu0 0.0
        %1467 = vmatprep.subr.mxu0 0.0
        %1468 = vmatpush1.msra.mxu0 0.0
        %1469 = vmatprep.subr.mxu0 0.0
        %1470 = vmatpush1.msra.mxu0 0.0
        %1471 = vmatprep.subr.mxu0 0.0
        %1472 = vmatpush1.msra.mxu0 0.0
        %1473 = vmatprep.subr.mxu0 0.0
        %1474 = vmatpush1.msra.mxu0 0.0
        %1475 = vmatprep.subr.mxu0 0.0
        %1476 = vmatpush1.msra.mxu0 0.0
        %1477 = vmatprep.subr.mxu0 0.0
        %1478 = vmatpush1.msra.mxu0 0.0
        %1479 = vmatprep.subr.mxu0 0.0
        %1480 = vmatpush1.msra.mxu0 0.0
        %1481 = vmatprep.subr.mxu0 0.0
        %1482 = vmatpush1.msra.mxu0 0.0
        %1483 = vmatprep.subr.mxu0 0.0
        %1484 = vmatpush1.msra.mxu0 0.0
        %1485 = vmatprep.subr.mxu0 0.0
        %1486 = vmatpush1.msra.mxu0 0.0
        %1487 = vmatprep.subr.mxu0 0.0
        %1488 = vmatpush1.msra.mxu0 0.0
        %1489 = vmatprep.subr.mxu0 0.0
        %1490 = vmatpush1.msra.mxu0 0.0
        %1491 = vmatprep.subr.mxu0 0.0
        %1492 = vmatpush1.msra.mxu0 0.0
        %1493 = vmatprep.subr.mxu0 0.0
        %1494 = vmatpush1.msra.mxu0 0.0
        %1495 = vmatprep.subr.mxu0 0.0
        %1496 = vmatpush1.msra.mxu0 0.0
        %1497 = vmatprep.subr.mxu0 0.0
        %1498 = vmatpush1.msra.mxu0 0.0
        %1499 = vmatprep.subr.mxu0 0.0
        %1500 = vmatpush1.msra.mxu0 0.0
        %1501 = vmatprep.mubr.f32.mxu0 0.0
        %1502 = vmatmul.mubr.f32.gmra.mrb[0].mxu0 %v1435
        %v1503 = vpop.f32.mrb[0].mxu0
        %v1504 = vadd.f32 %v1432, %v1503
        %v1505 = vpop.f32.mrb[0].mxu0
        %1506 = vdwg.mxu0
        %v1507 = vmul.f32 %v1504, 0.5
        %v1508 = vmul.f32 %v1504, 0.70710677
        %v1509 = vand.u32 2147483647, %v1508
        %v1510 = vmul.f32 %v1509, 0.3275911
        %v1511 = vadd.f32 %v1510, 1.0
        %v1512 = vrcp.pop %v1511
        %v1513 = vmul.f32 1.0, %v1512
        %v1514 = vmul.f32 %v1513, 1.0614054
        %v1515 = vadd.f32 %v1514, -1.4531521
        %v1516 = vmul.f32 %v1515, %v1513
        %v1517 = vadd.f32 %v1516, 1.4214138
        %v1518 = vmul.f32 %v1517, %v1513
        %v1519 = vadd.f32 %v1518, -0.28449672
        %v1520 = vmul.f32 %v1519, %v1513
        %v1521 = vadd.f32 %v1520, 0.2548296
        %v1522 = vmul.f32 %v1521, %v1513
        %v1523 = vsub.f32 0.0, %v1509
        %v1524 = vmul.f32 %v1523, %v1509
        %v1525 = vmul.f32 %v1524, 1.442695
        %v1526 = vpow.pop %v1525
        %v1527 = vmul.f32 %v1522, %v1526
        %v1528 = vsub.f32 1.0, %v1527
        %vm1529 = vcmp.lt.f32.partialorder %v1508, 0.0
        %v1530 = vsub.f32 0.0, %v1528
        %v1531 = vsel %vm1529, %v1530, %v1528
        %v1532 = vadd.f32 %v1531, 1.0
        %v1533 = vmul.f32 %v1507, %v1532
        %v1534 = vld [vmem:[%s13] sm:$0xff]
        %v1535 = vld [vmem:[%s13 + $0x8] sm:$0xff]
        %v1536 = vld [vmem:[%s13 + $0x10] sm:$0xff]
        %v1537 = vld [vmem:[%s13 + $0x18] sm:$0xff]
        %v1538 = vld [vmem:[%s13 + $0x20] sm:$0xff]
        %v1539 = vld [vmem:[%s13 + $0x28] sm:$0xff]
        %v1540 = vld [vmem:[%s13 + $0x30] sm:$0xff]
        %v1541 = vld [vmem:[%s13 + $0x38] sm:$0xff]
        %v1542 = vld [vmem:[%s14] sm:$0x1]
        %v1544 = vlaneseq
        %v1545 = vshrl.u32 %v1544, 7
        %v1546 = vsub.s32 0, %v1545
        %v1547 = vrot.slane %v1542, %v1546
        %v1550 = vsel %vm627, %v1533, 0
        %1552 = vmatprep.subr.mxu0 0.0
        %1553 = vmatpush1.msra.mxu0 %v1534
        %1554 = vmatprep.subr.mxu0 0.0
        %1555 = vmatpush1.msra.mxu0 %v1535
        %1556 = vmatprep.subr.mxu0 0.0
        %1557 = vmatpush1.msra.mxu0 %v1536
        %1558 = vmatprep.subr.mxu0 0.0
        %1559 = vmatpush1.msra.mxu0 %v1537
        %1560 = vmatprep.subr.mxu0 0.0
        %1561 = vmatpush1.msra.mxu0 %v1538
        %1562 = vmatprep.subr.mxu0 0.0
        %1563 = vmatpush1.msra.mxu0 %v1539
        %1564 = vmatprep.subr.mxu0 0.0
        %1565 = vmatpush1.msra.mxu0 %v1540
        %1566 = vmatprep.subr.mxu0 0.0
        %1567 = vmatpush1.msra.mxu0 %v1541
        %1568 = vmatprep.subr.mxu0 0.0
        %1569 = vmatpush1.msra.mxu0 0.0
        %1570 = vmatprep.subr.mxu0 0.0
        %1571 = vmatpush1.msra.mxu0 0.0
        %1572 = vmatprep.subr.mxu0 0.0
        %1573 = vmatpush1.msra.mxu0 0.0
        %1574 = vmatprep.subr.mxu0 0.0
        %1575 = vmatpush1.msra.mxu0 0.0
        %1576 = vmatprep.subr.mxu0 0.0
        %1577 = vmatpush1.msra.mxu0 0.0
        %1578 = vmatprep.subr.mxu0 0.0
        %1579 = vmatpush1.msra.mxu0 0.0
        %1580 = vmatprep.subr.mxu0 0.0
        %1581 = vmatpush1.msra.mxu0 0.0
        %1582 = vmatprep.subr.mxu0 0.0
        %1583 = vmatpush1.msra.mxu0 0.0
        %1584 = vmatprep.subr.mxu0 0.0
        %1585 = vmatpush1.msra.mxu0 0.0
        %1586 = vmatprep.subr.mxu0 0.0
        %1587 = vmatpush1.msra.mxu0 0.0
        %1588 = vmatprep.subr.mxu0 0.0
        %1589 = vmatpush1.msra.mxu0 0.0
        %1590 = vmatprep.subr.mxu0 0.0
        %1591 = vmatpush1.msra.mxu0 0.0
        %1592 = vmatprep.subr.mxu0 0.0
        %1593 = vmatpush1.msra.mxu0 0.0
        %1594 = vmatprep.subr.mxu0 0.0
        %1595 = vmatpush1.msra.mxu0 0.0
        %1596 = vmatprep.subr.mxu0 0.0
        %1597 = vmatpush1.msra.mxu0 0.0
        %1598 = vmatprep.subr.mxu0 0.0
        %1599 = vmatpush1.msra.mxu0 0.0
        %1600 = vmatprep.subr.mxu0 0.0
        %1601 = vmatpush1.msra.mxu0 0.0
        %1602 = vmatprep.subr.mxu0 0.0
        %1603 = vmatpush1.msra.mxu0 0.0
        %1604 = vmatprep.subr.mxu0 0.0
        %1605 = vmatpush1.msra.mxu0 0.0
        %1606 = vmatprep.subr.mxu0 0.0
        %1607 = vmatpush1.msra.mxu0 0.0
        %1608 = vmatprep.subr.mxu0 0.0
        %1609 = vmatpush1.msra.mxu0 0.0
        %1610 = vmatprep.subr.mxu0 0.0
        %1611 = vmatpush1.msra.mxu0 0.0
        %1612 = vmatprep.subr.mxu0 0.0
        %1613 = vmatpush1.msra.mxu0 0.0
        %1614 = vmatprep.subr.mxu0 0.0
        %1615 = vmatpush1.msra.mxu0 0.0
        %1616 = vmatprep.mubr.f32.mxu0 0.0
        %1617 = vmatmul.mubr.f32.gmra.mrb[0].mxu0 %v1550
        %v1618 = vpop.f32.mrb[0].mxu0
        %v1619 = vadd.f32 %v1547, %v1618
        %v1620 = vpop.f32.mrb[0].mxu0
        %1621 = vdwg.mxu0
        %v1622 = vadd.f32 %v1393, %v1619
        %s1623 = scalar_lea.vmem %s3, 1
        %v1624 = vld [vmem:[%s1623] sm:$0x1]
        %s1625 = scalar_lea.vmem %s4, 1
        %v1626 = vld [vmem:[%s1625] sm:$0x1]
        %v1627 = vsel %vm703, %v1622, 0.0
        %1628 = vadd.xlane.f32.xlu0 %v1627
        %v1629 = vpop.xlane.xlu0 %1628
        %v1630 = vmul.f32 %v1629, %v707
        %v1631 = vsub.f32 %v1622, %v1630
        %v1632 = vmul.f32 %v1631, %v1631
        %v1633 = vsel %vm703, %v1632, 0.0
        %1634 = vadd.xlane.f32.xlu0 %v1633
        %v1635 = vpop.xlane.xlu0 %1634
        %v1636 = vmul.f32 %v1635, %v707
        %v1637 = vadd.f32 %v1636, 1e-12
        %v1638 = vrsqrt.pop %v1637
        %v1639 = vmul.f32 %v1631, %v1638
        %v1641 = vlaneseq
        %v1642 = vshrl.u32 %v1641, 7
        %v1643 = vsub.s32 0, %v1642
        %v1644 = vrot.slane %v1624, %v1643
        %v1646 = vmul.f32 %v1639, %v1644
        %v1648 = vlaneseq
        %v1649 = vshrl.u32 %v1648, 7
        %v1650 = vsub.s32 0, %v1649
        %v1651 = vrot.slane %v1626, %v1650
        %v1653 = vadd.f32 %v1646, %v1651
        %s1654 = scalar_lea.vmem %s5, 64
        %v1655 = vld [vmem:[%s1654] sm:$0xff]
        %v1656 = vld [vmem:[%s1654 + $0x8] sm:$0xff]
        %v1657 = vld [vmem:[%s1654 + $0x10] sm:$0xff]
        %v1658 = vld [vmem:[%s1654 + $0x18] sm:$0xff]
        %v1659 = vld [vmem:[%s1654 + $0x20] sm:$0xff]
        %v1660 = vld [vmem:[%s1654 + $0x28] sm:$0xff]
        %v1661 = vld [vmem:[%s1654 + $0x30] sm:$0xff]
        %v1662 = vld [vmem:[%s1654 + $0x38] sm:$0xff]
        %s1663 = scalar_lea.vmem %s6, 2
        %v1664 = vld [vmem:[%s1663] sm:$0x1]
        %v1665 = vld [vmem:[%s1663 + $0x1] sm:$0x1]
        %v1668 = vlaneseq
        %v1669 = vshrl.u32 %v1668, 7
        %v1670 = vsub.s32 0, %v1669
        %v1671 = vrot.slane %v1664, %v1670
        %v1672 = vlaneseq
        %v1673 = vshrl.u32 %v1672, 7
        %v1674 = vsub.s32 0, %v1673
        %v1675 = vrot.slane %v1665, %v1674
        %v1679 = vsel %vm754, %v1653, 0
        %1681 = vmatprep.subr.mxu0 0.0
        %1682 = vmatpush1.msra.mxu0 %v1655
        %1683 = vmatprep.subr.mxu0 0.0
        %1684 = vmatpush1.msra.mxu0 %v1656
        %1685 = vmatprep.subr.mxu0 0.0
        %1686 = vmatpush1.msra.mxu0 %v1657
        %1687 = vmatprep.subr.mxu0 0.0
        %1688 = vmatpush1.msra.mxu0 %v1658
        %1689 = vmatprep.subr.mxu0 0.0
        %1690 = vmatpush1.msra.mxu0 0.0
        %1691 = vmatprep.subr.mxu0 0.0
        %1692 = vmatpush1.msra.mxu0 0.0
        %1693 = vmatprep.subr.mxu0 0.0
        %1694 = vmatpush1.msra.mxu0 0.0
        %1695 = vmatprep.subr.mxu0 0.0
        %1696 = vmatpush1.msra.mxu0 0.0
        %1697 = vmatprep.subr.mxu0 0.0
        %1698 = vmatpush1.msra.mxu0 0.0
        %1699 = vmatprep.subr.mxu0 0.0
        %1700 = vmatpush1.msra.mxu0 0.0
        %1701 = vmatprep.subr.mxu0 0.0
        %1702 = vmatpush1.msra.mxu0 0.0
        %1703 = vmatprep.subr.mxu0 0.0
        %1704 = vmatpush1.msra.mxu0 0.0
        %1705 = vmatprep.subr.mxu0 0.0
        %1706 = vmatpush1.msra.mxu0 0.0
        %1707 = vmatprep.subr.mxu0 0.0
        %1708 = vmatpush1.msra.mxu0 0.0
        %1709 = vmatprep.subr.mxu0 0.0
        %1710 = vmatpush1.msra.mxu0 0.0
        %1711 = vmatprep.subr.mxu0 0.0
        %1712 = vmatpush1.msra.mxu0 0.0
        %1713 = vmatprep.subr.mxu0 0.0
        %1714 = vmatpush1.msra.mxu0 0.0
        %1715 = vmatprep.subr.mxu0 0.0
        %1716 = vmatpush1.msra.mxu0 0.0
        %1717 = vmatprep.subr.mxu0 0.0
        %1718 = vmatpush1.msra.mxu0 0.0
        %1719 = vmatprep.subr.mxu0 0.0
        %1720 = vmatpush1.msra.mxu0 0.0
        %1721 = vmatprep.subr.mxu0 0.0
        %1722 = vmatpush1.msra.mxu0 0.0
        %1723 = vmatprep.subr.mxu0 0.0
        %1724 = vmatpush1.msra.mxu0 0.0
        %1725 = vmatprep.subr.mxu0 0.0
        %1726 = vmatpush1.msra.mxu0 0.0
        %1727 = vmatprep.subr.mxu0 0.0
        %1728 = vmatpush1.msra.mxu0 0.0
        %1729 = vmatprep.subr.mxu0 0.0
        %1730 = vmatpush1.msra.mxu0 0.0
        %1731 = vmatprep.subr.mxu0 0.0
        %1732 = vmatpush1.msra.mxu0 0.0
        %1733 = vmatprep.subr.mxu0 0.0
        %1734 = vmatpush1.msra.mxu0 0.0
        %1735 = vmatprep.subr.mxu0 0.0
        %1736 = vmatpush1.msra.mxu0 0.0
        %1737 = vmatprep.subr.mxu0 0.0
        %1738 = vmatpush1.msra.mxu0 0.0
        %1739 = vmatprep.subr.mxu0 0.0
        %1740 = vmatpush1.msra.mxu0 0.0
        %1741 = vmatprep.subr.mxu0 0.0
        %1742 = vmatpush1.msra.mxu0 0.0
        %1743 = vmatprep.subr.mxu0 0.0
        %1744 = vmatpush1.msra.mxu0 0.0
        %1745 = vmatprep.mubr.f32.mxu0 0.0
        %1746 = vmatmul.mubr.f32.gmra.mrb[0].mxu0 %v1679
        %v1747 = vpop.f32.mrb[0].mxu0
        %v1748 = vadd.f32 %v1671, %v1747
        %v1749 = vpop.f32.mrb[0].mxu0
        %1750 = vdwg.mxu0
        %1751 = vmatprep.subr.mxu0 0.0
        %1752 = vmatpush1.msra.mxu0 %v1659
        %1753 = vmatprep.subr.mxu0 0.0
        %1754 = vmatpush1.msra.mxu0 %v1660
        %1755 = vmatprep.subr.mxu0 0.0
        %1756 = vmatpush1.msra.mxu0 %v1661
        %1757 = vmatprep.subr.mxu0 0.0
        %1758 = vmatpush1.msra.mxu0 %v1662
        %1759 = vmatprep.subr.mxu0 0.0
        %1760 = vmatpush1.msra.mxu0 0.0
        %1761 = vmatprep.subr.mxu0 0.0
        %1762 = vmatpush1.msra.mxu0 0.0
        %1763 = vmatprep.subr.mxu0 0.0
        %1764 = vmatpush1.msra.mxu0 0.0
        %1765 = vmatprep.subr.mxu0 0.0
        %1766 = vmatpush1.msra.mxu0 0.0
        %1767 = vmatprep.subr.mxu0 0.0
        %1768 = vmatpush1.msra.mxu0 0.0
        %1769 = vmatprep.subr.mxu0 0.0
        %1770 = vmatpush1.msra.mxu0 0.0
        %1771 = vmatprep.subr.mxu0 0.0
        %1772 = vmatpush1.msra.mxu0 0.0
        %1773 = vmatprep.subr.mxu0 0.0
        %1774 = vmatpush1.msra.mxu0 0.0
        %1775 = vmatprep.subr.mxu0 0.0
        %1776 = vmatpush1.msra.mxu0 0.0
        %1777 = vmatprep.subr.mxu0 0.0
        %1778 = vmatpush1.msra.mxu0 0.0
        %1779 = vmatprep.subr.mxu0 0.0
        %1780 = vmatpush1.msra.mxu0 0.0
        %1781 = vmatprep.subr.mxu0 0.0
        %1782 = vmatpush1.msra.mxu0 0.0
        %1783 = vmatprep.subr.mxu0 0.0
        %1784 = vmatpush1.msra.mxu0 0.0
        %1785 = vmatprep.subr.mxu0 0.0
        %1786 = vmatpush1.msra.mxu0 0.0
        %1787 = vmatprep.subr.mxu0 0.0
        %1788 = vmatpush1.msra.mxu0 0.0
        %1789 = vmatprep.subr.mxu0 0.0
        %1790 = vmatpush1.msra.mxu0 0.0
        %1791 = vmatprep.subr.mxu0 0.0
        %1792 = vmatpush1.msra.mxu0 0.0
        %1793 = vmatprep.subr.mxu0 0.0
        %1794 = vmatpush1.msra.mxu0 0.0
        %1795 = vmatprep.subr.mxu0 0.0
        %1796 = vmatpush1.msra.mxu0 0.0
        %1797 = vmatprep.subr.mxu0 0.0
        %1798 = vmatpush1.msra.mxu0 0.0
        %1799 = vmatprep.subr.mxu0 0.0
        %1800 = vmatpush1.msra.mxu0 0.0
        %1801 = vmatprep.subr.mxu0 0.0
        %1802 = vmatpush1.msra.mxu0 0.0
        %1803 = vmatprep.subr.mxu0 0.0
        %1804 = vmatpush1.msra.mxu0 0.0
        %1805 = vmatprep.subr.mxu0 0.0
        %1806 = vmatpush1.msra.mxu0 0.0
        %1807 = vmatprep.subr.mxu0 0.0
        %1808 = vmatpush1.msra.mxu0 0.0
        %1809 = vmatprep.subr.mxu0 0.0
        %1810 = vmatpush1.msra.mxu0 0.0
        %1811 = vmatprep.subr.mxu0 0.0
        %1812 = vmatpush1.msra.mxu0 0.0
        %1813 = vmatprep.subr.mxu0 0.0
        %1814 = vmatpush1.msra.mxu0 0.0
        %1815 = vmatprep.mubr.f32.mxu0 0.0
        %1816 = vmatmul.mubr.f32.gmra.mrb[0].mxu0 %v1679
        %v1817 = vpop.f32.mrb[0].mxu0
        %v1818 = vadd.f32 %v1675, %v1817
        %v1819 = vpop.f32.mrb[0].mxu0
        %1820 = vdwg.mxu0
        %1822 = vrot.lane.b32.xlu0 %v1748, 112
        %v1823 = vpop.permute.xlu0 %1822
        %v1824 = vsel %vm901, %v1748, 0
        %v1826 = vsel %vm901, %v1823, 0
        %1828 = vmatprep.subr.mxu0 0.0
        %1829 = vmatpush1.xpose.msra.mxu0 %v1826
        %1830 = vmatprep.subr.mxu0 0.0
        %1831 = vmatpush1.xpose.msra.mxu0 0.0
        %1832 = vmatprep.subr.mxu0 0.0
        %1833 = vmatpush1.xpose.msra.mxu0 0.0
        %1834 = vmatprep.subr.mxu0 0.0
        %1835 = vmatpush1.xpose.msra.mxu0 0.0
        %1836 = vmatprep.subr.mxu0 0.0
        %1837 = vmatpush1.xpose.msra.mxu0 0.0
        %1838 = vmatprep.subr.mxu0 0.0
        %1839 = vmatpush1.xpose.msra.mxu0 0.0
        %1840 = vmatprep.subr.mxu0 0.0
        %1841 = vmatpush1.xpose.msra.mxu0 0.0
        %1842 = vmatprep.subr.mxu0 0.0
        %1843 = vmatpush1.xpose.msra.mxu0 0.0
        %1844 = vmatprep.subr.mxu0 0.0
        %1845 = vmatpush1.xpose.msra.mxu0 0.0
        %1846 = vmatprep.subr.mxu0 0.0
        %1847 = vmatpush1.xpose.msra.mxu0 0.0
        %1848 = vmatprep.subr.mxu0 0.0
        %1849 = vmatpush1.xpose.msra.mxu0 0.0
        %1850 = vmatprep.subr.mxu0 0.0
        %1851 = vmatpush1.xpose.msra.mxu0 0.0
        %1852 = vmatprep.subr.mxu0 0.0
        %1853 = vmatpush1.xpose.msra.mxu0 0.0
        %1854 = vmatprep.subr.mxu0 0.0
        %1855 = vmatpush1.xpose.msra.mxu0 0.0
        %1856 = vmatprep.subr.mxu0 0.0
        %1857 = vmatpush1.xpose.msra.mxu0 0.0
        %1858 = vmatprep.subr.mxu0 0.0
        %1859 = vmatpush1.xpose.msra.mxu0 0.0
        %1860 = vmatprep.subr.mxu0 0.0
        %1861 = vmatpush1.xpose.msra.mxu0 0.0
        %1862 = vmatprep.subr.mxu0 0.0
        %1863 = vmatpush1.xpose.msra.mxu0 0.0
        %1864 = vmatprep.subr.mxu0 0.0
        %1865 = vmatpush1.xpose.msra.mxu0 0.0
        %1866 = vmatprep.subr.mxu0 0.0
        %1867 = vmatpush1.xpose.msra.mxu0 0.0
        %1868 = vmatprep.subr.mxu0 0.0
        %1869 = vmatpush1.xpose.msra.mxu0 0.0
        %1870 = vmatprep.subr.mxu0 0.0
        %1871 = vmatpush1.xpose.msra.mxu0 0.0
        %1872 = vmatprep.subr.mxu0 0.0
        %1873 = vmatpush1.xpose.msra.mxu0 0.0
        %1874 = vmatprep.subr.mxu0 0.0
        %1875 = vmatpush1.xpose.msra.mxu0 0.0
        %1876 = vmatprep.subr.mxu0 0.0
        %1877 = vmatpush1.xpose.msra.mxu0 0.0
        %1878 = vmatprep.subr.mxu0 0.0
        %1879 = vmatpush1.xpose.msra.mxu0 0.0
        %1880 = vmatprep.subr.mxu0 0.0
        %1881 = vmatpush1.xpose.msra.mxu0 0.0
        %1882 = vmatprep.subr.mxu0 0.0
        %1883 = vmatpush1.xpose.msra.mxu0 0.0
        %1884 = vmatprep.subr.mxu0 0.0
        %1885 = vmatpush1.xpose.msra.mxu0 0.0
        %1886 = vmatprep.subr.mxu0 0.0
        %1887 = vmatpush1.xpose.msra.mxu0 0.0
        %1888 = vmatprep.subr.mxu0 0.0
        %1889 = vmatpush1.xpose.msra.mxu0 0.0
        %1890 = vmatprep.subr.mxu0 0.0
        %1891 = vmatpush1.xpose.msra.mxu0 0.0
        %1892 = vmatprep.mubr.f32.mxu0 0.0
        %1893 = vmatmul.mubr.f32.gmra.mrb[0].mxu0 %v1824
        %v1894 = vpop.f32.mrb[0].mxu0
        %v1895 = vadd.f32 0.0, %v1894
        %v1896 = vpop.f32.mrb[0].mxu0
        %1897 = vdwg.mxu0
        %1899 = vrot.lane.b32.xlu0 %v1818, 112
        %v1900 = vpop.permute.xlu0 %1899
        %v1901 = vsel %vm901, %v1818, 0
        %v1903 = vsel %vm901, %v1900, 0
        %1905 = vmatprep.subr.mxu0 0.0
        %1906 = vmatpush1.xpose.msra.mxu0 %v1903
        %1907 = vmatprep.subr.mxu0 0.0
        %1908 = vmatpush1.xpose.msra.mxu0 0.0
        %1909 = vmatprep.subr.mxu0 0.0
        %1910 = vmatpush1.xpose.msra.mxu0 0.0
        %1911 = vmatprep.subr.mxu0 0.0
        %1912 = vmatpush1.xpose.msra.mxu0 0.0
        %1913 = vmatprep.subr.mxu0 0.0
        %1914 = vmatpush1.xpose.msra.mxu0 0.0
        %1915 = vmatprep.subr.mxu0 0.0
        %1916 = vmatpush1.xpose.msra.mxu0 0.0
        %1917 = vmatprep.subr.mxu0 0.0
        %1918 = vmatpush1.xpose.msra.mxu0 0.0
        %1919 = vmatprep.subr.mxu0 0.0
        %1920 = vmatpush1.xpose.msra.mxu0 0.0
        %1921 = vmatprep.subr.mxu0 0.0
        %1922 = vmatpush1.xpose.msra.mxu0 0.0
        %1923 = vmatprep.subr.mxu0 0.0
        %1924 = vmatpush1.xpose.msra.mxu0 0.0
        %1925 = vmatprep.subr.mxu0 0.0
        %1926 = vmatpush1.xpose.msra.mxu0 0.0
        %1927 = vmatprep.subr.mxu0 0.0
        %1928 = vmatpush1.xpose.msra.mxu0 0.0
        %1929 = vmatprep.subr.mxu0 0.0
        %1930 = vmatpush1.xpose.msra.mxu0 0.0
        %1931 = vmatprep.subr.mxu0 0.0
        %1932 = vmatpush1.xpose.msra.mxu0 0.0
        %1933 = vmatprep.subr.mxu0 0.0
        %1934 = vmatpush1.xpose.msra.mxu0 0.0
        %1935 = vmatprep.subr.mxu0 0.0
        %1936 = vmatpush1.xpose.msra.mxu0 0.0
        %1937 = vmatprep.subr.mxu0 0.0
        %1938 = vmatpush1.xpose.msra.mxu0 0.0
        %1939 = vmatprep.subr.mxu0 0.0
        %1940 = vmatpush1.xpose.msra.mxu0 0.0
        %1941 = vmatprep.subr.mxu0 0.0
        %1942 = vmatpush1.xpose.msra.mxu0 0.0
        %1943 = vmatprep.subr.mxu0 0.0
        %1944 = vmatpush1.xpose.msra.mxu0 0.0
        %1945 = vmatprep.subr.mxu0 0.0
        %1946 = vmatpush1.xpose.msra.mxu0 0.0
        %1947 = vmatprep.subr.mxu0 0.0
        %1948 = vmatpush1.xpose.msra.mxu0 0.0
        %1949 = vmatprep.subr.mxu0 0.0
        %1950 = vmatpush1.xpose.msra.mxu0 0.0
        %1951 = vmatprep.subr.mxu0 0.0
        %1952 = vmatpush1.xpose.msra.mxu0 0.0
        %1953 = vmatprep.subr.mxu0 0.0
        %1954 = vmatpush1.xpose.msra.mxu0 0.0
        %1955 = vmatprep.subr.mxu0 0.0
        %1956 = vmatpush1.xpose.msra.mxu0 0.0
        %1957 = vmatprep.subr.mxu0 0.0
        %1958 = vmatpush1.xpose.msra.mxu0 0.0
        %1959 = vmatprep.subr.mxu0 0.0
        %1960 = vmatpush1.xpose.msra.mxu0 0.0
        %1961 = vmatprep.subr.mxu0 0.0
        %1962 = vmatpush1.xpose.msra.mxu0 0.0
        %1963 = vmatprep.subr.mxu0 0.0
        %1964 = vmatpush1.xpose.msra.mxu0 0.0
        %1965 = vmatprep.subr.mxu0 0.0
        %1966 = vmatpush1.xpose.msra.mxu0 0.0
        %1967 = vmatprep.subr.mxu0 0.0
        %1968 = vmatpush1.xpose.msra.mxu0 0.0
        %1969 = vmatprep.mubr.f32.mxu0 0.0
        %1970 = vmatmul.mubr.f32.gmra.mrb[0].mxu0 %v1901
        %v1971 = vpop.f32.mrb[0].mxu0
        %v1972 = vadd.f32 0.0, %v1971
        %v1973 = vpop.f32.mrb[0].mxu0
        %1974 = vdwg.mxu0
        %v1975 = vsel %vm1053, %v1895, -inf
        %1976 = vmax.xlane.f32.xlu0 %v1975
        %v1977 = vpop.xlane.xlu0 %1976
        %v1978 = vsel %vm1053, %v1972, -inf
        %1979 = vmax.xlane.f32.xlu0 %v1978
        %v1980 = vpop.xlane.xlu0 %1979
        %v1981 = vsub.f32 %v1895, %v1977
        %v1982 = vsub.f32 %v1972, %v1980
        %v1983 = vmul.f32 %v1981, 1.442695
        %v1984 = vpow.pop %v1983
        %v1985 = vmul.f32 %v1982, 1.442695
        %v1986 = vpow.pop %v1985
        %v1987 = vsel %vm1053, %v1984, 0.0
        %1988 = vadd.xlane.f32.xlu0 %v1987
        %v1989 = vpop.xlane.xlu0 %1988
        %v1990 = vsel %vm1053, %v1986, 0.0
        %1991 = vadd.xlane.f32.xlu0 %v1990
        %v1992 = vpop.xlane.xlu0 %1991
        %v1993 = vrcp.pop %v1989
        %v1994 = vrcp.pop %v1992
        %v1995 = vmul.f32 %v1984, %v1993
        %v1996 = vmul.f32 %v1986, %v1994
        %1997 = vrot.lane.b32.xlu0 %v1748, 96
        %v1998 = vpop.permute.xlu0 %1997
        %v2000 = vsel %vm1078, %v1995, 0
        %v2002 = vsel %vm1082, %v1998, 0
        %2004 = vmatprep.subr.mxu0 0.0
        %2005 = vmatpush1.msra.mxu0 %v2002
        %2006 = vmatprep.subr.mxu0 0.0
        %2007 = vmatpush1.msra.mxu0 0.0
        %2008 = vmatprep.subr.mxu0 0.0
        %2009 = vmatpush1.msra.mxu0 0.0
        %2010 = vmatprep.subr.mxu0 0.0
        %2011 = vmatpush1.msra.mxu0 0.0
        %2012 = vmatprep.subr.mxu0 0.0
        %2013 = vmatpush1.msra.mxu0 0.0
        %2014 = vmatprep.subr.mxu0 0.0
        %2015 = vmatpush1.msra.mxu0 0.0
        %2016 = vmatprep.subr.mxu0 0.0
        %2017 = vmatpush1.msra.mxu0 0.0
        %2018 = vmatprep.subr.mxu0 0.0
        %2019 = vmatpush1.msra.mxu0 0.0
        %2020 = vmatprep.subr.mxu0 0.0
        %2021 = vmatpush1.msra.mxu0 0.0
        %2022 = vmatprep.subr.mxu0 0.0
        %2023 = vmatpush1.msra.mxu0 0.0
        %2024 = vmatprep.subr.mxu0 0.0
        %2025 = vmatpush1.msra.mxu0 0.0
        %2026 = vmatprep.subr.mxu0 0.0
        %2027 = vmatpush1.msra.mxu0 0.0
        %2028 = vmatprep.subr.mxu0 0.0
        %2029 = vmatpush1.msra.mxu0 0.0
        %2030 = vmatprep.subr.mxu0 0.0
        %2031 = vmatpush1.msra.mxu0 0.0
        %2032 = vmatprep.subr.mxu0 0.0
        %2033 = vmatpush1.msra.mxu0 0.0
        %2034 = vmatprep.subr.mxu0 0.0
        %2035 = vmatpush1.msra.mxu0 0.0
        %2036 = vmatprep.subr.mxu0 0.0
        %2037 = vmatpush1.msra.mxu0 0.0
        %2038 = vmatprep.subr.mxu0 0.0
        %2039 = vmatpush1.msra.mxu0 0.0
        %2040 = vmatprep.subr.mxu0 0.0
        %2041 = vmatpush1.msra.mxu0 0.0
        %2042 = vmatprep.subr.mxu0 0.0
        %2043 = vmatpush1.msra.mxu0 0.0
        %2044 = vmatprep.subr.mxu0 0.0
        %2045 = vmatpush1.msra.mxu0 0.0
        %2046 = vmatprep.subr.mxu0 0.0
        %2047 = vmatpush1.msra.mxu0 0.0
        %2048 = vmatprep.subr.mxu0 0.0
        %2049 = vmatpush1.msra.mxu0 0.0
        %2050 = vmatprep.subr.mxu0 0.0
        %2051 = vmatpush1.msra.mxu0 0.0
        %2052 = vmatprep.subr.mxu0 0.0
        %2053 = vmatpush1.msra.mxu0 0.0
        %2054 = vmatprep.subr.mxu0 0.0
        %2055 = vmatpush1.msra.mxu0 0.0
        %2056 = vmatprep.subr.mxu0 0.0
        %2057 = vmatpush1.msra.mxu0 0.0
        %2058 = vmatprep.subr.mxu0 0.0
        %2059 = vmatpush1.msra.mxu0 0.0
        %2060 = vmatprep.subr.mxu0 0.0
        %2061 = vmatpush1.msra.mxu0 0.0
        %2062 = vmatprep.subr.mxu0 0.0
        %2063 = vmatpush1.msra.mxu0 0.0
        %2064 = vmatprep.subr.mxu0 0.0
        %2065 = vmatpush1.msra.mxu0 0.0
        %2066 = vmatprep.subr.mxu0 0.0
        %2067 = vmatpush1.msra.mxu0 0.0
        %2068 = vmatprep.mubr.f32.mxu0 0.0
        %2069 = vmatmul.mubr.f32.gmra.mrb[0].mxu0 %v2000
        %v2070 = vpop.f32.mrb[0].mxu0
        %v2071 = vadd.f32 0.0, %v2070
        %v2072 = vpop.f32.mrb[0].mxu0
        %2073 = vdwg.mxu0
        %2074 = vrot.lane.b32.xlu0 %v1818, 96
        %v2075 = vpop.permute.xlu0 %2074
        %v2077 = vsel %vm1078, %v1996, 0
        %v2079 = vsel %vm1082, %v2075, 0
        %2081 = vmatprep.subr.mxu0 0.0
        %2082 = vmatpush1.msra.mxu0 %v2079
        %2083 = vmatprep.subr.mxu0 0.0
        %2084 = vmatpush1.msra.mxu0 0.0
        %2085 = vmatprep.subr.mxu0 0.0
        %2086 = vmatpush1.msra.mxu0 0.0
        %2087 = vmatprep.subr.mxu0 0.0
        %2088 = vmatpush1.msra.mxu0 0.0
        %2089 = vmatprep.subr.mxu0 0.0
        %2090 = vmatpush1.msra.mxu0 0.0
        %2091 = vmatprep.subr.mxu0 0.0
        %2092 = vmatpush1.msra.mxu0 0.0
        %2093 = vmatprep.subr.mxu0 0.0
        %2094 = vmatpush1.msra.mxu0 0.0
        %2095 = vmatprep.subr.mxu0 0.0
        %2096 = vmatpush1.msra.mxu0 0.0
        %2097 = vmatprep.subr.mxu0 0.0
        %2098 = vmatpush1.msra.mxu0 0.0
        %2099 = vmatprep.subr.mxu0 0.0
        %2100 = vmatpush1.msra.mxu0 0.0
        %2101 = vmatprep.subr.mxu0 0.0
        %2102 = vmatpush1.msra.mxu0 0.0
        %2103 = vmatprep.subr.mxu0 0.0
        %2104 = vmatpush1.msra.mxu0 0.0
        %2105 = vmatprep.subr.mxu0 0.0
        %2106 = vmatpush1.msra.mxu0 0.0
        %2107 = vmatprep.subr.mxu0 0.0
        %2108 = vmatpush1.msra.mxu0 0.0
        %2109 = vmatprep.subr.mxu0 0.0
        %2110 = vmatpush1.msra.mxu0 0.0
        %2111 = vmatprep.subr.mxu0 0.0
        %2112 = vmatpush1.msra.mxu0 0.0
        %2113 = vmatprep.subr.mxu0 0.0
        %2114 = vmatpush1.msra.mxu0 0.0
        %2115 = vmatprep.subr.mxu0 0.0
        %2116 = vmatpush1.msra.mxu0 0.0
        %2117 = vmatprep.subr.mxu0 0.0
        %2118 = vmatpush1.msra.mxu0 0.0
        %2119 = vmatprep.subr.mxu0 0.0
        %2120 = vmatpush1.msra.mxu0 0.0
        %2121 = vmatprep.subr.mxu0 0.0
        %2122 = vmatpush1.msra.mxu0 0.0
        %2123 = vmatprep.subr.mxu0 0.0
        %2124 = vmatpush1.msra.mxu0 0.0
        %2125 = vmatprep.subr.mxu0 0.0
        %2126 = vmatpush1.msra.mxu0 0.0
        %2127 = vmatprep.subr.mxu0 0.0
        %2128 = vmatpush1.msra.mxu0 0.0
        %2129 = vmatprep.subr.mxu0 0.0
        %2130 = vmatpush1.msra.mxu0 0.0
        %2131 = vmatprep.subr.mxu0 0.0
        %2132 = vmatpush1.msra.mxu0 0.0
        %2133 = vmatprep.subr.mxu0 0.0
        %2134 = vmatpush1.msra.mxu0 0.0
        %2135 = vmatprep.subr.mxu0 0.0
        %2136 = vmatpush1.msra.mxu0 0.0
        %2137 = vmatprep.subr.mxu0 0.0
        %2138 = vmatpush1.msra.mxu0 0.0
        %2139 = vmatprep.subr.mxu0 0.0
        %2140 = vmatpush1.msra.mxu0 0.0
        %2141 = vmatprep.subr.mxu0 0.0
        %2142 = vmatpush1.msra.mxu0 0.0
        %2143 = vmatprep.subr.mxu0 0.0
        %2144 = vmatpush1.msra.mxu0 0.0
        %2145 = vmatprep.mubr.f32.mxu0 0.0
        %2146 = vmatmul.mubr.f32.gmra.mrb[0].mxu0 %v2077
        %v2147 = vpop.f32.mrb[0].mxu0
        %v2148 = vadd.f32 0.0, %v2147
        %v2149 = vpop.f32.mrb[0].mxu0
        %2150 = vdwg.mxu0
        %s2151 = scalar_lea.vmem %s7, 32
        %v2152 = vld [vmem:[%s2151] sm:$0xff]
        %v2153 = vld [vmem:[%s2151 + $0x8] sm:$0xff]
        %v2154 = vld [vmem:[%s2151 + $0x10] sm:$0xff]
        %v2155 = vld [vmem:[%s2151 + $0x18] sm:$0xff]
        %v2157 = vsel %vm901, %v2071, 0
        %2159 = vmatprep.subr.mxu0 0.0
        %2160 = vmatpush1.msra.mxu0 %v2152
        %2161 = vmatprep.subr.mxu0 0.0
        %2162 = vmatpush1.msra.mxu0 %v2153
        %2163 = vmatprep.subr.mxu0 0.0
        %2164 = vmatpush1.msra.mxu0 0.0
        %2165 = vmatprep.subr.mxu0 0.0
        %2166 = vmatpush1.msra.mxu0 0.0
        %2167 = vmatprep.subr.mxu0 0.0
        %2168 = vmatpush1.msra.mxu0 0.0
        %2169 = vmatprep.subr.mxu0 0.0
        %2170 = vmatpush1.msra.mxu0 0.0
        %2171 = vmatprep.subr.mxu0 0.0
        %2172 = vmatpush1.msra.mxu0 0.0
        %2173 = vmatprep.subr.mxu0 0.0
        %2174 = vmatpush1.msra.mxu0 0.0
        %2175 = vmatprep.subr.mxu0 0.0
        %2176 = vmatpush1.msra.mxu0 0.0
        %2177 = vmatprep.subr.mxu0 0.0
        %2178 = vmatpush1.msra.mxu0 0.0
        %2179 = vmatprep.subr.mxu0 0.0
        %2180 = vmatpush1.msra.mxu0 0.0
        %2181 = vmatprep.subr.mxu0 0.0
        %2182 = vmatpush1.msra.mxu0 0.0
        %2183 = vmatprep.subr.mxu0 0.0
        %2184 = vmatpush1.msra.mxu0 0.0
        %2185 = vmatprep.subr.mxu0 0.0
        %2186 = vmatpush1.msra.mxu0 0.0
        %2187 = vmatprep.subr.mxu0 0.0
        %2188 = vmatpush1.msra.mxu0 0.0
        %2189 = vmatprep.subr.mxu0 0.0
        %2190 = vmatpush1.msra.mxu0 0.0
        %2191 = vmatprep.subr.mxu0 0.0
        %2192 = vmatpush1.msra.mxu0 0.0
        %2193 = vmatprep.subr.mxu0 0.0
        %2194 = vmatpush1.msra.mxu0 0.0
        %2195 = vmatprep.subr.mxu0 0.0
        %2196 = vmatpush1.msra.mxu0 0.0
        %2197 = vmatprep.subr.mxu0 0.0
        %2198 = vmatpush1.msra.mxu0 0.0
        %2199 = vmatprep.subr.mxu0 0.0
        %2200 = vmatpush1.msra.mxu0 0.0
        %2201 = vmatprep.subr.mxu0 0.0
        %2202 = vmatpush1.msra.mxu0 0.0
        %2203 = vmatprep.subr.mxu0 0.0
        %2204 = vmatpush1.msra.mxu0 0.0
        %2205 = vmatprep.subr.mxu0 0.0
        %2206 = vmatpush1.msra.mxu0 0.0
        %2207 = vmatprep.subr.mxu0 0.0
        %2208 = vmatpush1.msra.mxu0 0.0
        %2209 = vmatprep.subr.mxu0 0.0
        %2210 = vmatpush1.msra.mxu0 0.0
        %2211 = vmatprep.subr.mxu0 0.0
        %2212 = vmatpush1.msra.mxu0 0.0
        %2213 = vmatprep.subr.mxu0 0.0
        %2214 = vmatpush1.msra.mxu0 0.0
        %2215 = vmatprep.subr.mxu0 0.0
        %2216 = vmatpush1.msra.mxu0 0.0
        %2217 = vmatprep.subr.mxu0 0.0
        %2218 = vmatpush1.msra.mxu0 0.0
        %2219 = vmatprep.subr.mxu0 0.0
        %2220 = vmatpush1.msra.mxu0 0.0
        %2221 = vmatprep.subr.mxu0 0.0
        %2222 = vmatpush1.msra.mxu0 0.0
        %2223 = vmatprep.mubr.f32.mxu0 0.0
        %2224 = vmatmul.mubr.f32.gmra.mrb[0].mxu0 %v2157
        %v2225 = vpop.f32.mrb[0].mxu0
        %v2226 = vadd.f32 0.0, %v2225
        %v2227 = vpop.f32.mrb[0].mxu0
        %2228 = vdwg.mxu0
        %v2230 = vsel %vm901, %v2148, 0
        %2232 = vmatprep.subr.mxu0 0.0
        %2233 = vmatpush1.msra.mxu0 %v2154
        %2234 = vmatprep.subr.mxu0 0.0
        %2235 = vmatpush1.msra.mxu0 %v2155
        %2236 = vmatprep.subr.mxu0 0.0
        %2237 = vmatpush1.msra.mxu0 0.0
        %2238 = vmatprep.subr.mxu0 0.0
        %2239 = vmatpush1.msra.mxu0 0.0
        %2240 = vmatprep.subr.mxu0 0.0
        %2241 = vmatpush1.msra.mxu0 0.0
        %2242 = vmatprep.subr.mxu0 0.0
        %2243 = vmatpush1.msra.mxu0 0.0
        %2244 = vmatprep.subr.mxu0 0.0
        %2245 = vmatpush1.msra.mxu0 0.0
        %2246 = vmatprep.subr.mxu0 0.0
        %2247 = vmatpush1.msra.mxu0 0.0
        %2248 = vmatprep.subr.mxu0 0.0
        %2249 = vmatpush1.msra.mxu0 0.0
        %2250 = vmatprep.subr.mxu0 0.0
        %2251 = vmatpush1.msra.mxu0 0.0
        %2252 = vmatprep.subr.mxu0 0.0
        %2253 = vmatpush1.msra.mxu0 0.0
        %2254 = vmatprep.subr.mxu0 0.0
        %2255 = vmatpush1.msra.mxu0 0.0
        %2256 = vmatprep.subr.mxu0 0.0
        %2257 = vmatpush1.msra.mxu0 0.0
        %2258 = vmatprep.subr.mxu0 0.0
        %2259 = vmatpush1.msra.mxu0 0.0
        %2260 = vmatprep.subr.mxu0 0.0
        %2261 = vmatpush1.msra.mxu0 0.0
        %2262 = vmatprep.subr.mxu0 0.0
        %2263 = vmatpush1.msra.mxu0 0.0
        %2264 = vmatprep.subr.mxu0 0.0
        %2265 = vmatpush1.msra.mxu0 0.0
        %2266 = vmatprep.subr.mxu0 0.0
        %2267 = vmatpush1.msra.mxu0 0.0
        %2268 = vmatprep.subr.mxu0 0.0
        %2269 = vmatpush1.msra.mxu0 0.0
        %2270 = vmatprep.subr.mxu0 0.0
        %2271 = vmatpush1.msra.mxu0 0.0
        %2272 = vmatprep.subr.mxu0 0.0
        %2273 = vmatpush1.msra.mxu0 0.0
        %2274 = vmatprep.subr.mxu0 0.0
        %2275 = vmatpush1.msra.mxu0 0.0
        %2276 = vmatprep.subr.mxu0 0.0
        %2277 = vmatpush1.msra.mxu0 0.0
        %2278 = vmatprep.subr.mxu0 0.0
        %2279 = vmatpush1.msra.mxu0 0.0
        %2280 = vmatprep.subr.mxu0 0.0
        %2281 = vmatpush1.msra.mxu0 0.0
        %2282 = vmatprep.subr.mxu0 0.0
        %2283 = vmatpush1.msra.mxu0 0.0
        %2284 = vmatprep.subr.mxu0 0.0
        %2285 = vmatpush1.msra.mxu0 0.0
        %2286 = vmatprep.subr.mxu0 0.0
        %2287 = vmatpush1.msra.mxu0 0.0
        %2288 = vmatprep.subr.mxu0 0.0
        %2289 = vmatpush1.msra.mxu0 0.0
        %2290 = vmatprep.subr.mxu0 0.0
        %2291 = vmatpush1.msra.mxu0 0.0
        %2292 = vmatprep.subr.mxu0 0.0
        %2293 = vmatpush1.msra.mxu0 0.0
        %2294 = vmatprep.subr.mxu0 0.0
        %2295 = vmatpush1.msra.mxu0 0.0
        %2296 = vmatprep.mubr.f32.mxu0 0.0
        %2297 = vmatmul.mubr.f32.gmra.mrb[0].mxu0 %v2230
        %v2298 = vpop.f32.mrb[0].mxu0
        %v2299 = vadd.f32 0.0, %v2298
        %v2300 = vpop.f32.mrb[0].mxu0
        %2301 = vdwg.mxu0
        %v2302 = vsel %vm703, %v2226, 0.0
        %v2303 = vsel %vm703, %v2299, 0.0
        %v2304 = vadd.f32 %v2302, %v2303
        %s2305 = scalar_lea.vmem %s8, 1
        %v2306 = vld [vmem:[%s2305] sm:$0x1]
        %v2308 = vlaneseq
        %v2309 = vshrl.u32 %v2308, 7
        %v2310 = vsub.s32 0, %v2309
        %v2311 = vrot.slane %v2306, %v2310
        %v2313 = vadd.f32 %v2304, %v2311
        %v2314 = vadd.f32 %v1622, %v2313
        %s2315 = scalar_lea.vmem %s9, 1
        %v2316 = vld [vmem:[%s2315] sm:$0x1]
        %s2317 = scalar_lea.vmem %s10, 1
        %v2318 = vld [vmem:[%s2317] sm:$0x1]
        %v2319 = vsel %vm703, %v2314, 0.0
        %2320 = vadd.xlane.f32.xlu0 %v2319
        %v2321 = vpop.xlane.xlu0 %2320
        %v2322 = vmul.f32 %v2321, %v707
        %v2323 = vsub.f32 %v2314, %v2322
        %v2324 = vmul.f32 %v2323, %v2323
        %v2325 = vsel %vm703, %v2324, 0.0
        %2326 = vadd.xlane.f32.xlu0 %v2325
        %v2327 = vpop.xlane.xlu0 %2326
        %v2328 = vmul.f32 %v2327, %v707
        %v2329 = vadd.f32 %v2328, 1e-12
        %v2330 = vrsqrt.pop %v2329
        %v2331 = vmul.f32 %v2323, %v2330
        %v2333 = vlaneseq
        %v2334 = vshrl.u32 %v2333, 7
        %v2335 = vsub.s32 0, %v2334
        %v2336 = vrot.slane %v2316, %v2335
        %v2338 = vmul.f32 %v2331, %v2336
        %v2340 = vlaneseq
        %v2341 = vshrl.u32 %v2340, 7
        %v2342 = vsub.s32 0, %v2341
        %v2343 = vrot.slane %v2318, %v2342
        %v2345 = vadd.f32 %v2338, %v2343
        %s2346 = scalar_lea.vmem %s11, 32
        %v2347 = vld [vmem:[%s2346] sm:$0xff]
        %v2348 = vld [vmem:[%s2346 + $0x8] sm:$0xff]
        %v2349 = vld [vmem:[%s2346 + $0x10] sm:$0xff]
        %v2350 = vld [vmem:[%s2346 + $0x18] sm:$0xff]
        %s2351 = scalar_lea.vmem %s12, 1
        %v2352 = vld [vmem:[%s2351] sm:$0x1]
        %v2354 = vlaneseq
        %v2355 = vshrl.u32 %v2354, 7
        %v2356 = vsub.s32 0, %v2355
        %v2357 = vrot.slane %v2352, %v2356
        %v2360 = vsel %vm754, %v2345, 0
        %2362 = vmatprep.subr.mxu0 0.0
        %2363 = vmatpush1.msra.mxu0 %v2347
        %2364 = vmatprep.subr.mxu0 0.0
        %2365 = vmatpush1.msra.mxu0 %v2348
        %2366 = vmatprep.subr.mxu0 0.0
        %2367 = vmatpush1.msra.mxu0 %v2349
        %2368 = vmatprep.subr.mxu0 0.0
        %2369 = vmatpush1.msra.mxu0 %v2350
        %2370 = vmatprep.subr.mxu0 0.0
        %2371 = vmatpush1.msra.mxu0 0.0
        %2372 = vmatprep.subr.mxu0 0.0
        %2373 = vmatpush1.msra.mxu0 0.0
        %2374 = vmatprep.subr.mxu0 0.0
        %2375 = vmatpush1.msra.mxu0 0.0
        %2376 = vmatprep.subr.mxu0 0.0
        %2377 = vmatpush1.msra.mxu0 0.0
        %2378 = vmatprep.subr.mxu0 0.0
        %2379 = vmatpush1.msra.mxu0 0.0
        %2380 = vmatprep.subr.mxu0 0.0
        %2381 = vmatpush1.msra.mxu0 0.0
        %2382 = vmatprep.subr.mxu0 0.0
        %2383 = vmatpush1.msra.mxu0 0.0
        %2384 = vmatprep.subr.mxu0 0.0
        %2385 = vmatpush1.msra.mxu0 0.0
        %2386 = vmatprep.subr.mxu0 0.0
        %2387 = vmatpush1.msra.mxu0 0.0
        %2388 = vmatprep.subr.mxu0 0.0
        %2389 = vmatpush1.msra.mxu0 0.0
        %2390 = vmatprep.subr.mxu0 0.0
        %2391 = vmatpush1.msra.mxu0 0.0
        %2392 = vmatprep.subr.mxu0 0.0
        %2393 = vmatpush1.msra.mxu0 0.0
        %2394 = vmatprep.subr.mxu0 0.0
        %2395 = vmatpush1.msra.mxu0 0.0
        %2396 = vmatprep.subr.mxu0 0.0
        %2397 = vmatpush1.msra.mxu0 0.0
        %2398 = vmatprep.subr.mxu0 0.0
        %2399 = vmatpush1.msra.mxu0 0.0
        %2400 = vmatprep.subr.mxu0 0.0
        %2401 = vmatpush1.msra.mxu0 0.0
        %2402 = vmatprep.subr.mxu0 0.0
        %2403 = vmatpush1.msra.mxu0 0.0
        %2404 = vmatprep.subr.mxu0 0.0
        %2405 = vmatpush1.msra.mxu0 0.0
        %2406 = vmatprep.subr.mxu0 0.0
        %2407 = vmatpush1.msra.mxu0 0.0
        %2408 = vmatprep.subr.mxu0 0.0
        %2409 = vmatpush1.msra.mxu0 0.0
        %2410 = vmatprep.subr.mxu0 0.0
        %2411 = vmatpush1.msra.mxu0 0.0
        %2412 = vmatprep.subr.mxu0 0.0
        %2413 = vmatpush1.msra.mxu0 0.0
        %2414 = vmatprep.subr.mxu0 0.0
        %2415 = vmatpush1.msra.mxu0 0.0
        %2416 = vmatprep.subr.mxu0 0.0
        %2417 = vmatpush1.msra.mxu0 0.0
        %2418 = vmatprep.subr.mxu0 0.0
        %2419 = vmatpush1.msra.mxu0 0.0
        %2420 = vmatprep.subr.mxu0 0.0
        %2421 = vmatpush1.msra.mxu0 0.0
        %2422 = vmatprep.subr.mxu0 0.0
        %2423 = vmatpush1.msra.mxu0 0.0
        %2424 = vmatprep.subr.mxu0 0.0
        %2425 = vmatpush1.msra.mxu0 0.0
        %2426 = vmatprep.mubr.f32.mxu0 0.0
        %2427 = vmatmul.mubr.f32.gmra.mrb[0].mxu0 %v2360
        %v2428 = vpop.f32.mrb[0].mxu0
        %v2429 = vadd.f32 %v2357, %v2428
        %v2430 = vpop.f32.mrb[0].mxu0
        %2431 = vdwg.mxu0
        %v2432 = vmul.f32 %v2429, 0.5
        %v2433 = vmul.f32 %v2429, 0.70710677
        %v2434 = vand.u32 2147483647, %v2433
        %v2435 = vmul.f32 %v2434, 0.3275911
        %v2436 = vadd.f32 %v2435, 1.0
        %v2437 = vrcp.pop %v2436
        %v2438 = vmul.f32 1.0, %v2437
        %v2439 = vmul.f32 %v2438, 1.0614054
        %v2440 = vadd.f32 %v2439, -1.4531521
        %v2441 = vmul.f32 %v2440, %v2438
        %v2442 = vadd.f32 %v2441, 1.4214138
        %v2443 = vmul.f32 %v2442, %v2438
        %v2444 = vadd.f32 %v2443, -0.28449672
        %v2445 = vmul.f32 %v2444, %v2438
        %v2446 = vadd.f32 %v2445, 0.2548296
        %v2447 = vmul.f32 %v2446, %v2438
        %v2448 = vsub.f32 0.0, %v2434
        %v2449 = vmul.f32 %v2448, %v2434
        %v2450 = vmul.f32 %v2449, 1.442695
        %v2451 = vpow.pop %v2450
        %v2452 = vmul.f32 %v2447, %v2451
        %v2453 = vsub.f32 1.0, %v2452
        %vm2454 = vcmp.lt.f32.partialorder %v2433, 0.0
        %v2455 = vsub.f32 0.0, %v2453
        %v2456 = vsel %vm2454, %v2455, %v2453
        %v2457 = vadd.f32 %v2456, 1.0
        %v2458 = vmul.f32 %v2432, %v2457
        %s2459 = scalar_lea.vmem %s13, 64
        %v2460 = vld [vmem:[%s2459] sm:$0xff]
        %v2461 = vld [vmem:[%s2459 + $0x8] sm:$0xff]
        %v2462 = vld [vmem:[%s2459 + $0x10] sm:$0xff]
        %v2463 = vld [vmem:[%s2459 + $0x18] sm:$0xff]
        %v2464 = vld [vmem:[%s2459 + $0x20] sm:$0xff]
        %v2465 = vld [vmem:[%s2459 + $0x28] sm:$0xff]
        %v2466 = vld [vmem:[%s2459 + $0x30] sm:$0xff]
        %v2467 = vld [vmem:[%s2459 + $0x38] sm:$0xff]
        %s2468 = scalar_lea.vmem %s14, 1
        %v2469 = vld [vmem:[%s2468] sm:$0x1]
        %v2471 = vlaneseq
        %v2472 = vshrl.u32 %v2471, 7
        %v2473 = vsub.s32 0, %v2472
        %v2474 = vrot.slane %v2469, %v2473
        %v2477 = vsel %vm627, %v2458, 0
        %2479 = vmatprep.subr.mxu0 0.0
        %2480 = vmatpush1.msra.mxu0 %v2460
        %2481 = vmatprep.subr.mxu0 0.0
        %2482 = vmatpush1.msra.mxu0 %v2461
        %2483 = vmatprep.subr.mxu0 0.0
        %2484 = vmatpush1.msra.mxu0 %v2462
        %2485 = vmatprep.subr.mxu0 0.0
        %2486 = vmatpush1.msra.mxu0 %v2463
        %2487 = vmatprep.subr.mxu0 0.0
        %2488 = vmatpush1.msra.mxu0 %v2464
        %2489 = vmatprep.subr.mxu0 0.0
        %2490 = vmatpush1.msra.mxu0 %v2465
        %2491 = vmatprep.subr.mxu0 0.0
        %2492 = vmatpush1.msra.mxu0 %v2466
        %2493 = vmatprep.subr.mxu0 0.0
        %2494 = vmatpush1.msra.mxu0 %v2467
        %2495 = vmatprep.subr.mxu0 0.0
        %2496 = vmatpush1.msra.mxu0 0.0
        %2497 = vmatprep.subr.mxu0 0.0
        %2498 = vmatpush1.msra.mxu0 0.0
        %2499 = vmatprep.subr.mxu0 0.0
        %2500 = vmatpush1.msra.mxu0 0.0
        %2501 = vmatprep.subr.mxu0 0.0
        %2502 = vmatpush1.msra.mxu0 0.0
        %2503 = vmatprep.subr.mxu0 0.0
        %2504 = vmatpush1.msra.mxu0 0.0
        %2505 = vmatprep.subr.mxu0 0.0
        %2506 = vmatpush1.msra.mxu0 0.0
        %2507 = vmatprep.subr.mxu0 0.0
        %2508 = vmatpush1.msra.mxu0 0.0
        %2509 = vmatprep.subr.mxu0 0.0
        %2510 = vmatpush1.msra.mxu0 0.0
        %2511 = vmatprep.subr.mxu0 0.0
        %2512 = vmatpush1.msra.mxu0 0.0
        %2513 = vmatprep.subr.mxu0 0.0
        %2514 = vmatpush1.msra.mxu0 0.0
        %2515 = vmatprep.subr.mxu0 0.0
        %2516 = vmatpush1.msra.mxu0 0.0
        %2517 = vmatprep.subr.mxu0 0.0
        %2518 = vmatpush1.msra.mxu0 0.0
        %2519 = vmatprep.subr.mxu0 0.0
        %2520 = vmatpush1.msra.mxu0 0.0
        %2521 = vmatprep.subr.mxu0 0.0
        %2522 = vmatpush1.msra.mxu0 0.0
        %2523 = vmatprep.subr.mxu0 0.0
        %2524 = vmatpush1.msra.mxu0 0.0
        %2525 = vmatprep.subr.mxu0 0.0
        %2526 = vmatpush1.msra.mxu0 0.0
        %2527 = vmatprep.subr.mxu0 0.0
        %2528 = vmatpush1.msra.mxu0 0.0
        %2529 = vmatprep.subr.mxu0 0.0
        %2530 = vmatpush1.msra.mxu0 0.0
        %2531 = vmatprep.subr.mxu0 0.0
        %2532 = vmatpush1.msra.mxu0 0.0
        %2533 = vmatprep.subr.mxu0 0.0
        %2534 = vmatpush1.msra.mxu0 0.0
        %2535 = vmatprep.subr.mxu0 0.0
        %2536 = vmatpush1.msra.mxu0 0.0
        %2537 = vmatprep.subr.mxu0 0.0
        %2538 = vmatpush1.msra.mxu0 0.0
        %2539 = vmatprep.subr.mxu0 0.0
        %2540 = vmatpush1.msra.mxu0 0.0
        %2541 = vmatprep.subr.mxu0 0.0
        %2542 = vmatpush1.msra.mxu0 0.0
        %2543 = vmatprep.mubr.f32.mxu0 0.0
        %2544 = vmatmul.mubr.f32.gmra.mrb[0].mxu0 %v2477
        %v2545 = vpop.f32.mrb[0].mxu0
        %v2546 = vadd.f32 %v2474, %v2545
        %v2547 = vpop.f32.mrb[0].mxu0
        %2548 = vdwg.mxu0
        %v2549 = vadd.f32 %v2314, %v2546
        %v2550 = vld [vmem:[%s15] sm:$0x1]
        %v2551 = vld [vmem:[%s16] sm:$0x1]
        %vm2552 = vcmask 253952
        %v2553 = vsel %vm2552, %v2549, 0.0
        %2554 = vadd.xlane.f32.xlu0 %v2553
        %v2555 = vpop.xlane.xlu0 %2554
        %v2556 = vmul.f32 %v2555, %v707
        %v2557 = vsub.f32 %v2549, %v2556
        %v2558 = vmul.f32 %v2557, %v2557
        %v2559 = vsel %vm2552, %v2558, 0.0
        %2560 = vadd.xlane.f32.xlu0 %v2559
        %v2561 = vpop.xlane.xlu0 %2560
        %v2562 = vmul.f32 %v2561, %v707
        %v2563 = vadd.f32 %v2562, 1e-12
        %v2564 = vrsqrt.pop %v2563
        %v2565 = vmul.f32 %v2557, %v2564
        %v2566 = vmul.f32 %v2565, %v2550
        %v2567 = vadd.f32 %v2566, %v2551
        %v2568 = vld [vmem:[%s17] sm:$0xff]
        %v2569 = vld [vmem:[%s17 + $0x8] sm:$0xff]
        %v2570 = vld [vmem:[%s17 + $0x10] sm:$0xff]
        %v2571 = vld [vmem:[%s17 + $0x18] sm:$0xff]
        %v2572 = vld [vmem:[%s18] sm:$0x1]
        %v2574 = vsel %vm754, %v2567, 0
        %2576 = vmatprep.subr.mxu0 0.0
        %2577 = vmatpush1.msra.mxu0 %v2568
        %2578 = vmatprep.subr.mxu0 0.0
        %2579 = vmatpush1.msra.mxu0 %v2569
        %2580 = vmatprep.subr.mxu0 0.0
        %2581 = vmatpush1.msra.mxu0 %v2570
        %2582 = vmatprep.subr.mxu0 0.0
        %2583 = vmatpush1.msra.mxu0 %v2571
        %2584 = vmatprep.subr.mxu0 0.0
        %2585 = vmatpush1.msra.mxu0 0.0
        %2586 = vmatprep.subr.mxu0 0.0
        %2587 = vmatpush1.msra.mxu0 0.0
        %2588 = vmatprep.subr.mxu0 0.0
        %2589 = vmatpush1.msra.mxu0 0.0
        %2590 = vmatprep.subr.mxu0 0.0
        %2591 = vmatpush1.msra.mxu0 0.0
        %2592 = vmatprep.subr.mxu0 0.0
        %2593 = vmatpush1.msra.mxu0 0.0
        %2594 = vmatprep.subr.mxu0 0.0
        %2595 = vmatpush1.msra.mxu0 0.0
        %2596 = vmatprep.subr.mxu0 0.0
        %2597 = vmatpush1.msra.mxu0 0.0
        %2598 = vmatprep.subr.mxu0 0.0
        %2599 = vmatpush1.msra.mxu0 0.0
        %2600 = vmatprep.subr.mxu0 0.0
        %2601 = vmatpush1.msra.mxu0 0.0
        %2602 = vmatprep.subr.mxu0 0.0
        %2603 = vmatpush1.msra.mxu0 0.0
        %2604 = vmatprep.subr.mxu0 0.0
        %2605 = vmatpush1.msra.mxu0 0.0
        %2606 = vmatprep.subr.mxu0 0.0
        %2607 = vmatpush1.msra.mxu0 0.0
        %2608 = vmatprep.subr.mxu0 0.0
        %2609 = vmatpush1.msra.mxu0 0.0
        %2610 = vmatprep.subr.mxu0 0.0
        %2611 = vmatpush1.msra.mxu0 0.0
        %2612 = vmatprep.subr.mxu0 0.0
        %2613 = vmatpush1.msra.mxu0 0.0
        %2614 = vmatprep.subr.mxu0 0.0
        %2615 = vmatpush1.msra.mxu0 0.0
        %2616 = vmatprep.subr.mxu0 0.0
        %2617 = vmatpush1.msra.mxu0 0.0
        %2618 = vmatprep.subr.mxu0 0.0
        %2619 = vmatpush1.msra.mxu0 0.0
        %2620 = vmatprep.subr.mxu0 0.0
        %2621 = vmatpush1.msra.mxu0 0.0
        %2622 = vmatprep.subr.mxu0 0.0
        %2623 = vmatpush1.msra.mxu0 0.0
        %2624 = vmatprep.subr.mxu0 0.0
        %2625 = vmatpush1.msra.mxu0 0.0
        %2626 = vmatprep.subr.mxu0 0.0
        %2627 = vmatpush1.msra.mxu0 0.0
        %2628 = vmatprep.subr.mxu0 0.0
        %2629 = vmatpush1.msra.mxu0 0.0
        %2630 = vmatprep.subr.mxu0 0.0
        %2631 = vmatpush1.msra.mxu0 0.0
        %2632 = vmatprep.subr.mxu0 0.0
        %2633 = vmatpush1.msra.mxu0 0.0
        %2634 = vmatprep.subr.mxu0 0.0
        %2635 = vmatpush1.msra.mxu0 0.0
        %2636 = vmatprep.subr.mxu0 0.0
        %2637 = vmatpush1.msra.mxu0 0.0
        %2638 = vmatprep.subr.mxu0 0.0
        %2639 = vmatpush1.msra.mxu0 0.0
        %2640 = vmatprep.mubr.f32.mxu0 0.0
        %2641 = vmatmul.mubr.f32.gmra.mrb[0].mxu0 %v2574
        %v2642 = vpop.f32.mrb[0].mxu0
        %v2643 = vadd.f32 %v2572, %v2642
        %v2644 = vpop.f32.mrb[0].mxu0
        %2645 = vdwg.mxu0
        %v2646 = vtanh.pop %v2643
        %2647 = vst.msk [vmem:[%s594] sm:$0x1] %vm2552, %v2646
        %s2648 = sand.u32 %s445, 1
        %s2649 = scalar_lea.sflag [#allocation3], %s2648
        %s2650 = sand.u32 %s445, 1
        %s2651 = scalar_lea.vmem [#allocation2], %s2650
        // Predicated region
        $region97: #{image_encoder_forward.1} parent=95 // pred_check
          %p2652 = pneg %p455
        $region98: #{image_encoder_forward.1} parent=95 // pred_check_branch
          %2654 = sbr.rel (%p2652) target = $region100
        $region99: #{image_encoder_forward.1} parent=95 // pred_region
          %s2656 = ssub.s32 16, 16
          %2657 = vsyncadd %s2649, %s2656
          %s2658 = smul.addr %s33, 16
          %s2659 = scalar_lea.hbm %s19, %s2658
          %s2661 = sshll.u32 %s2651, 4
          %s2662 = int_to_ptr.vmem [resolvable:$true] %s2661
          %2664 = dma.vmem_to_hbm [thread:$0]  %s2662, 16, %s2659, %s2649
        $region100: #{image_encoder_forward.1} parent=95 // pred_fallthru
          _
      $region96: #{image_encoder_forward.1} parent=5 // pred_fallthru
        _
      %p2665 = scmp.le.s32.totalorder 2, %s28
      // Predicated region
      $region101: #{image_encoder_forward.1} parent=5 // pred_check
        %p2666 = pneg %p2665
      $region102: #{image_encoder_forward.1} parent=5 // pred_check_branch
        %2668 = sbr.rel (%p2666) target = $region104
      $region103: #{image_encoder_forward.1} parent=5 // pred_region
        %s2669 = ssub.s32 %s28, 2
        // Predicated region
        $region105: #{image_encoder_forward.1} parent=103 // pred_check
          %p2670 = pneg %p461
        $region106: #{image_encoder_forward.1} parent=103 // pred_check_branch
          %2672 = sbr.rel (%p2670) target = $region108
        $region107: #{image_encoder_forward.1} parent=103 // pred_region
          %s2673 = sand.u32 %s446, 1
          %s2674 = scalar_lea.sflag [#allocation3], %s2673
          %s2675 = sand.u32 %s446, 1
          %s2676 = scalar_lea.vmem [#allocation2], %s2675
          %2677 = dma.done %s2674, 16
        $region108: #{image_encoder_forward.1} parent=103 // pred_fallthru
          _
      $region104: #{image_encoder_forward.1} parent=5 // pred_fallthru
        _
    $region6: #{image_encoder_forward.1} parent=1 // loop_footer
      %s32 = sadd.s32 1, %s28
    $region7: #{image_encoder_forward.1} parent=1 // loop_footer_branch
      %27 = sbr.rel target = $region3
    $region8: #{image_encoder_forward.1} parent=1 // loop_exit
      _
    %2678 = vsyncpa [#allocation3], 1
    %s2679 = scalar_lea.sflag [#allocation3], 1
    %2680 = vsyncpa %s2679, 1

</llo_original>
